<compile_context>
chip_gen: v7x
topology: tpu7x:2x2x1
jax: 0.10.0
libtpu: 0.0.40
codegen_flags: <defaults>
</compile_context>

<pallas_src>
import jax
import jax.numpy as jnp
from jax import lax
from jax.experimental import pallas as pl
from jax.experimental.pallas import tpu as pltpu


# ----------------------------- Pallas kernel ------------------------------- #

def _small_fused_kernel(lhs1_ref, B1_ref, b1_ref, B2_ref, b2_ref, wl_ref,
                        bl_ref, out_ref):
    """Whole `Small` forward for one block of `nb` images.

    lhs1_ref: (24*nb, 140) bf16  conv1 row windows; row = (p, yp, n) with the
              conv1 output row y = 2*yp + p; col = 28*ky + xi.
    B1_ref  : (140, 768)   bf16  banded conv1 rhs; col = q*384 + xp*32 + c
              (conv1 output col xo = 2*xp + q).
    b1_ref  : (1, 384)     f32   conv1 bias tiled over xp.
    B2_ref  : (5, 384, 256) bf16 banded conv2 rhs per ky; row = xi*32 + ci,
              col = q*128 + vp*32 + co (conv2 output col xo2 = 2*vp + q).
    b2_ref  : (1, 128)     f32   conv2 bias tiled over vp.
    wl_ref  : (4, 128, 10) f32   linear weight, wl_r[u, vp*32+c, k]
              = wl[c*16 + u*4 + vp, k]  (PyTorch (C,H,W) flatten).
    bl_ref  : (1, 10)      f32
    out_ref : (nb, 10)     f32   logits for this batch block.
    """
    nb = out_ref.shape[0]

    # ---- conv1: one banded matmul, K folded over (ky, xi) -------------------
    acc1 = jnp.dot(lhs1_ref[...], B1_ref[...],
                   preferred_element_type=jnp.float32)        # (24*nb, 768)

    # Max over pool phases before bias+ReLU == Conv->ReLU->MaxPool (bias is
    # phase-invariant, ReLU monotone).  Row parity p and column parity q were
    # laid out as outermost halves, so each pool is a max of two aligned halves.
    m = jnp.maximum(acc1[:12 * nb], acc1[12 * nb:])           # y-pool (12nb, 768)
    m = jnp.maximum(m[:, :384], m[:, 384:])                   # x-pool (12nb, 384)
    h1 = jnp.maximum(m + b1_ref[...], 0.0).astype(jnp.bfloat16)  # cast ONCE
    # h1 rows = (yp, n), cols = xp*32 + c.

    # ---- conv2: 5 banded matmuls, each lhs a contiguous row-slice of h1 -----
    acc2 = jnp.dot(h1[:8 * nb], B2_ref[0],
                   preferred_element_type=jnp.float32)        # (8*nb, 256)
    for ky in range(1, 5):
        acc2 = acc2 + jnp.dot(h1[ky * nb:(ky + 8) * nb], B2_ref[ky],
                              preferred_element_type=jnp.float32)

    a2 = acc2.reshape(4, 2, nb, 256)                          # (u, p, n, cols)
    m2 = jnp.maximum(a2[:, 0], a2[:, 1])                      # y-pool (4, nb, 256)
    m2 = jnp.maximum(m2[..., :128], m2[..., 128:])            # x-pool (4, nb, 128)
    h2 = jnp.maximum(m2 + b2_ref[...], 0.0)                   # (4, nb, 128) f32

    # ---- linear: 4 accumulated K=128 dots (M = nb) --------------------------
    out = bl_ref[...] + jnp.dot(h2[0], wl_ref[0],
                                preferred_element_type=jnp.float32)
    for u in range(1, 4):
        out = out + jnp.dot(h2[u], wl_ref[u],
                            preferred_element_type=jnp.float32)
    out_ref[...] = out                                        # (nb, 10) f32


# --------------------------------- Glue ------------------------------------ #

def small_forward(x_nchw, w1, b1, w2, b2, wl, bl, *, nb=None):
    """x_nchw: (N, 1, 28, 28) f32.  w1/w2 are HWIO conv weights, wl is (512, 10)
    with PyTorch's (C, H, W) feature ordering, bl is (10,)."""
    n = x_nchw.shape[0]
    assert x_nchw.shape[1:] == (1, 28, 28)
    if nb is None:
        nb = 32 if n >= 32 else 16          # tunable batch-block size
    assert nb % 16 == 0 and nb > 0
    n_pad = -(-n // nb) * nb
    g = n_pad // nb

    x = x_nchw[:, 0].astype(jnp.bfloat16)                     # cast BEFORE transposes
    if n_pad != n:
        x = jnp.pad(x, ((0, n_pad - n), (0, 0), (0, 0)))      # (n_pad, 28, 28)

    # conv1 lhs: row = (block, p, yp, n) with y = 2*yp + p, col = 28*ky + xi.
    win = jnp.stack([x[:, ky:ky + 24, :] for ky in range(5)], axis=2)  # (N,24,5,28)
    win = win.reshape(n_pad, 24, 140).reshape(g, nb, 12, 2, 140)
    lhs1 = jnp.transpose(win, (0, 3, 2, 1, 4)).reshape(g * 24 * nb, 140)

    # Banded conv1 rhs: B1[28*ky + xi, q*384 + xp*32 + c] = w1[ky, xi-(2xp+q), 0, c]
    xi = jnp.arange(28)
    xo = 2 * jnp.arange(12)[None, :] + jnp.arange(2)[:, None]          # (2, 12)
    d = xi[:, None, None] - xo[None, :, :]                             # (28, 2, 12)
    valid = (d >= 0) & (d < 5)
    w1m = w1[:, :, 0, :]                                               # (5, 5, 32)
    B1 = (w1m[:, jnp.clip(d, 0, 4), :] * valid[None, :, :, :, None])
    B1 = B1.reshape(140, 768).astype(jnp.bfloat16)

    # Banded conv2 rhs: B2[ky, xi*32+ci, q*128 + vp*32 + co] = w2[ky, xi-(2vp+q), ci, co]
    xi2 = jnp.arange(12)
    xo2 = 2 * jnp.arange(4)[None, :] + jnp.arange(2)[:, None]          # (2, 4)
    d2 = xi2[:, None, None] - xo2[None, :, :]                          # (12, 2, 4)
    valid2 = (d2 >= 0) & (d2 < 5)
    B2 = w2[:, jnp.clip(d2, 0, 4), :, :] * valid2[None, :, :, :, None, None]
    B2 = jnp.transpose(B2, (0, 1, 4, 2, 3, 5)).reshape(5, 384, 256)
    B2 = B2.astype(jnp.bfloat16)

    b1t = jnp.tile(b1, 12).reshape(1, 384)
    b2t = jnp.tile(b2, 4).reshape(1, 128)
    # Linear weight pre-permuted for PyTorch's (C, H, W) flatten:
    # wl_r[u, vp*32 + c, k] = wl[c*16 + u*4 + vp, k]
    wl_r = jnp.transpose(wl.reshape(32, 4, 4, 10), (1, 2, 0, 3)).reshape(4, 128, 10)

    out = pl.pallas_call(
        _small_fused_kernel,
        out_shape=jax.ShapeDtypeStruct((n_pad, 10), jnp.float32),
        grid=(g,),
        in_specs=[
            pl.BlockSpec((24 * nb, 140), lambda i: (i, 0)),
            pl.BlockSpec((140, 768), lambda i: (0, 0)),
            pl.BlockSpec((1, 384), lambda i: (0, 0)),
            pl.BlockSpec((5, 384, 256), lambda i: (0, 0, 0)),
            pl.BlockSpec((1, 128), lambda i: (0, 0)),
            pl.BlockSpec((4, 128, 10), lambda i: (0, 0, 0)),
            pl.BlockSpec((1, 10), lambda i: (0, 0)),
        ],
        out_specs=pl.BlockSpec((nb, 10), lambda i: (i, 0)),
        compiler_params=pltpu.CompilerParams(
            dimension_semantics=("parallel",),
            vmem_limit_bytes=32 * 1024 * 1024),
    )(lhs1, B1, b1t, B2, b2t, wl_r, bl.reshape(1, 10))
    return out[:n]


# ------------------------------ Reference ---------------------------------- #

def reference_forward(x_nchw, w1, b1, w2, b2, wl, bl):
    x = jnp.transpose(x_nchw, (0, 2, 3, 1))

    def conv_block(h, w, b):
        y = lax.conv_general_dilated(
            h, w, (1, 1), "VALID",
            dimension_numbers=("NHWC", "HWIO", "NHWC"),
            precision=lax.Precision.HIGHEST)
        y = jnp.maximum(y + b, 0.0)
        return lax.reduce_window(y, -jnp.inf, lax.max,
                                 (1, 2, 2, 1), (1, 2, 2, 1), "VALID")

    h = conv_block(x, w1, b1)
    h = conv_block(h, w2, b2)
    feat = jnp.transpose(h, (0, 3, 1, 2)).reshape(x.shape[0], -1)
    return jnp.dot(feat, wl, precision=lax.Precision.HIGHEST) + bl


# --------------------------------- Main ------------------------------------ #

if __name__ == "__main__":
    key = jax.random.PRNGKey(0)
    ks = jax.random.split(key, 8)

    # Deterministic synthetic parameters (HWIO conv weights, (K, C) linear).
    w1 = jax.random.normal(ks[1], (5, 5, 1, 32), jnp.float32) * 0.10
    b1 = jax.random.normal(ks[2], (32,), jnp.float32) * 0.10
    w2 = jax.random.normal(ks[3], (5, 5, 32, 32), jnp.float32) * 0.05
    b2 = jax.random.normal(ks[4], (32,), jnp.float32) * 0.10
    wl = jax.random.normal(ks[5], (512, 10), jnp.float32) * 0.05
    bl = jax.random.normal(ks[6], (10,), jnp.float32) * 0.10

    fwd = jax.jit(small_forward)

    # Case 1: tiny batch (N=2 -> nb=16, single grid step).
    x1 = jax.random.normal(ks[0], (2, 1, 28, 28), jnp.float32)
    out1 = jax.block_until_ready(fwd(x1, w1, b1, w2, b2, wl, bl))
    ref1 = reference_forward(x1, w1, b1, w2, b2, wl, bl)
    assert out1.shape == (2, 10), out1.shape
    assert bool(jnp.all(jnp.isfinite(out1)))
    assert bool(jnp.allclose(out1, ref1, rtol=4e-2, atol=4e-2)), \
        float(jnp.max(jnp.abs(out1 - ref1)))

    # Case 2: padded multi-block grid path (N=37 -> nb=32, grid=2, batch pad).
    x2 = jax.random.normal(ks[7], (37, 1, 28, 28), jnp.float32)
    out2 = jax.block_until_ready(fwd(x2, w1, b1, w2, b2, wl, bl))
    ref2 = reference_forward(x2, w1, b1, w2, b2, wl, bl)
    assert out2.shape == (37, 10), out2.shape
    assert bool(jnp.all(jnp.isfinite(out2)))
    assert bool(jnp.allclose(out2, ref2, rtol=4e-2, atol=4e-2)), \
        float(jnp.max(jnp.abs(out2 - ref2)))

    print("KERNEL_OK")
</pallas_src>

<mosaic_0001>
module attributes {stable_mosaic.version = 11 : i64} {
  func.func @_small_fused_kernel(%arg0: i32, %arg1: memref<384x140xbf16, #tpu.memory_space<vmem>>, %arg2: memref<140x768xbf16, #tpu.memory_space<vmem>>, %arg3: memref<1x384xf32, #tpu.memory_space<vmem>>, %arg4: memref<5x384x256xbf16, #tpu.memory_space<vmem>>, %arg5: memref<1x128xf32, #tpu.memory_space<vmem>>, %arg6: memref<4x128x10xf32, #tpu.memory_space<vmem>>, %arg7: memref<1x10xf32, #tpu.memory_space<vmem>>, %arg8: memref<16x10xf32, #tpu.memory_space<vmem>>) attributes {dimension_semantics = [#tpu.dimension_semantics<parallel>], iteration_bounds = array<i64: 1>, scalar_prefetch = 0 : i64, scratch_operands = 0 : i64, tpu.core_type = #tpu.core_type<tc>, window_params = [{transform_indices = @transform_0, window_bounds = array<i64: 384, 140>}, {pipeline_mode = #tpu.pipeline_mode<synchronous>, transform_indices = @transform_1, window_bounds = array<i64: 140, 768>}, {pipeline_mode = #tpu.pipeline_mode<synchronous>, transform_indices = @transform_2, window_bounds = array<i64: 1, 384>}, {pipeline_mode = #tpu.pipeline_mode<synchronous>, transform_indices = @transform_3, window_bounds = array<i64: 5, 384, 256>}, {pipeline_mode = #tpu.pipeline_mode<synchronous>, transform_indices = @transform_4, window_bounds = array<i64: 1, 128>}, {pipeline_mode = #tpu.pipeline_mode<synchronous>, transform_indices = @transform_5, window_bounds = array<i64: 4, 128, 10>}, {pipeline_mode = #tpu.pipeline_mode<synchronous>, transform_indices = @transform_6, window_bounds = array<i64: 1, 10>}, {transform_indices = @transform_7, window_bounds = array<i64: 16, 10>}]} {
    %c0 = arith.constant 0 : index
    %c0_0 = arith.constant 0 : index
    %0 = vector.load %arg1[%c0, %c0_0] : memref<384x140xbf16, #tpu.memory_space<vmem>>, vector<384x140xbf16>
    %c0_1 = arith.constant 0 : index
    %c0_2 = arith.constant 0 : index
    %1 = vector.load %arg2[%c0_1, %c0_2] : memref<140x768xbf16, #tpu.memory_space<vmem>>, vector<140x768xbf16>
    %cst = arith.constant dense<0.000000e+00> : vector<384x768xf32>
    %2 = tpu.matmul %0, %1, %cst {dimension_numbers = #tpu.dot_dimension_numbers<[1], [0], [0], [1], [0, 0, 1, 1], [], []>} : vector<384x140xbf16>, vector<140x768xbf16>, vector<384x768xf32> -> vector<384x768xf32>
    %3 = vector.extract_strided_slice %2 {offsets = [0, 0], sizes = [192, 768], strides = [1, 1]} : vector<384x768xf32> to vector<192x768xf32>
    %4 = vector.extract_strided_slice %2 {offsets = [192, 0], sizes = [192, 768], strides = [1, 1]} : vector<384x768xf32> to vector<192x768xf32>
    %5 = arith.maximumf %3, %4 : vector<192x768xf32>
    %6 = vector.extract_strided_slice %5 {offsets = [0, 0], sizes = [192, 384], strides = [1, 1]} : vector<192x768xf32> to vector<192x384xf32>
    %7 = vector.extract_strided_slice %5 {offsets = [0, 384], sizes = [192, 384], strides = [1, 1]} : vector<192x768xf32> to vector<192x384xf32>
    %8 = arith.maximumf %6, %7 : vector<192x384xf32>
    %c0_3 = arith.constant 0 : index
    %c0_4 = arith.constant 0 : index
    %9 = vector.load %arg3[%c0_3, %c0_4] : memref<1x384xf32, #tpu.memory_space<vmem>>, vector<1x384xf32>
    %10 = vector.broadcast %9 : vector<1x384xf32> to vector<192x384xf32>
    %11 = arith.addf %8, %10 : vector<192x384xf32>
    %cst_5 = arith.constant 0.000000e+00 : f32
    %12 = vector.broadcast %cst_5 : f32 to vector<192x384xf32>
    %13 = arith.maximumf %11, %12 : vector<192x384xf32>
    %14 = arith.truncf %13 : vector<192x384xf32> to vector<192x384xbf16>
    %15 = vector.extract_strided_slice %14 {offsets = [0, 0], sizes = [128, 384], strides = [1, 1]} : vector<192x384xbf16> to vector<128x384xbf16>
    %c0_6 = arith.constant 0 : index
    %c0_7 = arith.constant 0 : index
    %c0_8 = arith.constant 0 : index
    %16 = vector.load %arg4[%c0_6, %c0_7, %c0_8] : memref<5x384x256xbf16, #tpu.memory_space<vmem>>, vector<1x384x256xbf16>
    %17 = vector.shape_cast %16 : vector<1x384x256xbf16> to vector<384x256xbf16>
    %cst_9 = arith.constant dense<0.000000e+00> : vector<128x256xf32>
    %18 = tpu.matmul %15, %17, %cst_9 {dimension_numbers = #tpu.dot_dimension_numbers<[1], [0], [0], [1], [0, 0, 1, 1], [], []>} : vector<128x384xbf16>, vector<384x256xbf16>, vector<128x256xf32> -> vector<128x256xf32>
    %19 = vector.extract_strided_slice %14 {offsets = [16, 0], sizes = [128, 384], strides = [1, 1]} : vector<192x384xbf16> to vector<128x384xbf16>
    %c1 = arith.constant 1 : index
    %c0_10 = arith.constant 0 : index
    %c0_11 = arith.constant 0 : index
    %20 = vector.load %arg4[%c1, %c0_10, %c0_11] : memref<5x384x256xbf16, #tpu.memory_space<vmem>>, vector<1x384x256xbf16>
    %21 = vector.shape_cast %20 : vector<1x384x256xbf16> to vector<384x256xbf16>
    %cst_12 = arith.constant dense<0.000000e+00> : vector<128x256xf32>
    %22 = tpu.matmul %19, %21, %cst_12 {dimension_numbers = #tpu.dot_dimension_numbers<[1], [0], [0], [1], [0, 0, 1, 1], [], []>} : vector<128x384xbf16>, vector<384x256xbf16>, vector<128x256xf32> -> vector<128x256xf32>
    %23 = arith.addf %18, %22 : vector<128x256xf32>
    %24 = vector.extract_strided_slice %14 {offsets = [32, 0], sizes = [128, 384], strides = [1, 1]} : vector<192x384xbf16> to vector<128x384xbf16>
    %c2 = arith.constant 2 : index
    %c0_13 = arith.constant 0 : index
    %c0_14 = arith.constant 0 : index
    %25 = vector.load %arg4[%c2, %c0_13, %c0_14] : memref<5x384x256xbf16, #tpu.memory_space<vmem>>, vector<1x384x256xbf16>
    %26 = vector.shape_cast %25 : vector<1x384x256xbf16> to vector<384x256xbf16>
    %cst_15 = arith.constant dense<0.000000e+00> : vector<128x256xf32>
    %27 = tpu.matmul %24, %26, %cst_15 {dimension_numbers = #tpu.dot_dimension_numbers<[1], [0], [0], [1], [0, 0, 1, 1], [], []>} : vector<128x384xbf16>, vector<384x256xbf16>, vector<128x256xf32> -> vector<128x256xf32>
    %28 = arith.addf %23, %27 : vector<128x256xf32>
    %29 = vector.extract_strided_slice %14 {offsets = [48, 0], sizes = [128, 384], strides = [1, 1]} : vector<192x384xbf16> to vector<128x384xbf16>
    %c3 = arith.constant 3 : index
    %c0_16 = arith.constant 0 : index
    %c0_17 = arith.constant 0 : index
    %30 = vector.load %arg4[%c3, %c0_16, %c0_17] : memref<5x384x256xbf16, #tpu.memory_space<vmem>>, vector<1x384x256xbf16>
    %31 = vector.shape_cast %30 : vector<1x384x256xbf16> to vector<384x256xbf16>
    %cst_18 = arith.constant dense<0.000000e+00> : vector<128x256xf32>
    %32 = tpu.matmul %29, %31, %cst_18 {dimension_numbers = #tpu.dot_dimension_numbers<[1], [0], [0], [1], [0, 0, 1, 1], [], []>} : vector<128x384xbf16>, vector<384x256xbf16>, vector<128x256xf32> -> vector<128x256xf32>
    %33 = arith.addf %28, %32 : vector<128x256xf32>
    %34 = vector.extract_strided_slice %14 {offsets = [64, 0], sizes = [128, 384], strides = [1, 1]} : vector<192x384xbf16> to vector<128x384xbf16>
    %c4 = arith.constant 4 : index
    %c0_19 = arith.constant 0 : index
    %c0_20 = arith.constant 0 : index
    %35 = vector.load %arg4[%c4, %c0_19, %c0_20] : memref<5x384x256xbf16, #tpu.memory_space<vmem>>, vector<1x384x256xbf16>
    %36 = vector.shape_cast %35 : vector<1x384x256xbf16> to vector<384x256xbf16>
    %cst_21 = arith.constant dense<0.000000e+00> : vector<128x256xf32>
    %37 = tpu.matmul %34, %36, %cst_21 {dimension_numbers = #tpu.dot_dimension_numbers<[1], [0], [0], [1], [0, 0, 1, 1], [], []>} : vector<128x384xbf16>, vector<384x256xbf16>, vector<128x256xf32> -> vector<128x256xf32>
    %38 = arith.addf %33, %37 : vector<128x256xf32>
    %39 = vector.shape_cast %38 : vector<128x256xf32> to vector<4x2x16x256xf32>
    %40 = vector.extract_strided_slice %39 {offsets = [0, 0, 0, 0], sizes = [4, 1, 16, 256], strides = [1, 1, 1, 1]} : vector<4x2x16x256xf32> to vector<4x1x16x256xf32>
    %41 = vector.shape_cast %40 : vector<4x1x16x256xf32> to vector<4x16x256xf32>
    %42 = vector.extract_strided_slice %39 {offsets = [0, 1, 0, 0], sizes = [4, 1, 16, 256], strides = [1, 1, 1, 1]} : vector<4x2x16x256xf32> to vector<4x1x16x256xf32>
    %43 = vector.shape_cast %42 : vector<4x1x16x256xf32> to vector<4x16x256xf32>
    %44 = arith.maximumf %41, %43 : vector<4x16x256xf32>
    %45 = vector.extract_strided_slice %44 {offsets = [0, 0, 0], sizes = [4, 16, 128], strides = [1, 1, 1]} : vector<4x16x256xf32> to vector<4x16x128xf32>
    %46 = vector.extract_strided_slice %44 {offsets = [0, 0, 128], sizes = [4, 16, 128], strides = [1, 1, 1]} : vector<4x16x256xf32> to vector<4x16x128xf32>
    %47 = arith.maximumf %45, %46 : vector<4x16x128xf32>
    %c0_22 = arith.constant 0 : index
    %c0_23 = arith.constant 0 : index
    %48 = vector.load %arg5[%c0_22, %c0_23] : memref<1x128xf32, #tpu.memory_space<vmem>>, vector<1x128xf32>
    %49 = vector.shape_cast %48 : vector<1x128xf32> to vector<1x1x128xf32>
    %50 = vector.broadcast %49 : vector<1x1x128xf32> to vector<4x16x128xf32>
    %51 = arith.addf %47, %50 : vector<4x16x128xf32>
    %cst_24 = arith.constant 0.000000e+00 : f32
    %52 = vector.broadcast %cst_24 : f32 to vector<4x16x128xf32>
    %53 = arith.maximumf %51, %52 : vector<4x16x128xf32>
    %c0_25 = arith.constant 0 : index
    %c0_26 = arith.constant 0 : index
    %54 = vector.load %arg7[%c0_25, %c0_26] : memref<1x10xf32, #tpu.memory_space<vmem>>, vector<1x10xf32>
    %55 = vector.extract_strided_slice %53 {offsets = [0, 0, 0], sizes = [1, 16, 128], strides = [1, 1, 1]} : vector<4x16x128xf32> to vector<1x16x128xf32>
    %56 = vector.shape_cast %55 : vector<1x16x128xf32> to vector<16x128xf32>
    %c0_27 = arith.constant 0 : index
    %c0_28 = arith.constant 0 : index
    %c0_29 = arith.constant 0 : index
    %57 = vector.load %arg6[%c0_27, %c0_28, %c0_29] : memref<4x128x10xf32, #tpu.memory_space<vmem>>, vector<1x128x10xf32>
    %58 = vector.shape_cast %57 : vector<1x128x10xf32> to vector<128x10xf32>
    %cst_30 = arith.constant dense<0.000000e+00> : vector<16x10xf32>
    %59 = tpu.matmul %56, %58, %cst_30 {dimension_numbers = #tpu.dot_dimension_numbers<[1], [0], [0], [1], [0, 0, 1, 1], [], []>} : vector<16x128xf32>, vector<128x10xf32>, vector<16x10xf32> -> vector<16x10xf32>
    %60 = vector.broadcast %54 : vector<1x10xf32> to vector<16x10xf32>
    %61 = arith.addf %60, %59 : vector<16x10xf32>
    %62 = vector.extract_strided_slice %53 {offsets = [1, 0, 0], sizes = [1, 16, 128], strides = [1, 1, 1]} : vector<4x16x128xf32> to vector<1x16x128xf32>
    %63 = vector.shape_cast %62 : vector<1x16x128xf32> to vector<16x128xf32>
    %c1_31 = arith.constant 1 : index
    %c0_32 = arith.constant 0 : index
    %c0_33 = arith.constant 0 : index
    %64 = vector.load %arg6[%c1_31, %c0_32, %c0_33] : memref<4x128x10xf32, #tpu.memory_space<vmem>>, vector<1x128x10xf32>
    %65 = vector.shape_cast %64 : vector<1x128x10xf32> to vector<128x10xf32>
    %cst_34 = arith.constant dense<0.000000e+00> : vector<16x10xf32>
    %66 = tpu.matmul %63, %65, %cst_34 {dimension_numbers = #tpu.dot_dimension_numbers<[1], [0], [0], [1], [0, 0, 1, 1], [], []>} : vector<16x128xf32>, vector<128x10xf32>, vector<16x10xf32> -> vector<16x10xf32>
    %67 = arith.addf %61, %66 : vector<16x10xf32>
    %68 = vector.extract_strided_slice %53 {offsets = [2, 0, 0], sizes = [1, 16, 128], strides = [1, 1, 1]} : vector<4x16x128xf32> to vector<1x16x128xf32>
    %69 = vector.shape_cast %68 : vector<1x16x128xf32> to vector<16x128xf32>
    %c2_35 = arith.constant 2 : index
    %c0_36 = arith.constant 0 : index
    %c0_37 = arith.constant 0 : index
    %70 = vector.load %arg6[%c2_35, %c0_36, %c0_37] : memref<4x128x10xf32, #tpu.memory_space<vmem>>, vector<1x128x10xf32>
    %71 = vector.shape_cast %70 : vector<1x128x10xf32> to vector<128x10xf32>
    %cst_38 = arith.constant dense<0.000000e+00> : vector<16x10xf32>
    %72 = tpu.matmul %69, %71, %cst_38 {dimension_numbers = #tpu.dot_dimension_numbers<[1], [0], [0], [1], [0, 0, 1, 1], [], []>} : vector<16x128xf32>, vector<128x10xf32>, vector<16x10xf32> -> vector<16x10xf32>
    %73 = arith.addf %67, %72 : vector<16x10xf32>
    %74 = vector.extract_strided_slice %53 {offsets = [3, 0, 0], sizes = [1, 16, 128], strides = [1, 1, 1]} : vector<4x16x128xf32> to vector<1x16x128xf32>
    %75 = vector.shape_cast %74 : vector<1x16x128xf32> to vector<16x128xf32>
    %c3_39 = arith.constant 3 : index
    %c0_40 = arith.constant 0 : index
    %c0_41 = arith.constant 0 : index
    %76 = vector.load %arg6[%c3_39, %c0_40, %c0_41] : memref<4x128x10xf32, #tpu.memory_space<vmem>>, vector<1x128x10xf32>
    %77 = vector.shape_cast %76 : vector<1x128x10xf32> to vector<128x10xf32>
    %cst_42 = arith.constant dense<0.000000e+00> : vector<16x10xf32>
    %78 = tpu.matmul %75, %77, %cst_42 {dimension_numbers = #tpu.dot_dimension_numbers<[1], [0], [0], [1], [0, 0, 1, 1], [], []>} : vector<16x128xf32>, vector<128x10xf32>, vector<16x10xf32> -> vector<16x10xf32>
    %79 = arith.addf %73, %78 : vector<16x10xf32>
    %c0_43 = arith.constant 0 : index
    %c0_44 = arith.constant 0 : index
    %80 = vector.load %arg8[%c0_43, %c0_44] : memref<16x10xf32, #tpu.memory_space<vmem>>, vector<16x10xf32>
    tpu.vector_store %arg8[%c0_43, %c0_44], %79 {strides = array<i32>} : memref<16x10xf32, #tpu.memory_space<vmem>>, vector<16x10xf32>,
    return
  }
  func.func @transform_0(%arg0: i32) -> (i32, i32) {
    %c0_i32 = arith.constant 0 : i32
    %c0_i32_0 = arith.constant 0 : i32
    return %arg0, %c0_i32 : i32, i32
  }
  func.func @transform_1(%arg0: i32) -> (i32, i32) {
    %c0_i32 = arith.constant 0 : i32
    %c0_i32_0 = arith.constant 0 : i32
    %c0_i32_1 = arith.constant 0 : i32
    return %c0_i32, %c0_i32_0 : i32, i32
  }
  func.func @transform_2(%arg0: i32) -> (i32, i32) {
    %c0_i32 = arith.constant 0 : i32
    %c0_i32_0 = arith.constant 0 : i32
    %c0_i32_1 = arith.constant 0 : i32
    return %c0_i32, %c0_i32_0 : i32, i32
  }
  func.func @transform_3(%arg0: i32) -> (i32, i32, i32) {
    %c0_i32 = arith.constant 0 : i32
    %c0_i32_0 = arith.constant 0 : i32
    %c0_i32_1 = arith.constant 0 : i32
    %c0_i32_2 = arith.constant 0 : i32
    return %c0_i32, %c0_i32_0, %c0_i32_1 : i32, i32, i32
  }
  func.func @transform_4(%arg0: i32) -> (i32, i32) {
    %c0_i32 = arith.constant 0 : i32
    %c0_i32_0 = arith.constant 0 : i32
    %c0_i32_1 = arith.constant 0 : i32
    return %c0_i32, %c0_i32_0 : i32, i32
  }
  func.func @transform_5(%arg0: i32) -> (i32, i32, i32) {
    %c0_i32 = arith.constant 0 : i32
    %c0_i32_0 = arith.constant 0 : i32
    %c0_i32_1 = arith.constant 0 : i32
    %c0_i32_2 = arith.constant 0 : i32
    return %c0_i32, %c0_i32_0, %c0_i32_1 : i32, i32, i32
  }
  func.func @transform_6(%arg0: i32) -> (i32, i32) {
    %c0_i32 = arith.constant 0 : i32
    %c0_i32_0 = arith.constant 0 : i32
    %c0_i32_1 = arith.constant 0 : i32
    return %c0_i32, %c0_i32_0 : i32, i32
  }
  func.func @transform_7(%arg0: i32) -> (i32, i32) {
    %c0_i32 = arith.constant 0 : i32
    %c0_i32_0 = arith.constant 0 : i32
    return %arg0, %c0_i32 : i32, i32
  }
}

</mosaic_0001>

<llo_original>
// kernel: tile.13
$region0: #{tile.13}
  #allocation0 [shape = 's32[1]{0}', space=sflag, size = 0x4, scoped, tag = 'scoped memory for tile.13']
  %s0 = inlined_call_operand.vmem [shape: f32[32], index: 0, kind: input, shape index: {}]
  %s1 = inlined_call_operand.vmem [shape: f32[12,32], index: 1, kind: output, shape index: {}]
  // Predicated region
  $region2: #{tile.13} parent=0 // pred_check
    _
  $region3: #{tile.13} parent=0 // pred_check_branch
    %3 = sbr.rel (0) target = $region5
  $region4: #{tile.13} parent=0 // pred_region
    _
  $region5: #{tile.13} parent=0 // pred_fallthru
    _
  %v4 = vld [vmem:[%s0] ss:$0 sm:$0xff]
  %5 = vst [vmem:[%s1] sm:$0xff] %v4
  %s6 = scalar_lea.vmem %s1, 8
  %7 = vst [vmem:[%s6] sm:$0xff] %v4

// kernel: tile.14
$region0: #{tile.14}
  %s0 = inlined_call_operand.vmem [shape: f32[12,32], index: 0, kind: input, shape index: {}]
  %s1 = inlined_call_operand.vmem [shape: f32[1,384], index: 1, kind: output, shape index: {}]
  $region1: #{tile.14} parent=0
    #allocation0 [shape = 'u8[12288]{0}', space=vmem, size = 0x3000, scoped, tag = 'scoped mem for output reshape']
    %v2 = vld [vmem:[%s0] ss:$4 sm:$0x7]
    %vm3 = vcmask 261120
    %4 = vst.msk [vmem:[#allocation0] ss:$8 sm:$0x7] %vm3, %v2
    %s5 = scalar_lea.vmem %s0, 3
    %v6 = vld [vmem:[%s5] ss:$4 sm:$0x7]
    %7 = vrot.lane.b32.xlu0 %v6, 96
    %v8 = vpop.permute.xlu0 %7
    %vm9 = vcmask 1048320
    %10 = vst.msk [vmem:[#allocation0] ss:$8 sm:$0x7] %vm9, %v8
    %s11 = scalar_lea.vmem %s0, 2
    %v12 = vld [vmem:[%s11] ss:$4 sm:$0x7]
    %13 = vrot.lane.b32.xlu0 %v12, 64
    %v14 = vpop.permute.xlu0 %13
    %vm15 = vcmask 785920
    %16 = vst.msk [vmem:[#allocation0] ss:$8 sm:$0x7] %vm15, %v14
    %s17 = scalar_lea.vmem %s0, 1
    %v18 = vld [vmem:[%s17] ss:$4 sm:$0x7]
    %19 = vrot.lane.b32.xlu0 %v18, 32
    %v20 = vpop.permute.xlu0 %19
    %vm21 = vcmask 523520
    %22 = vst.msk [vmem:[#allocation0] ss:$8 sm:$0x7] %vm21, %v20
    %s24 = sshllo.u32 0, 1
    %v26 = vld [vmem:[#allocation0] sm:%s24]
    %s27 = sshllo.u32 0, 1
    %28 = vst [vmem:[%s1] sm:%s27] %v26
    %s29 = scalar_lea.vmem [#allocation0], 8
    %v30 = vld [vmem:[%s29] sm:%s24]
    %s31 = sshllo.u32 0, 1
    %s32 = scalar_lea.vmem %s1, 1
    %33 = vst [vmem:[%s32] sm:%s31] %v30
    %s34 = scalar_lea.vmem [#allocation0], 16
    %v35 = vld [vmem:[%s34] sm:%s24]
    %s36 = sshllo.u32 0, 1
    %s37 = smul.addr 1, 2
    %s38 = scalar_lea.vmem %s1, %s37
    %39 = vst [vmem:[%s38] sm:%s36] %v35

// kernel: tile.18
$region0: #{tile.18}
  #allocation0 [shape = 's32[1]{0}', space=sflag, size = 0x4, scoped, tag = 'scoped memory for tile.18']
  %s0 = inlined_call_operand.vmem [shape: f32[32], index: 0, kind: input, shape index: {}]
  %s1 = inlined_call_operand.vmem [shape: f32[4,32], index: 1, kind: output, shape index: {}]
  // Predicated region
  $region2: #{tile.18} parent=0 // pred_check
    _
  $region3: #{tile.18} parent=0 // pred_check_branch
    %3 = sbr.rel (0) target = $region5
  $region4: #{tile.18} parent=0 // pred_region
    _
  $region5: #{tile.18} parent=0 // pred_fallthru
    _
  %v4 = vld [vmem:[%s0] ss:$0 sm:$0xff]
  %5 = vst [vmem:[%s1] sm:$0xf] %v4

// kernel: tile.19
$region0: #{tile.19}
  %s0 = inlined_call_operand.vmem [shape: f32[4,32], index: 0, kind: input, shape index: {}]
  %s1 = inlined_call_operand.vmem [shape: f32[1,128], index: 1, kind: output, shape index: {}]
  $region1: #{tile.19} parent=0
    #allocation0 [shape = 'u8[4096]{0}', space=vmem, size = 0x1000, scoped, tag = 'scoped mem for output reshape']
    #allocation1 [shape = 'u8[4096]{0}', space=vmem, size = 0x1000, scoped, tag = 'scoped mem for input reshape']
    %s3 = sshllo.u32 0, 4
    %v4 = vld [vmem:[%s0] sm:%s3]
    %5 = vst [vmem:[#allocation1] sm:%s3] %v4
    %v6 = vld [vmem:[#allocation1] sm:$0x1]
    %vm7 = vcmask 261120
    %8 = vst.msk [vmem:[#allocation0] sm:$0x1] %vm7, %v6
    %s9 = scalar_lea.vmem [#allocation1], 3
    %v10 = vld [vmem:[%s9] sm:$0x1]
    %11 = vrot.lane.b32.xlu0 %v10, 96
    %v12 = vpop.permute.xlu0 %11
    %vm13 = vcmask 1048320
    %14 = vst.msk [vmem:[#allocation0] sm:$0x1] %vm13, %v12
    %s15 = scalar_lea.vmem [#allocation1], 2
    %v16 = vld [vmem:[%s15] sm:$0x1]
    %17 = vrot.lane.b32.xlu0 %v16, 64
    %v18 = vpop.permute.xlu0 %17
    %vm19 = vcmask 785920
    %20 = vst.msk [vmem:[#allocation0] sm:$0x1] %vm19, %v18
    %s21 = scalar_lea.vmem [#allocation1], 1
    %v22 = vld [vmem:[%s21] sm:$0x1]
    %23 = vrot.lane.b32.xlu0 %v22, 32
    %v24 = vpop.permute.xlu0 %23
    %vm25 = vcmask 523520
    %26 = vst.msk [vmem:[#allocation0] sm:$0x1] %vm25, %v24
    %s28 = sshllo.u32 0, 1
    %v30 = vld [vmem:[#allocation0] sm:%s28]
    %s31 = sshllo.u32 0, 1
    %32 = vst [vmem:[%s1] sm:%s31] %v30

// kernel: small_forward.1
$region0: #{small_forward.1}
  #allocation0 [shape = 'u32[]', space=smem, size = 0x4, offset = 0x4, fixed_abs, tag = 'smem constant byte address 0x4 - core index']
  #allocation1 [shape = 'u32[144,128]{1,0:T(1,128)}', space=vmem, size = 0x12000, scoped, tag = 'internal scratch']
  %s0 = inlined_call_operand.vmem [shape: bf16[384,140], index: 0, kind: input, shape index: {}]
  %s1 = inlined_call_operand.vmem [shape: bf16[140,768], index: 1, kind: input, shape index: {}]
  %s2 = inlined_call_operand.vmem [shape: f32[1,384], index: 2, kind: input, shape index: {}]
  %s3 = inlined_call_operand.vmem [shape: bf16[5,384,256], index: 3, kind: input, shape index: {}]
  %s4 = inlined_call_operand.vmem [shape: f32[1,128], index: 4, kind: input, shape index: {}]
  %s5 = inlined_call_operand.vmem [shape: f32[4,128,10], index: 5, kind: input, shape index: {}]
  %s6 = inlined_call_operand.vmem [shape: f32[1,10], index: 6, kind: input, shape index: {}]
  %s7 = inlined_call_operand.vmem [shape: f32[16,10], index: 7, kind: output, shape index: {}]
  %s8 = sld [smem:[#allocation0]]
  $region38: #{small_forward.1} parent=0
    _
  %s10 = ssub.s32 1, %s8
  %s11 = scalar_select 0, %s10, %s8
  // Predicated region
  $region2: #{small_forward.1} parent=0 // pred_check
    _
  $region3: #{small_forward.1} parent=0 // pred_check_branch
    %13 = sbr.rel (0) target = $region5
  $region4: #{small_forward.1} parent=0 // pred_region
    _
  $region5: #{small_forward.1} parent=0 // pred_fallthru
    _
  // Predicated region
  $region6: #{small_forward.1} parent=0 // pred_check
    _
  $region7: #{small_forward.1} parent=0 // pred_check_branch
    %15 = sbr.rel (0) target = $region9
  $region8: #{small_forward.1} parent=0 // pred_region
    _
  $region9: #{small_forward.1} parent=0 // pred_fallthru
    _
  // Predicated region
  $region10: #{small_forward.1} parent=0 // pred_check
    _
  $region11: #{small_forward.1} parent=0 // pred_check_branch
    %17 = sbr.rel (0) target = $region13
  $region12: #{small_forward.1} parent=0 // pred_region
    _
  $region13: #{small_forward.1} parent=0 // pred_fallthru
    _
  // Predicated region
  $region14: #{small_forward.1} parent=0 // pred_check
    _
  $region15: #{small_forward.1} parent=0 // pred_check_branch
    %19 = sbr.rel (0) target = $region17
  $region16: #{small_forward.1} parent=0 // pred_region
    _
  $region17: #{small_forward.1} parent=0 // pred_fallthru
    _
  // Predicated region
  $region18: #{small_forward.1} parent=0 // pred_check
    _
  $region19: #{small_forward.1} parent=0 // pred_check_branch
    %21 = sbr.rel (0) target = $region21
  $region20: #{small_forward.1} parent=0 // pred_region
    _
  $region21: #{small_forward.1} parent=0 // pred_fallthru
    _
  // Predicated region
  $region22: #{small_forward.1} parent=0 // pred_check
    _
  $region23: #{small_forward.1} parent=0 // pred_check_branch
    %23 = sbr.rel (0) target = $region25
  $region24: #{small_forward.1} parent=0 // pred_region
    _
  $region25: #{small_forward.1} parent=0 // pred_fallthru
    _
  // Predicated region
  $region26: #{small_forward.1} parent=0 // pred_check
    _
  $region27: #{small_forward.1} parent=0 // pred_check_branch
    %25 = sbr.rel (0) target = $region29
  $region28: #{small_forward.1} parent=0 // pred_region
    _
  $region29: #{small_forward.1} parent=0 // pred_fallthru
    _
  %v27 = vld [vmem:[%s0] sm:$0xff]
  %v28 = vld [vmem:[%s0 + $0x8] sm:$0xff]
  %v29 = vld [vmem:[%s0 + $0x10] sm:$0xff]
  %v30 = vld [vmem:[%s0 + $0x18] sm:$0xff]
  %v31 = vld [vmem:[%s0 + $0x20] sm:$0xff]
  %v32 = vld [vmem:[%s0 + $0x28] sm:$0xff]
  %v33 = vld [vmem:[%s0 + $0x30] sm:$0xff]
  %v34 = vld [vmem:[%s0 + $0x38] sm:$0xff]
  %v35 = vld [vmem:[%s0 + $0x40] sm:$0xff]
  %v36 = vld [vmem:[%s0 + $0x48] sm:$0xff]
  %v37 = vld [vmem:[%s0 + $0x50] sm:$0xff]
  %v38 = vld [vmem:[%s0 + $0x58] sm:$0xff]
  %v39 = vld [vmem:[%s0 + $0x60] sm:$0xff]
  %v40 = vld [vmem:[%s0 + $0x68] sm:$0xff]
  %v41 = vld [vmem:[%s0 + $0x70] sm:$0xff]
  %v42 = vld [vmem:[%s0 + $0x78] sm:$0xff]
  %v43 = vld [vmem:[%s0 + $0x80] sm:$0xff]
  %v44 = vld [vmem:[%s0 + $0x88] sm:$0xff]
  %v45 = vld [vmem:[%s0 + $0x90] sm:$0xff]
  %v46 = vld [vmem:[%s0 + $0x98] sm:$0xff]
  %v47 = vld [vmem:[%s0 + $0xa0] sm:$0xff]
  %v48 = vld [vmem:[%s0 + $0xa8] sm:$0xff]
  %v49 = vld [vmem:[%s0 + $0xb0] sm:$0xff]
  %v50 = vld [vmem:[%s0 + $0xb8] sm:$0xff]
  %v51 = vld [vmem:[%s0 + $0xc0] sm:$0xff]
  %v52 = vld [vmem:[%s0 + $0xc8] sm:$0xff]
  %v53 = vld [vmem:[%s0 + $0xd0] sm:$0xff]
  %v54 = vld [vmem:[%s0 + $0xd8] sm:$0xff]
  %v55 = vld [vmem:[%s0 + $0xe0] sm:$0xff]
  %v56 = vld [vmem:[%s0 + $0xe8] sm:$0xff]
  %v57 = vld [vmem:[%s0 + $0xf0] sm:$0xff]
  %v58 = vld [vmem:[%s0 + $0xf8] sm:$0xff]
  %v59 = vld [vmem:[%s0 + $0x100] sm:$0xff]
  %v60 = vld [vmem:[%s0 + $0x108] sm:$0xff]
  %v61 = vld [vmem:[%s0 + $0x110] sm:$0xff]
  %v62 = vld [vmem:[%s0 + $0x118] sm:$0xff]
  %v63 = vld [vmem:[%s0 + $0x120] sm:$0xff]
  %v64 = vld [vmem:[%s0 + $0x128] sm:$0xff]
  %v65 = vld [vmem:[%s0 + $0x130] sm:$0xff]
  %v66 = vld [vmem:[%s0 + $0x138] sm:$0xff]
  %v67 = vld [vmem:[%s0 + $0x140] sm:$0xff]
  %v68 = vld [vmem:[%s0 + $0x148] sm:$0xff]
  %v69 = vld [vmem:[%s0 + $0x150] sm:$0xff]
  %v70 = vld [vmem:[%s0 + $0x158] sm:$0xff]
  %v71 = vld [vmem:[%s0 + $0x160] sm:$0xff]
  %v72 = vld [vmem:[%s0 + $0x168] sm:$0xff]
  %v73 = vld [vmem:[%s0 + $0x170] sm:$0xff]
  %v74 = vld [vmem:[%s0 + $0x178] sm:$0xff]
  %v75 = vld [vmem:[%s1] sm:$0xff]
  %v76 = vld [vmem:[%s1 + $0x8] sm:$0xff]
  %v77 = vld [vmem:[%s1 + $0x10] sm:$0xff]
  %v78 = vld [vmem:[%s1 + $0x18] sm:$0xff]
  %v79 = vld [vmem:[%s1 + $0x20] sm:$0xff]
  %v80 = vld [vmem:[%s1 + $0x28] sm:$0xff]
  %v81 = vld [vmem:[%s1 + $0x30] sm:$0xff]
  %v82 = vld [vmem:[%s1 + $0x38] sm:$0xff]
  %v83 = vld [vmem:[%s1 + $0x40] sm:$0xff]
  %v84 = vld [vmem:[%s1 + $0x48] sm:$0xff]
  %v85 = vld [vmem:[%s1 + $0x50] sm:$0xff]
  %v86 = vld [vmem:[%s1 + $0x58] sm:$0xff]
  %v87 = vld [vmem:[%s1 + $0x60] sm:$0xff]
  %v88 = vld [vmem:[%s1 + $0x68] sm:$0xff]
  %v89 = vld [vmem:[%s1 + $0x70] sm:$0xff]
  %v90 = vld [vmem:[%s1 + $0x78] sm:$0xff]
  %v91 = vld [vmem:[%s1 + $0x80] sm:$0xff]
  %v92 = vld [vmem:[%s1 + $0x88] sm:$0xff]
  %v93 = vld [vmem:[%s1 + $0x90] sm:$0xff]
  %v94 = vld [vmem:[%s1 + $0x98] sm:$0xff]
  %v95 = vld [vmem:[%s1 + $0xa0] sm:$0xff]
  %v96 = vld [vmem:[%s1 + $0xa8] sm:$0xff]
  %v97 = vld [vmem:[%s1 + $0xb0] sm:$0xff]
  %v98 = vld [vmem:[%s1 + $0xb8] sm:$0xff]
  %v99 = vld [vmem:[%s1 + $0xc0] sm:$0xff]
  %v100 = vld [vmem:[%s1 + $0xc8] sm:$0xff]
  %v101 = vld [vmem:[%s1 + $0xd0] sm:$0xff]
  %v102 = vld [vmem:[%s1 + $0xd8] sm:$0xff]
  %v103 = vld [vmem:[%s1 + $0xe0] sm:$0xff]
  %v104 = vld [vmem:[%s1 + $0xe8] sm:$0xff]
  %v105 = vld [vmem:[%s1 + $0xf0] sm:$0xff]
  %v106 = vld [vmem:[%s1 + $0xf8] sm:$0xff]
  %v107 = vld [vmem:[%s1 + $0x100] sm:$0xff]
  %v108 = vld [vmem:[%s1 + $0x108] sm:$0xff]
  %v109 = vld [vmem:[%s1 + $0x110] sm:$0xff]
  %v110 = vld [vmem:[%s1 + $0x118] sm:$0xff]
  %v111 = vld [vmem:[%s1 + $0x120] sm:$0xff]
  %v112 = vld [vmem:[%s1 + $0x128] sm:$0xff]
  %v113 = vld [vmem:[%s1 + $0x130] sm:$0xff]
  %v114 = vld [vmem:[%s1 + $0x138] sm:$0xff]
  %v115 = vld [vmem:[%s1 + $0x140] sm:$0xff]
  %v116 = vld [vmem:[%s1 + $0x148] sm:$0xff]
  %v117 = vld [vmem:[%s1 + $0x150] sm:$0xff]
  %v118 = vld [vmem:[%s1 + $0x158] sm:$0xff]
  %v119 = vld [vmem:[%s1 + $0x160] sm:$0xff]
  %v120 = vld [vmem:[%s1 + $0x168] sm:$0xff]
  %v121 = vld [vmem:[%s1 + $0x170] sm:$0xff]
  %v122 = vld [vmem:[%s1 + $0x178] sm:$0xff]
  %v123 = vld [vmem:[%s1 + $0x180] sm:$0xff]
  %v124 = vld [vmem:[%s1 + $0x188] sm:$0xff]
  %v125 = vld [vmem:[%s1 + $0x190] sm:$0xff]
  %v126 = vld [vmem:[%s1 + $0x198] sm:$0x33]
  %v127 = vld [vmem:[%s1 + $0x1a0] sm:$0x33]
  %v128 = vld [vmem:[%s1 + $0x1a8] sm:$0x33]
  %v177 = vunpack.c.l.b16 %v27
  %v178 = vunpack.c.h.b16 %v27
  %v179 = vunpack.c.l.b16 %v28
  %v180 = vunpack.c.h.b16 %v28
  %v181 = vunpack.c.l.b16 %v29
  %v182 = vunpack.c.h.b16 %v29
  %v183 = vunpack.c.l.b16 %v30
  %v184 = vunpack.c.h.b16 %v30
  %v185 = vunpack.c.l.b16 %v31
  %v186 = vunpack.c.h.b16 %v31
  %v187 = vunpack.c.l.b16 %v32
  %v188 = vunpack.c.h.b16 %v32
  %v189 = vunpack.c.l.b16 %v33
  %v190 = vunpack.c.h.b16 %v33
  %v191 = vunpack.c.l.b16 %v34
  %v192 = vunpack.c.h.b16 %v34
  %v193 = vunpack.c.l.b16 %v35
  %v194 = vunpack.c.h.b16 %v35
  %v195 = vunpack.c.l.b16 %v36
  %v196 = vunpack.c.h.b16 %v36
  %v197 = vunpack.c.l.b16 %v37
  %v198 = vunpack.c.h.b16 %v37
  %v199 = vunpack.c.l.b16 %v38
  %v200 = vunpack.c.h.b16 %v38
  %v201 = vunpack.c.l.b16 %v39
  %v202 = vunpack.c.h.b16 %v39
  %v203 = vunpack.c.l.b16 %v40
  %v204 = vunpack.c.h.b16 %v40
  %v205 = vunpack.c.l.b16 %v41
  %v206 = vunpack.c.h.b16 %v41
  %v207 = vunpack.c.l.b16 %v42
  %v208 = vunpack.c.h.b16 %v42
  %v209 = vunpack.c.l.b16 %v43
  %v210 = vunpack.c.h.b16 %v43
  %v211 = vunpack.c.l.b16 %v44
  %v212 = vunpack.c.h.b16 %v44
  %v213 = vunpack.c.l.b16 %v45
  %v214 = vunpack.c.h.b16 %v45
  %v215 = vunpack.c.l.b16 %v46
  %v216 = vunpack.c.h.b16 %v46
  %v217 = vunpack.c.l.b16 %v47
  %v218 = vunpack.c.h.b16 %v47
  %v219 = vunpack.c.l.b16 %v48
  %v220 = vunpack.c.h.b16 %v48
  %v221 = vunpack.c.l.b16 %v49
  %v222 = vunpack.c.h.b16 %v49
  %v223 = vunpack.c.l.b16 %v50
  %v224 = vunpack.c.h.b16 %v50
  %v225 = vunpack.c.l.b16 %v51
  %v226 = vunpack.c.h.b16 %v51
  %v227 = vunpack.c.l.b16 %v52
  %v228 = vunpack.c.h.b16 %v52
  %v229 = vunpack.c.l.b16 %v53
  %v230 = vunpack.c.h.b16 %v53
  %v231 = vunpack.c.l.b16 %v54
  %v232 = vunpack.c.h.b16 %v54
  %v233 = vunpack.c.l.b16 %v55
  %v234 = vunpack.c.h.b16 %v55
  %v235 = vunpack.c.l.b16 %v56
  %v236 = vunpack.c.h.b16 %v56
  %v237 = vunpack.c.l.b16 %v57
  %v238 = vunpack.c.h.b16 %v57
  %v239 = vunpack.c.l.b16 %v58
  %v240 = vunpack.c.h.b16 %v58
  %v241 = vunpack.c.l.b16 %v59
  %v242 = vunpack.c.h.b16 %v59
  %v243 = vunpack.c.l.b16 %v60
  %v244 = vunpack.c.h.b16 %v60
  %v245 = vunpack.c.l.b16 %v61
  %v246 = vunpack.c.h.b16 %v61
  %v247 = vunpack.c.l.b16 %v62
  %v248 = vunpack.c.h.b16 %v62
  %v249 = vunpack.c.l.b16 %v63
  %v250 = vunpack.c.h.b16 %v63
  %v251 = vunpack.c.l.b16 %v64
  %v252 = vunpack.c.h.b16 %v64
  %v253 = vunpack.c.l.b16 %v65
  %v254 = vunpack.c.h.b16 %v65
  %v255 = vunpack.c.l.b16 %v66
  %v256 = vunpack.c.h.b16 %v66
  %v257 = vunpack.c.l.b16 %v67
  %v258 = vunpack.c.h.b16 %v67
  %v259 = vunpack.c.l.b16 %v68
  %v260 = vunpack.c.h.b16 %v68
  %v261 = vunpack.c.l.b16 %v69
  %v262 = vunpack.c.h.b16 %v69
  %v263 = vunpack.c.l.b16 %v70
  %v264 = vunpack.c.h.b16 %v70
  %v265 = vunpack.c.l.b16 %v71
  %v266 = vunpack.c.h.b16 %v71
  %v267 = vunpack.c.l.b16 %v72
  %v268 = vunpack.c.h.b16 %v72
  %v269 = vunpack.c.l.b16 %v73
  %v270 = vunpack.c.h.b16 %v73
  %v271 = vunpack.c.l.b16 %v74
  %v272 = vunpack.c.h.b16 %v74
  %v273 = vpack.c.b16 %v179, %v177
  %v274 = vpack.c.b16 %v180, %v178
  %v275 = vpack.c.b16 %v183, %v181
  %v276 = vpack.c.b16 %v184, %v182
  %v277 = vpack.c.b16 %v187, %v185
  %v278 = vpack.c.b16 %v188, %v186
  %v279 = vpack.c.b16 %v191, %v189
  %v280 = vpack.c.b16 %v192, %v190
  %v281 = vpack.c.b16 %v195, %v193
  %v282 = vpack.c.b16 %v196, %v194
  %v283 = vpack.c.b16 %v199, %v197
  %v284 = vpack.c.b16 %v200, %v198
  %v285 = vpack.c.b16 %v203, %v201
  %v286 = vpack.c.b16 %v204, %v202
  %v287 = vpack.c.b16 %v207, %v205
  %v288 = vpack.c.b16 %v208, %v206
  %v289 = vpack.c.b16 %v211, %v209
  %v290 = vpack.c.b16 %v212, %v210
  %v291 = vpack.c.b16 %v215, %v213
  %v292 = vpack.c.b16 %v216, %v214
  %v293 = vpack.c.b16 %v219, %v217
  %v294 = vpack.c.b16 %v220, %v218
  %v295 = vpack.c.b16 %v223, %v221
  %v296 = vpack.c.b16 %v224, %v222
  %v297 = vpack.c.b16 %v227, %v225
  %v298 = vpack.c.b16 %v228, %v226
  %v299 = vpack.c.b16 %v231, %v229
  %v300 = vpack.c.b16 %v232, %v230
  %v301 = vpack.c.b16 %v235, %v233
  %v302 = vpack.c.b16 %v236, %v234
  %v303 = vpack.c.b16 %v239, %v237
  %v304 = vpack.c.b16 %v240, %v238
  %v305 = vpack.c.b16 %v243, %v241
  %v306 = vpack.c.b16 %v244, %v242
  %v307 = vpack.c.b16 %v247, %v245
  %v308 = vpack.c.b16 %v248, %v246
  %v309 = vpack.c.b16 %v251, %v249
  %v310 = vpack.c.b16 %v252, %v250
  %v311 = vpack.c.b16 %v255, %v253
  %v312 = vpack.c.b16 %v256, %v254
  %v313 = vpack.c.b16 %v259, %v257
  %v314 = vpack.c.b16 %v260, %v258
  %v315 = vpack.c.b16 %v263, %v261
  %v316 = vpack.c.b16 %v264, %v262
  %v317 = vpack.c.b16 %v267, %v265
  %v318 = vpack.c.b16 %v268, %v266
  %v319 = vpack.c.b16 %v271, %v269
  %v320 = vpack.c.b16 %v272, %v270
  %v399 = vunpack.c.l.b16 %v75
  %v400 = vunpack.c.h.b16 %v75
  %v401 = vunpack.c.l.b16 %v76
  %v402 = vunpack.c.h.b16 %v76
  %v403 = vunpack.c.l.b16 %v77
  %v404 = vunpack.c.h.b16 %v77
  %v405 = vunpack.c.l.b16 %v78
  %v406 = vunpack.c.h.b16 %v78
  %v407 = vunpack.c.l.b16 %v79
  %v408 = vunpack.c.h.b16 %v79
  %v409 = vunpack.c.l.b16 %v80
  %v410 = vunpack.c.h.b16 %v80
  %v411 = vunpack.c.l.b16 %v81
  %v412 = vunpack.c.h.b16 %v81
  %v413 = vunpack.c.l.b16 %v82
  %v414 = vunpack.c.h.b16 %v82
  %v415 = vunpack.c.l.b16 %v83
  %v416 = vunpack.c.h.b16 %v83
  %v417 = vunpack.c.l.b16 %v84
  %v418 = vunpack.c.h.b16 %v84
  %v419 = vunpack.c.l.b16 %v85
  %v420 = vunpack.c.h.b16 %v85
  %v421 = vunpack.c.l.b16 %v86
  %v422 = vunpack.c.h.b16 %v86
  %v423 = vunpack.c.l.b16 %v87
  %v424 = vunpack.c.h.b16 %v87
  %v425 = vunpack.c.l.b16 %v88
  %v426 = vunpack.c.h.b16 %v88
  %v427 = vunpack.c.l.b16 %v89
  %v428 = vunpack.c.h.b16 %v89
  %v429 = vunpack.c.l.b16 %v90
  %v430 = vunpack.c.h.b16 %v90
  %v431 = vunpack.c.l.b16 %v91
  %v432 = vunpack.c.h.b16 %v91
  %v433 = vunpack.c.l.b16 %v92
  %v434 = vunpack.c.h.b16 %v92
  %v435 = vunpack.c.l.b16 %v93
  %v436 = vunpack.c.h.b16 %v93
  %v437 = vunpack.c.l.b16 %v94
  %v438 = vunpack.c.h.b16 %v94
  %v439 = vunpack.c.l.b16 %v95
  %v440 = vunpack.c.h.b16 %v95
  %v441 = vunpack.c.l.b16 %v96
  %v442 = vunpack.c.h.b16 %v96
  %v443 = vunpack.c.l.b16 %v97
  %v444 = vunpack.c.h.b16 %v97
  %v445 = vunpack.c.l.b16 %v98
  %v446 = vunpack.c.h.b16 %v98
  %v447 = vunpack.c.l.b16 %v99
  %v448 = vunpack.c.h.b16 %v99
  %v449 = vunpack.c.l.b16 %v100
  %v450 = vunpack.c.h.b16 %v100
  %v451 = vunpack.c.l.b16 %v101
  %v452 = vunpack.c.h.b16 %v101
  %v453 = vunpack.c.l.b16 %v102
  %v454 = vunpack.c.h.b16 %v102
  %v455 = vunpack.c.l.b16 %v103
  %v456 = vunpack.c.h.b16 %v103
  %v457 = vunpack.c.l.b16 %v104
  %v458 = vunpack.c.h.b16 %v104
  %v459 = vunpack.c.l.b16 %v105
  %v460 = vunpack.c.h.b16 %v105
  %v461 = vunpack.c.l.b16 %v106
  %v462 = vunpack.c.h.b16 %v106
  %v463 = vunpack.c.l.b16 %v107
  %v464 = vunpack.c.h.b16 %v107
  %v465 = vunpack.c.l.b16 %v108
  %v466 = vunpack.c.h.b16 %v108
  %v467 = vunpack.c.l.b16 %v109
  %v468 = vunpack.c.h.b16 %v109
  %v469 = vunpack.c.l.b16 %v110
  %v470 = vunpack.c.h.b16 %v110
  %v471 = vunpack.c.l.b16 %v111
  %v472 = vunpack.c.h.b16 %v111
  %v473 = vunpack.c.l.b16 %v112
  %v474 = vunpack.c.h.b16 %v112
  %v475 = vunpack.c.l.b16 %v113
  %v476 = vunpack.c.h.b16 %v113
  %v477 = vunpack.c.l.b16 %v114
  %v478 = vunpack.c.h.b16 %v114
  %v479 = vunpack.c.l.b16 %v115
  %v480 = vunpack.c.h.b16 %v115
  %v481 = vunpack.c.l.b16 %v116
  %v482 = vunpack.c.h.b16 %v116
  %v483 = vunpack.c.l.b16 %v117
  %v484 = vunpack.c.h.b16 %v117
  %v485 = vunpack.c.l.b16 %v118
  %v486 = vunpack.c.h.b16 %v118
  %v487 = vunpack.c.l.b16 %v119
  %v488 = vunpack.c.h.b16 %v119
  %v489 = vunpack.c.l.b16 %v120
  %v490 = vunpack.c.h.b16 %v120
  %v491 = vunpack.c.l.b16 %v121
  %v492 = vunpack.c.h.b16 %v121
  %v493 = vunpack.c.l.b16 %v122
  %v494 = vunpack.c.h.b16 %v122
  %v495 = vunpack.c.l.b16 %v123
  %v496 = vunpack.c.h.b16 %v123
  %v497 = vunpack.c.l.b16 %v124
  %v498 = vunpack.c.h.b16 %v124
  %v499 = vunpack.c.l.b16 %v125
  %v500 = vunpack.c.h.b16 %v125
  %v501 = vunpack.c.l.b16 %v126
  %v502 = vunpack.c.h.b16 %v126
  %v503 = vunpack.c.l.b16 %v127
  %v504 = vunpack.c.h.b16 %v127
  %v505 = vunpack.c.l.b16 %v128
  %v506 = vunpack.c.h.b16 %v128
  %v507 = vpack.c.b16 %v405, %v399
  %v508 = vpack.c.b16 %v406, %v400
  %v509 = vpack.c.b16 %v407, %v401
  %v510 = vpack.c.b16 %v408, %v402
  %v511 = vpack.c.b16 %v409, %v403
  %v512 = vpack.c.b16 %v410, %v404
  %v513 = vpack.c.b16 %v417, %v411
  %v514 = vpack.c.b16 %v418, %v412
  %v515 = vpack.c.b16 %v419, %v413
  %v516 = vpack.c.b16 %v420, %v414
  %v517 = vpack.c.b16 %v421, %v415
  %v518 = vpack.c.b16 %v422, %v416
  %v519 = vpack.c.b16 %v429, %v423
  %v520 = vpack.c.b16 %v430, %v424
  %v521 = vpack.c.b16 %v431, %v425
  %v522 = vpack.c.b16 %v432, %v426
  %v523 = vpack.c.b16 %v433, %v427
  %v524 = vpack.c.b16 %v434, %v428
  %v525 = vpack.c.b16 %v441, %v435
  %v526 = vpack.c.b16 %v442, %v436
  %v527 = vpack.c.b16 %v443, %v437
  %v528 = vpack.c.b16 %v444, %v438
  %v529 = vpack.c.b16 %v445, %v439
  %v530 = vpack.c.b16 %v446, %v440
  %v531 = vpack.c.b16 %v453, %v447
  %v532 = vpack.c.b16 %v454, %v448
  %v533 = vpack.c.b16 %v455, %v449
  %v534 = vpack.c.b16 %v456, %v450
  %v535 = vpack.c.b16 %v457, %v451
  %v536 = vpack.c.b16 %v458, %v452
  %v537 = vpack.c.b16 %v465, %v459
  %v538 = vpack.c.b16 %v466, %v460
  %v539 = vpack.c.b16 %v467, %v461
  %v540 = vpack.c.b16 %v468, %v462
  %v541 = vpack.c.b16 %v469, %v463
  %v542 = vpack.c.b16 %v470, %v464
  %v543 = vpack.c.b16 %v477, %v471
  %v544 = vpack.c.b16 %v478, %v472
  %v545 = vpack.c.b16 %v479, %v473
  %v546 = vpack.c.b16 %v480, %v474
  %v547 = vpack.c.b16 %v481, %v475
  %v548 = vpack.c.b16 %v482, %v476
  %v549 = vpack.c.b16 %v489, %v483
  %v550 = vpack.c.b16 %v490, %v484
  %v551 = vpack.c.b16 %v491, %v485
  %v552 = vpack.c.b16 %v492, %v486
  %v553 = vpack.c.b16 %v493, %v487
  %v554 = vpack.c.b16 %v494, %v488
  %v555 = vpack.c.b16 %v501, %v495
  %v556 = vpack.c.b16 %v502, %v496
  %v557 = vpack.c.b16 %v503, %v497
  %v558 = vpack.c.b16 %v504, %v498
  %v559 = vpack.c.b16 %v505, %v499
  %v560 = vpack.c.b16 %v506, %v500
  %vm609 = vcmask 97280
  %v611 = vsel %vm609, %v274, 0
  %v614 = vsel %vm609, %v276, 0
  %v617 = vsel %vm609, %v278, 0
  %v620 = vsel %vm609, %v280, 0
  %v623 = vsel %vm609, %v282, 0
  %v626 = vsel %vm609, %v284, 0
  %v629 = vsel %vm609, %v286, 0
  %v632 = vsel %vm609, %v288, 0
  %v635 = vsel %vm609, %v290, 0
  %v638 = vsel %vm609, %v292, 0
  %v641 = vsel %vm609, %v294, 0
  %v644 = vsel %vm609, %v296, 0
  %v647 = vsel %vm609, %v298, 0
  %v650 = vsel %vm609, %v300, 0
  %v653 = vsel %vm609, %v302, 0
  %v656 = vsel %vm609, %v304, 0
  %v659 = vsel %vm609, %v306, 0
  %v662 = vsel %vm609, %v308, 0
  %v665 = vsel %vm609, %v310, 0
  %v668 = vsel %vm609, %v312, 0
  %v671 = vsel %vm609, %v314, 0
  %v674 = vsel %vm609, %v316, 0
  %v677 = vsel %vm609, %v318, 0
  %v680 = vsel %vm609, %v320, 0
  %vm682 = vcmask 1045504
  %v684 = vsel %vm682, %v555, 0
  %v687 = vsel %vm682, %v556, 0
  %v690 = vsel %vm682, %v557, 0
  %v693 = vsel %vm682, %v558, 0
  %v696 = vsel %vm682, %v559, 0
  %v699 = vsel %vm682, %v560, 0
  %701 = vmatprep.subr.bf16.mxu0 %v508
  %702 = vmatpush1.bf16.msra.mxu0 %v507
  %703 = vmatprep.subr.bf16.mxu0 %v514
  %704 = vmatpush1.bf16.msra.mxu0 %v513
  %705 = vmatprep.subr.bf16.mxu0 %v520
  %706 = vmatpush1.bf16.msra.mxu0 %v519
  %707 = vmatprep.subr.bf16.mxu0 %v526
  %708 = vmatpush1.bf16.msra.mxu0 %v525
  %709 = vmatprep.subr.bf16.mxu0 %v532
  %710 = vmatpush1.bf16.msra.mxu0 %v531
  %711 = vmatprep.subr.bf16.mxu0 %v538
  %712 = vmatpush1.bf16.msra.mxu0 %v537
  %713 = vmatprep.subr.bf16.mxu0 %v544
  %714 = vmatpush1.bf16.msra.mxu0 %v543
  %715 = vmatprep.subr.bf16.mxu0 %v550
  %716 = vmatpush1.bf16.msra.mxu0 %v549
  %717 = vmatprep.subr.bf16.mxu0 %v687
  %718 = vmatpush1.bf16.msra.mxu0 %v684
  %719 = vmatprep.subr.bf16.mxu0 0
  %720 = vmatpush1.bf16.msra.mxu0 0
  %721 = vmatprep.subr.bf16.mxu0 0
  %722 = vmatpush1.bf16.msra.mxu0 0
  %723 = vmatprep.subr.bf16.mxu0 0
  %724 = vmatpush1.bf16.msra.mxu0 0
  %725 = vmatprep.subr.bf16.mxu0 0
  %726 = vmatpush1.bf16.msra.mxu0 0
  %727 = vmatprep.subr.bf16.mxu0 0
  %728 = vmatpush1.bf16.msra.mxu0 0
  %729 = vmatprep.subr.bf16.mxu0 0
  %730 = vmatpush1.bf16.msra.mxu0 0
  %731 = vmatprep.subr.bf16.mxu0 0
  %732 = vmatpush1.bf16.msra.mxu0 0
  %733 = vmatprep.mubr.bf16.mxu0 %v611
  %734 = vmatmul.mubr.bf16.gmra.mrb[0].mxu0 %v273
  %v735 = vpop.f32.mrb[0].mxu0
  %v736 = vadd.f32 0.0, %v735
  %v737 = vpop.f32.mrb[0].mxu0
  %v738 = vadd.f32 0.0, %v737
  %v739 = vpop.f32.mrb[0].mxu0
  %v740 = vadd.f32 0.0, %v739
  %v741 = vpop.f32.mrb[0].mxu0
  %v742 = vadd.f32 0.0, %v741
  %743 = vmatprep.mubr.bf16.mxu0 %v614
  %744 = vmatmul.mubr.bf16.gmra.mrb[0].mxu0 %v275
  %v745 = vpop.f32.mrb[0].mxu0
  %v746 = vadd.f32 0.0, %v745
  %v747 = vpop.f32.mrb[0].mxu0
  %v748 = vadd.f32 0.0, %v747
  %v749 = vpop.f32.mrb[0].mxu0
  %v750 = vadd.f32 0.0, %v749
  %v751 = vpop.f32.mrb[0].mxu0
  %v752 = vadd.f32 0.0, %v751
  %753 = vmatprep.mubr.bf16.mxu0 %v617
  %754 = vmatmul.mubr.bf16.gmra.mrb[0].mxu0 %v277
  %v755 = vpop.f32.mrb[0].mxu0
  %v756 = vadd.f32 0.0, %v755
  %v757 = vpop.f32.mrb[0].mxu0
  %v758 = vadd.f32 0.0, %v757
  %v759 = vpop.f32.mrb[0].mxu0
  %v760 = vadd.f32 0.0, %v759
  %v761 = vpop.f32.mrb[0].mxu0
  %v762 = vadd.f32 0.0, %v761
  %763 = vmatprep.mubr.bf16.mxu0 %v620
  %764 = vmatmul.mubr.bf16.gmra.mrb[0].mxu0 %v279
  %v765 = vpop.f32.mrb[0].mxu0
  %v766 = vadd.f32 0.0, %v765
  %v767 = vpop.f32.mrb[0].mxu0
  %v768 = vadd.f32 0.0, %v767
  %v769 = vpop.f32.mrb[0].mxu0
  %v770 = vadd.f32 0.0, %v769
  %v771 = vpop.f32.mrb[0].mxu0
  %v772 = vadd.f32 0.0, %v771
  %773 = vmatprep.mubr.bf16.mxu0 %v623
  %774 = vmatmul.mubr.bf16.gmra.mrb[0].mxu0 %v281
  %v775 = vpop.f32.mrb[0].mxu0
  %v776 = vadd.f32 0.0, %v775
  %v777 = vpop.f32.mrb[0].mxu0
  %v778 = vadd.f32 0.0, %v777
  %v779 = vpop.f32.mrb[0].mxu0
  %v780 = vadd.f32 0.0, %v779
  %v781 = vpop.f32.mrb[0].mxu0
  %v782 = vadd.f32 0.0, %v781
  %783 = vmatprep.mubr.bf16.mxu0 %v626
  %784 = vmatmul.mubr.bf16.gmra.mrb[0].mxu0 %v283
  %v785 = vpop.f32.mrb[0].mxu0
  %v786 = vadd.f32 0.0, %v785
  %v787 = vpop.f32.mrb[0].mxu0
  %v788 = vadd.f32 0.0, %v787
  %v789 = vpop.f32.mrb[0].mxu0
  %v790 = vadd.f32 0.0, %v789
  %v791 = vpop.f32.mrb[0].mxu0
  %v792 = vadd.f32 0.0, %v791
  %793 = vmatprep.mubr.bf16.mxu0 %v629
  %794 = vmatmul.mubr.bf16.gmra.mrb[0].mxu0 %v285
  %v795 = vpop.f32.mrb[0].mxu0
  %v796 = vadd.f32 0.0, %v795
  %v797 = vpop.f32.mrb[0].mxu0
  %v798 = vadd.f32 0.0, %v797
  %v799 = vpop.f32.mrb[0].mxu0
  %v800 = vadd.f32 0.0, %v799
  %v801 = vpop.f32.mrb[0].mxu0
  %v802 = vadd.f32 0.0, %v801
  %803 = vmatprep.mubr.bf16.mxu0 %v632
  %804 = vmatmul.mubr.bf16.gmra.mrb[0].mxu0 %v287
  %v805 = vpop.f32.mrb[0].mxu0
  %v806 = vadd.f32 0.0, %v805
  %v807 = vpop.f32.mrb[0].mxu0
  %v808 = vadd.f32 0.0, %v807
  %v809 = vpop.f32.mrb[0].mxu0
  %v810 = vadd.f32 0.0, %v809
  %v811 = vpop.f32.mrb[0].mxu0
  %v812 = vadd.f32 0.0, %v811
  %813 = vmatprep.mubr.bf16.mxu0 %v635
  %814 = vmatmul.mubr.bf16.gmra.mrb[0].mxu0 %v289
  %v815 = vpop.f32.mrb[0].mxu0
  %v816 = vadd.f32 0.0, %v815
  %v817 = vpop.f32.mrb[0].mxu0
  %v818 = vadd.f32 0.0, %v817
  %v819 = vpop.f32.mrb[0].mxu0
  %v820 = vadd.f32 0.0, %v819
  %v821 = vpop.f32.mrb[0].mxu0
  %v822 = vadd.f32 0.0, %v821
  %823 = vmatprep.mubr.bf16.mxu0 %v638
  %824 = vmatmul.mubr.bf16.gmra.mrb[0].mxu0 %v291
  %v825 = vpop.f32.mrb[0].mxu0
  %v826 = vadd.f32 0.0, %v825
  %v827 = vpop.f32.mrb[0].mxu0
  %v828 = vadd.f32 0.0, %v827
  %v829 = vpop.f32.mrb[0].mxu0
  %v830 = vadd.f32 0.0, %v829
  %v831 = vpop.f32.mrb[0].mxu0
  %v832 = vadd.f32 0.0, %v831
  %833 = vmatprep.mubr.bf16.mxu0 %v641
  %834 = vmatmul.mubr.bf16.gmra.mrb[0].mxu0 %v293
  %v835 = vpop.f32.mrb[0].mxu0
  %v836 = vadd.f32 0.0, %v835
  %v837 = vpop.f32.mrb[0].mxu0
  %v838 = vadd.f32 0.0, %v837
  %v839 = vpop.f32.mrb[0].mxu0
  %v840 = vadd.f32 0.0, %v839
  %v841 = vpop.f32.mrb[0].mxu0
  %v842 = vadd.f32 0.0, %v841
  %843 = vmatprep.mubr.bf16.mxu0 %v644
  %844 = vmatmul.mubr.bf16.gmra.mrb[0].mxu0 %v295
  %v845 = vpop.f32.mrb[0].mxu0
  %v846 = vadd.f32 0.0, %v845
  %v847 = vpop.f32.mrb[0].mxu0
  %v848 = vadd.f32 0.0, %v847
  %v849 = vpop.f32.mrb[0].mxu0
  %v850 = vadd.f32 0.0, %v849
  %v851 = vpop.f32.mrb[0].mxu0
  %v852 = vadd.f32 0.0, %v851
  %853 = vmatprep.mubr.bf16.mxu0 %v647
  %854 = vmatmul.mubr.bf16.gmra.mrb[0].mxu0 %v297
  %v855 = vpop.f32.mrb[0].mxu0
  %v856 = vadd.f32 0.0, %v855
  %v857 = vpop.f32.mrb[0].mxu0
  %v858 = vadd.f32 0.0, %v857
  %v859 = vpop.f32.mrb[0].mxu0
  %v860 = vadd.f32 0.0, %v859
  %v861 = vpop.f32.mrb[0].mxu0
  %v862 = vadd.f32 0.0, %v861
  %863 = vmatprep.mubr.bf16.mxu0 %v650
  %864 = vmatmul.mubr.bf16.gmra.mrb[0].mxu0 %v299
  %v865 = vpop.f32.mrb[0].mxu0
  %v866 = vadd.f32 0.0, %v865
  %v867 = vpop.f32.mrb[0].mxu0
  %v868 = vadd.f32 0.0, %v867
  %v869 = vpop.f32.mrb[0].mxu0
  %v870 = vadd.f32 0.0, %v869
  %v871 = vpop.f32.mrb[0].mxu0
  %v872 = vadd.f32 0.0, %v871
  %873 = vmatprep.mubr.bf16.mxu0 %v653
  %874 = vmatmul.mubr.bf16.gmra.mrb[0].mxu0 %v301
  %v875 = vpop.f32.mrb[0].mxu0
  %v876 = vadd.f32 0.0, %v875
  %v877 = vpop.f32.mrb[0].mxu0
  %v878 = vadd.f32 0.0, %v877
  %v879 = vpop.f32.mrb[0].mxu0
  %v880 = vadd.f32 0.0, %v879
  %v881 = vpop.f32.mrb[0].mxu0
  %v882 = vadd.f32 0.0, %v881
  %883 = vmatprep.mubr.bf16.mxu0 %v656
  %884 = vmatmul.mubr.bf16.gmra.mrb[0].mxu0 %v303
  %v885 = vpop.f32.mrb[0].mxu0
  %v886 = vadd.f32 0.0, %v885
  %v887 = vpop.f32.mrb[0].mxu0
  %v888 = vadd.f32 0.0, %v887
  %v889 = vpop.f32.mrb[0].mxu0
  %v890 = vadd.f32 0.0, %v889
  %v891 = vpop.f32.mrb[0].mxu0
  %v892 = vadd.f32 0.0, %v891
  %893 = vmatprep.mubr.bf16.mxu0 %v659
  %894 = vmatmul.mubr.bf16.gmra.mrb[0].mxu0 %v305
  %v895 = vpop.f32.mrb[0].mxu0
  %v896 = vadd.f32 0.0, %v895
  %v897 = vpop.f32.mrb[0].mxu0
  %v898 = vadd.f32 0.0, %v897
  %v899 = vpop.f32.mrb[0].mxu0
  %v900 = vadd.f32 0.0, %v899
  %v901 = vpop.f32.mrb[0].mxu0
  %v902 = vadd.f32 0.0, %v901
  %903 = vmatprep.mubr.bf16.mxu0 %v662
  %904 = vmatmul.mubr.bf16.gmra.mrb[0].mxu0 %v307
  %v905 = vpop.f32.mrb[0].mxu0
  %v906 = vadd.f32 0.0, %v905
  %v907 = vpop.f32.mrb[0].mxu0
  %v908 = vadd.f32 0.0, %v907
  %v909 = vpop.f32.mrb[0].mxu0
  %v910 = vadd.f32 0.0, %v909
  %v911 = vpop.f32.mrb[0].mxu0
  %v912 = vadd.f32 0.0, %v911
  %913 = vmatprep.mubr.bf16.mxu0 %v665
  %914 = vmatmul.mubr.bf16.gmra.mrb[0].mxu0 %v309
  %v915 = vpop.f32.mrb[0].mxu0
  %v916 = vadd.f32 0.0, %v915
  %v917 = vpop.f32.mrb[0].mxu0
  %v918 = vadd.f32 0.0, %v917
  %v919 = vpop.f32.mrb[0].mxu0
  %v920 = vadd.f32 0.0, %v919
  %v921 = vpop.f32.mrb[0].mxu0
  %v922 = vadd.f32 0.0, %v921
  %923 = vmatprep.mubr.bf16.mxu0 %v668
  %924 = vmatmul.mubr.bf16.gmra.mrb[0].mxu0 %v311
  %v925 = vpop.f32.mrb[0].mxu0
  %v926 = vadd.f32 0.0, %v925
  %v927 = vpop.f32.mrb[0].mxu0
  %v928 = vadd.f32 0.0, %v927
  %v929 = vpop.f32.mrb[0].mxu0
  %v930 = vadd.f32 0.0, %v929
  %v931 = vpop.f32.mrb[0].mxu0
  %v932 = vadd.f32 0.0, %v931
  %933 = vmatprep.mubr.bf16.mxu0 %v671
  %934 = vmatmul.mubr.bf16.gmra.mrb[0].mxu0 %v313
  %v935 = vpop.f32.mrb[0].mxu0
  %v936 = vadd.f32 0.0, %v935
  %v937 = vpop.f32.mrb[0].mxu0
  %v938 = vadd.f32 0.0, %v937
  %v939 = vpop.f32.mrb[0].mxu0
  %v940 = vadd.f32 0.0, %v939
  %v941 = vpop.f32.mrb[0].mxu0
  %v942 = vadd.f32 0.0, %v941
  %943 = vmatprep.mubr.bf16.mxu0 %v674
  %944 = vmatmul.mubr.bf16.gmra.mrb[0].mxu0 %v315
  %v945 = vpop.f32.mrb[0].mxu0
  %v946 = vadd.f32 0.0, %v945
  %v947 = vpop.f32.mrb[0].mxu0
  %v948 = vadd.f32 0.0, %v947
  %v949 = vpop.f32.mrb[0].mxu0
  %v950 = vadd.f32 0.0, %v949
  %v951 = vpop.f32.mrb[0].mxu0
  %v952 = vadd.f32 0.0, %v951
  %953 = vmatprep.mubr.bf16.mxu0 %v677
  %954 = vmatmul.mubr.bf16.gmra.mrb[0].mxu0 %v317
  %v955 = vpop.f32.mrb[0].mxu0
  %v956 = vadd.f32 0.0, %v955
  %v957 = vpop.f32.mrb[0].mxu0
  %v958 = vadd.f32 0.0, %v957
  %v959 = vpop.f32.mrb[0].mxu0
  %v960 = vadd.f32 0.0, %v959
  %v961 = vpop.f32.mrb[0].mxu0
  %v962 = vadd.f32 0.0, %v961
  %963 = vmatprep.mubr.bf16.mxu0 %v680
  %964 = vmatmul.mubr.bf16.gmra.mrb[0].mxu0 %v319
  %v965 = vpop.f32.mrb[0].mxu0
  %v966 = vadd.f32 0.0, %v965
  %v967 = vpop.f32.mrb[0].mxu0
  %v968 = vadd.f32 0.0, %v967
  %v969 = vpop.f32.mrb[0].mxu0
  %v970 = vadd.f32 0.0, %v969
  %v971 = vpop.f32.mrb[0].mxu0
  %v972 = vadd.f32 0.0, %v971
  %973 = vdwg.mxu0
  %974 = vmatprep.subr.bf16.mxu0 %v510
  %975 = vmatpush1.bf16.msra.mxu0 %v509
  %976 = vmatprep.subr.bf16.mxu0 %v516
  %977 = vmatpush1.bf16.msra.mxu0 %v515
  %978 = vmatprep.subr.bf16.mxu0 %v522
  %979 = vmatpush1.bf16.msra.mxu0 %v521
  %980 = vmatprep.subr.bf16.mxu0 %v528
  %981 = vmatpush1.bf16.msra.mxu0 %v527
  %982 = vmatprep.subr.bf16.mxu0 %v534
  %983 = vmatpush1.bf16.msra.mxu0 %v533
  %984 = vmatprep.subr.bf16.mxu0 %v540
  %985 = vmatpush1.bf16.msra.mxu0 %v539
  %986 = vmatprep.subr.bf16.mxu0 %v546
  %987 = vmatpush1.bf16.msra.mxu0 %v545
  %988 = vmatprep.subr.bf16.mxu0 %v552
  %989 = vmatpush1.bf16.msra.mxu0 %v551
  %990 = vmatprep.subr.bf16.mxu0 %v693
  %991 = vmatpush1.bf16.msra.mxu0 %v690
  %992 = vmatprep.subr.bf16.mxu0 0
  %993 = vmatpush1.bf16.msra.mxu0 0
  %994 = vmatprep.subr.bf16.mxu0 0
  %995 = vmatpush1.bf16.msra.mxu0 0
  %996 = vmatprep.subr.bf16.mxu0 0
  %997 = vmatpush1.bf16.msra.mxu0 0
  %998 = vmatprep.subr.bf16.mxu0 0
  %999 = vmatpush1.bf16.msra.mxu0 0
  %1000 = vmatprep.subr.bf16.mxu0 0
  %1001 = vmatpush1.bf16.msra.mxu0 0
  %1002 = vmatprep.subr.bf16.mxu0 0
  %1003 = vmatpush1.bf16.msra.mxu0 0
  %1004 = vmatprep.subr.bf16.mxu0 0
  %1005 = vmatpush1.bf16.msra.mxu0 0
  %1006 = vmatprep.mubr.bf16.mxu0 %v611
  %1007 = vmatmul.mubr.bf16.gmra.mrb[0].mxu0 %v273
  %v1008 = vpop.f32.mrb[0].mxu0
  %v1009 = vadd.f32 0.0, %v1008
  %v1010 = vpop.f32.mrb[0].mxu0
  %v1011 = vadd.f32 0.0, %v1010
  %v1012 = vpop.f32.mrb[0].mxu0
  %v1013 = vadd.f32 0.0, %v1012
  %v1014 = vpop.f32.mrb[0].mxu0
  %v1015 = vadd.f32 0.0, %v1014
  %1016 = vmatprep.mubr.bf16.mxu0 %v614
  %1017 = vmatmul.mubr.bf16.gmra.mrb[0].mxu0 %v275
  %v1018 = vpop.f32.mrb[0].mxu0
  %v1019 = vadd.f32 0.0, %v1018
  %v1020 = vpop.f32.mrb[0].mxu0
  %v1021 = vadd.f32 0.0, %v1020
  %v1022 = vpop.f32.mrb[0].mxu0
  %v1023 = vadd.f32 0.0, %v1022
  %v1024 = vpop.f32.mrb[0].mxu0
  %v1025 = vadd.f32 0.0, %v1024
  %1026 = vmatprep.mubr.bf16.mxu0 %v617
  %1027 = vmatmul.mubr.bf16.gmra.mrb[0].mxu0 %v277
  %v1028 = vpop.f32.mrb[0].mxu0
  %v1029 = vadd.f32 0.0, %v1028
  %v1030 = vpop.f32.mrb[0].mxu0
  %v1031 = vadd.f32 0.0, %v1030
  %v1032 = vpop.f32.mrb[0].mxu0
  %v1033 = vadd.f32 0.0, %v1032
  %v1034 = vpop.f32.mrb[0].mxu0
  %v1035 = vadd.f32 0.0, %v1034
  %1036 = vmatprep.mubr.bf16.mxu0 %v620
  %1037 = vmatmul.mubr.bf16.gmra.mrb[0].mxu0 %v279
  %v1038 = vpop.f32.mrb[0].mxu0
  %v1039 = vadd.f32 0.0, %v1038
  %v1040 = vpop.f32.mrb[0].mxu0
  %v1041 = vadd.f32 0.0, %v1040
  %v1042 = vpop.f32.mrb[0].mxu0
  %v1043 = vadd.f32 0.0, %v1042
  %v1044 = vpop.f32.mrb[0].mxu0
  %v1045 = vadd.f32 0.0, %v1044
  %1046 = vmatprep.mubr.bf16.mxu0 %v623
  %1047 = vmatmul.mubr.bf16.gmra.mrb[0].mxu0 %v281
  %v1048 = vpop.f32.mrb[0].mxu0
  %v1049 = vadd.f32 0.0, %v1048
  %v1050 = vpop.f32.mrb[0].mxu0
  %v1051 = vadd.f32 0.0, %v1050
  %v1052 = vpop.f32.mrb[0].mxu0
  %v1053 = vadd.f32 0.0, %v1052
  %v1054 = vpop.f32.mrb[0].mxu0
  %v1055 = vadd.f32 0.0, %v1054
  %1056 = vmatprep.mubr.bf16.mxu0 %v626
  %1057 = vmatmul.mubr.bf16.gmra.mrb[0].mxu0 %v283
  %v1058 = vpop.f32.mrb[0].mxu0
  %v1059 = vadd.f32 0.0, %v1058
  %v1060 = vpop.f32.mrb[0].mxu0
  %v1061 = vadd.f32 0.0, %v1060
  %v1062 = vpop.f32.mrb[0].mxu0
  %v1063 = vadd.f32 0.0, %v1062
  %v1064 = vpop.f32.mrb[0].mxu0
  %v1065 = vadd.f32 0.0, %v1064
  %1066 = vmatprep.mubr.bf16.mxu0 %v629
  %1067 = vmatmul.mubr.bf16.gmra.mrb[0].mxu0 %v285
  %v1068 = vpop.f32.mrb[0].mxu0
  %v1069 = vadd.f32 0.0, %v1068
  %v1070 = vpop.f32.mrb[0].mxu0
  %v1071 = vadd.f32 0.0, %v1070
  %v1072 = vpop.f32.mrb[0].mxu0
  %v1073 = vadd.f32 0.0, %v1072
  %v1074 = vpop.f32.mrb[0].mxu0
  %v1075 = vadd.f32 0.0, %v1074
  %1076 = vmatprep.mubr.bf16.mxu0 %v632
  %1077 = vmatmul.mubr.bf16.gmra.mrb[0].mxu0 %v287
  %v1078 = vpop.f32.mrb[0].mxu0
  %v1079 = vadd.f32 0.0, %v1078
  %v1080 = vpop.f32.mrb[0].mxu0
  %v1081 = vadd.f32 0.0, %v1080
  %v1082 = vpop.f32.mrb[0].mxu0
  %v1083 = vadd.f32 0.0, %v1082
  %v1084 = vpop.f32.mrb[0].mxu0
  %v1085 = vadd.f32 0.0, %v1084
  %1086 = vmatprep.mubr.bf16.mxu0 %v635
  %1087 = vmatmul.mubr.bf16.gmra.mrb[0].mxu0 %v289
  %v1088 = vpop.f32.mrb[0].mxu0
  %v1089 = vadd.f32 0.0, %v1088
  %v1090 = vpop.f32.mrb[0].mxu0
  %v1091 = vadd.f32 0.0, %v1090
  %v1092 = vpop.f32.mrb[0].mxu0
  %v1093 = vadd.f32 0.0, %v1092
  %v1094 = vpop.f32.mrb[0].mxu0
  %v1095 = vadd.f32 0.0, %v1094
  %1096 = vmatprep.mubr.bf16.mxu0 %v638
  %1097 = vmatmul.mubr.bf16.gmra.mrb[0].mxu0 %v291
  %v1098 = vpop.f32.mrb[0].mxu0
  %v1099 = vadd.f32 0.0, %v1098
  %v1100 = vpop.f32.mrb[0].mxu0
  %v1101 = vadd.f32 0.0, %v1100
  %v1102 = vpop.f32.mrb[0].mxu0
  %v1103 = vadd.f32 0.0, %v1102
  %v1104 = vpop.f32.mrb[0].mxu0
  %v1105 = vadd.f32 0.0, %v1104
  %1106 = vmatprep.mubr.bf16.mxu0 %v641
  %1107 = vmatmul.mubr.bf16.gmra.mrb[0].mxu0 %v293
  %v1108 = vpop.f32.mrb[0].mxu0
  %v1109 = vadd.f32 0.0, %v1108
  %v1110 = vpop.f32.mrb[0].mxu0
  %v1111 = vadd.f32 0.0, %v1110
  %v1112 = vpop.f32.mrb[0].mxu0
  %v1113 = vadd.f32 0.0, %v1112
  %v1114 = vpop.f32.mrb[0].mxu0
  %v1115 = vadd.f32 0.0, %v1114
  %1116 = vmatprep.mubr.bf16.mxu0 %v644
  %1117 = vmatmul.mubr.bf16.gmra.mrb[0].mxu0 %v295
  %v1118 = vpop.f32.mrb[0].mxu0
  %v1119 = vadd.f32 0.0, %v1118
  %v1120 = vpop.f32.mrb[0].mxu0
  %v1121 = vadd.f32 0.0, %v1120
  %v1122 = vpop.f32.mrb[0].mxu0
  %v1123 = vadd.f32 0.0, %v1122
  %v1124 = vpop.f32.mrb[0].mxu0
  %v1125 = vadd.f32 0.0, %v1124
  %1126 = vmatprep.mubr.bf16.mxu0 %v647
  %1127 = vmatmul.mubr.bf16.gmra.mrb[0].mxu0 %v297
  %v1128 = vpop.f32.mrb[0].mxu0
  %v1129 = vadd.f32 0.0, %v1128
  %v1130 = vpop.f32.mrb[0].mxu0
  %v1131 = vadd.f32 0.0, %v1130
  %v1132 = vpop.f32.mrb[0].mxu0
  %v1133 = vadd.f32 0.0, %v1132
  %v1134 = vpop.f32.mrb[0].mxu0
  %v1135 = vadd.f32 0.0, %v1134
  %1136 = vmatprep.mubr.bf16.mxu0 %v650
  %1137 = vmatmul.mubr.bf16.gmra.mrb[0].mxu0 %v299
  %v1138 = vpop.f32.mrb[0].mxu0
  %v1139 = vadd.f32 0.0, %v1138
  %v1140 = vpop.f32.mrb[0].mxu0
  %v1141 = vadd.f32 0.0, %v1140
  %v1142 = vpop.f32.mrb[0].mxu0
  %v1143 = vadd.f32 0.0, %v1142
  %v1144 = vpop.f32.mrb[0].mxu0
  %v1145 = vadd.f32 0.0, %v1144
  %1146 = vmatprep.mubr.bf16.mxu0 %v653
  %1147 = vmatmul.mubr.bf16.gmra.mrb[0].mxu0 %v301
  %v1148 = vpop.f32.mrb[0].mxu0
  %v1149 = vadd.f32 0.0, %v1148
  %v1150 = vpop.f32.mrb[0].mxu0
  %v1151 = vadd.f32 0.0, %v1150
  %v1152 = vpop.f32.mrb[0].mxu0
  %v1153 = vadd.f32 0.0, %v1152
  %v1154 = vpop.f32.mrb[0].mxu0
  %v1155 = vadd.f32 0.0, %v1154
  %1156 = vmatprep.mubr.bf16.mxu0 %v656
  %1157 = vmatmul.mubr.bf16.gmra.mrb[0].mxu0 %v303
  %v1158 = vpop.f32.mrb[0].mxu0
  %v1159 = vadd.f32 0.0, %v1158
  %v1160 = vpop.f32.mrb[0].mxu0
  %v1161 = vadd.f32 0.0, %v1160
  %v1162 = vpop.f32.mrb[0].mxu0
  %v1163 = vadd.f32 0.0, %v1162
  %v1164 = vpop.f32.mrb[0].mxu0
  %v1165 = vadd.f32 0.0, %v1164
  %1166 = vmatprep.mubr.bf16.mxu0 %v659
  %1167 = vmatmul.mubr.bf16.gmra.mrb[0].mxu0 %v305
  %v1168 = vpop.f32.mrb[0].mxu0
  %v1169 = vadd.f32 0.0, %v1168
  %v1170 = vpop.f32.mrb[0].mxu0
  %v1171 = vadd.f32 0.0, %v1170
  %v1172 = vpop.f32.mrb[0].mxu0
  %v1173 = vadd.f32 0.0, %v1172
  %v1174 = vpop.f32.mrb[0].mxu0
  %v1175 = vadd.f32 0.0, %v1174
  %1176 = vmatprep.mubr.bf16.mxu0 %v662
  %1177 = vmatmul.mubr.bf16.gmra.mrb[0].mxu0 %v307
  %v1178 = vpop.f32.mrb[0].mxu0
  %v1179 = vadd.f32 0.0, %v1178
  %v1180 = vpop.f32.mrb[0].mxu0
  %v1181 = vadd.f32 0.0, %v1180
  %v1182 = vpop.f32.mrb[0].mxu0
  %v1183 = vadd.f32 0.0, %v1182
  %v1184 = vpop.f32.mrb[0].mxu0
  %v1185 = vadd.f32 0.0, %v1184
  %1186 = vmatprep.mubr.bf16.mxu0 %v665
  %1187 = vmatmul.mubr.bf16.gmra.mrb[0].mxu0 %v309
  %v1188 = vpop.f32.mrb[0].mxu0
  %v1189 = vadd.f32 0.0, %v1188
  %v1190 = vpop.f32.mrb[0].mxu0
  %v1191 = vadd.f32 0.0, %v1190
  %v1192 = vpop.f32.mrb[0].mxu0
  %v1193 = vadd.f32 0.0, %v1192
  %v1194 = vpop.f32.mrb[0].mxu0
  %v1195 = vadd.f32 0.0, %v1194
  %1196 = vmatprep.mubr.bf16.mxu0 %v668
  %1197 = vmatmul.mubr.bf16.gmra.mrb[0].mxu0 %v311
  %v1198 = vpop.f32.mrb[0].mxu0
  %v1199 = vadd.f32 0.0, %v1198
  %v1200 = vpop.f32.mrb[0].mxu0
  %v1201 = vadd.f32 0.0, %v1200
  %v1202 = vpop.f32.mrb[0].mxu0
  %v1203 = vadd.f32 0.0, %v1202
  %v1204 = vpop.f32.mrb[0].mxu0
  %v1205 = vadd.f32 0.0, %v1204
  %1206 = vmatprep.mubr.bf16.mxu0 %v671
  %1207 = vmatmul.mubr.bf16.gmra.mrb[0].mxu0 %v313
  %v1208 = vpop.f32.mrb[0].mxu0
  %v1209 = vadd.f32 0.0, %v1208
  %v1210 = vpop.f32.mrb[0].mxu0
  %v1211 = vadd.f32 0.0, %v1210
  %v1212 = vpop.f32.mrb[0].mxu0
  %v1213 = vadd.f32 0.0, %v1212
  %v1214 = vpop.f32.mrb[0].mxu0
  %v1215 = vadd.f32 0.0, %v1214
  %1216 = vmatprep.mubr.bf16.mxu0 %v674
  %1217 = vmatmul.mubr.bf16.gmra.mrb[0].mxu0 %v315
  %v1218 = vpop.f32.mrb[0].mxu0
  %v1219 = vadd.f32 0.0, %v1218
  %v1220 = vpop.f32.mrb[0].mxu0
  %v1221 = vadd.f32 0.0, %v1220
  %v1222 = vpop.f32.mrb[0].mxu0
  %v1223 = vadd.f32 0.0, %v1222
  %v1224 = vpop.f32.mrb[0].mxu0
  %v1225 = vadd.f32 0.0, %v1224
  %1226 = vmatprep.mubr.bf16.mxu0 %v677
  %1227 = vmatmul.mubr.bf16.gmra.mrb[0].mxu0 %v317
  %v1228 = vpop.f32.mrb[0].mxu0
  %v1229 = vadd.f32 0.0, %v1228
  %v1230 = vpop.f32.mrb[0].mxu0
  %v1231 = vadd.f32 0.0, %v1230
  %v1232 = vpop.f32.mrb[0].mxu0
  %v1233 = vadd.f32 0.0, %v1232
  %v1234 = vpop.f32.mrb[0].mxu0
  %v1235 = vadd.f32 0.0, %v1234
  %1236 = vmatprep.mubr.bf16.mxu0 %v680
  %1237 = vmatmul.mubr.bf16.gmra.mrb[0].mxu0 %v319
  %v1238 = vpop.f32.mrb[0].mxu0
  %v1239 = vadd.f32 0.0, %v1238
  %v1240 = vpop.f32.mrb[0].mxu0
  %v1241 = vadd.f32 0.0, %v1240
  %v1242 = vpop.f32.mrb[0].mxu0
  %v1243 = vadd.f32 0.0, %v1242
  %v1244 = vpop.f32.mrb[0].mxu0
  %v1245 = vadd.f32 0.0, %v1244
  %1246 = vdwg.mxu0
  %1247 = vmatprep.subr.bf16.mxu0 %v512
  %1248 = vmatpush1.bf16.msra.mxu0 %v511
  %1249 = vmatprep.subr.bf16.mxu0 %v518
  %1250 = vmatpush1.bf16.msra.mxu0 %v517
  %1251 = vmatprep.subr.bf16.mxu0 %v524
  %1252 = vmatpush1.bf16.msra.mxu0 %v523
  %1253 = vmatprep.subr.bf16.mxu0 %v530
  %1254 = vmatpush1.bf16.msra.mxu0 %v529
  %1255 = vmatprep.subr.bf16.mxu0 %v536
  %1256 = vmatpush1.bf16.msra.mxu0 %v535
  %1257 = vmatprep.subr.bf16.mxu0 %v542
  %1258 = vmatpush1.bf16.msra.mxu0 %v541
  %1259 = vmatprep.subr.bf16.mxu0 %v548
  %1260 = vmatpush1.bf16.msra.mxu0 %v547
  %1261 = vmatprep.subr.bf16.mxu0 %v554
  %1262 = vmatpush1.bf16.msra.mxu0 %v553
  %1263 = vmatprep.subr.bf16.mxu0 %v699
  %1264 = vmatpush1.bf16.msra.mxu0 %v696
  %1265 = vmatprep.subr.bf16.mxu0 0
  %1266 = vmatpush1.bf16.msra.mxu0 0
  %1267 = vmatprep.subr.bf16.mxu0 0
  %1268 = vmatpush1.bf16.msra.mxu0 0
  %1269 = vmatprep.subr.bf16.mxu0 0
  %1270 = vmatpush1.bf16.msra.mxu0 0
  %1271 = vmatprep.subr.bf16.mxu0 0
  %1272 = vmatpush1.bf16.msra.mxu0 0
  %1273 = vmatprep.subr.bf16.mxu0 0
  %1274 = vmatpush1.bf16.msra.mxu0 0
  %1275 = vmatprep.subr.bf16.mxu0 0
  %1276 = vmatpush1.bf16.msra.mxu0 0
  %1277 = vmatprep.subr.bf16.mxu0 0
  %1278 = vmatpush1.bf16.msra.mxu0 0
  %1279 = vmatprep.mubr.bf16.mxu0 %v611
  %1280 = vmatmul.mubr.bf16.gmra.mrb[0].mxu0 %v273
  %v1281 = vpop.f32.mrb[0].mxu0
  %v1282 = vadd.f32 0.0, %v1281
  %v1283 = vpop.f32.mrb[0].mxu0
  %v1284 = vadd.f32 0.0, %v1283
  %v1285 = vpop.f32.mrb[0].mxu0
  %v1286 = vadd.f32 0.0, %v1285
  %v1287 = vpop.f32.mrb[0].mxu0
  %v1288 = vadd.f32 0.0, %v1287
  %1289 = vmatprep.mubr.bf16.mxu0 %v614
  %1290 = vmatmul.mubr.bf16.gmra.mrb[0].mxu0 %v275
  %v1291 = vpop.f32.mrb[0].mxu0
  %v1292 = vadd.f32 0.0, %v1291
  %v1293 = vpop.f32.mrb[0].mxu0
  %v1294 = vadd.f32 0.0, %v1293
  %v1295 = vpop.f32.mrb[0].mxu0
  %v1296 = vadd.f32 0.0, %v1295
  %v1297 = vpop.f32.mrb[0].mxu0
  %v1298 = vadd.f32 0.0, %v1297
  %1299 = vmatprep.mubr.bf16.mxu0 %v617
  %1300 = vmatmul.mubr.bf16.gmra.mrb[0].mxu0 %v277
  %v1301 = vpop.f32.mrb[0].mxu0
  %v1302 = vadd.f32 0.0, %v1301
  %v1303 = vpop.f32.mrb[0].mxu0
  %v1304 = vadd.f32 0.0, %v1303
  %v1305 = vpop.f32.mrb[0].mxu0
  %v1306 = vadd.f32 0.0, %v1305
  %v1307 = vpop.f32.mrb[0].mxu0
  %v1308 = vadd.f32 0.0, %v1307
  %1309 = vmatprep.mubr.bf16.mxu0 %v620
  %1310 = vmatmul.mubr.bf16.gmra.mrb[0].mxu0 %v279
  %v1311 = vpop.f32.mrb[0].mxu0
  %v1312 = vadd.f32 0.0, %v1311
  %v1313 = vpop.f32.mrb[0].mxu0
  %v1314 = vadd.f32 0.0, %v1313
  %v1315 = vpop.f32.mrb[0].mxu0
  %v1316 = vadd.f32 0.0, %v1315
  %v1317 = vpop.f32.mrb[0].mxu0
  %v1318 = vadd.f32 0.0, %v1317
  %1319 = vmatprep.mubr.bf16.mxu0 %v623
  %1320 = vmatmul.mubr.bf16.gmra.mrb[0].mxu0 %v281
  %v1321 = vpop.f32.mrb[0].mxu0
  %v1322 = vadd.f32 0.0, %v1321
  %v1323 = vpop.f32.mrb[0].mxu0
  %v1324 = vadd.f32 0.0, %v1323
  %v1325 = vpop.f32.mrb[0].mxu0
  %v1326 = vadd.f32 0.0, %v1325
  %v1327 = vpop.f32.mrb[0].mxu0
  %v1328 = vadd.f32 0.0, %v1327
  %1329 = vmatprep.mubr.bf16.mxu0 %v626
  %1330 = vmatmul.mubr.bf16.gmra.mrb[0].mxu0 %v283
  %v1331 = vpop.f32.mrb[0].mxu0
  %v1332 = vadd.f32 0.0, %v1331
  %v1333 = vpop.f32.mrb[0].mxu0
  %v1334 = vadd.f32 0.0, %v1333
  %v1335 = vpop.f32.mrb[0].mxu0
  %v1336 = vadd.f32 0.0, %v1335
  %v1337 = vpop.f32.mrb[0].mxu0
  %v1338 = vadd.f32 0.0, %v1337
  %1339 = vmatprep.mubr.bf16.mxu0 %v629
  %1340 = vmatmul.mubr.bf16.gmra.mrb[0].mxu0 %v285
  %v1341 = vpop.f32.mrb[0].mxu0
  %v1342 = vadd.f32 0.0, %v1341
  %v1343 = vpop.f32.mrb[0].mxu0
  %v1344 = vadd.f32 0.0, %v1343
  %v1345 = vpop.f32.mrb[0].mxu0
  %v1346 = vadd.f32 0.0, %v1345
  %v1347 = vpop.f32.mrb[0].mxu0
  %v1348 = vadd.f32 0.0, %v1347
  %1349 = vmatprep.mubr.bf16.mxu0 %v632
  %1350 = vmatmul.mubr.bf16.gmra.mrb[0].mxu0 %v287
  %v1351 = vpop.f32.mrb[0].mxu0
  %v1352 = vadd.f32 0.0, %v1351
  %v1353 = vpop.f32.mrb[0].mxu0
  %v1354 = vadd.f32 0.0, %v1353
  %v1355 = vpop.f32.mrb[0].mxu0
  %v1356 = vadd.f32 0.0, %v1355
  %v1357 = vpop.f32.mrb[0].mxu0
  %v1358 = vadd.f32 0.0, %v1357
  %1359 = vmatprep.mubr.bf16.mxu0 %v635
  %1360 = vmatmul.mubr.bf16.gmra.mrb[0].mxu0 %v289
  %v1361 = vpop.f32.mrb[0].mxu0
  %v1362 = vadd.f32 0.0, %v1361
  %v1363 = vpop.f32.mrb[0].mxu0
  %v1364 = vadd.f32 0.0, %v1363
  %v1365 = vpop.f32.mrb[0].mxu0
  %v1366 = vadd.f32 0.0, %v1365
  %v1367 = vpop.f32.mrb[0].mxu0
  %v1368 = vadd.f32 0.0, %v1367
  %1369 = vmatprep.mubr.bf16.mxu0 %v638
  %1370 = vmatmul.mubr.bf16.gmra.mrb[0].mxu0 %v291
  %v1371 = vpop.f32.mrb[0].mxu0
  %v1372 = vadd.f32 0.0, %v1371
  %v1373 = vpop.f32.mrb[0].mxu0
  %v1374 = vadd.f32 0.0, %v1373
  %v1375 = vpop.f32.mrb[0].mxu0
  %v1376 = vadd.f32 0.0, %v1375
  %v1377 = vpop.f32.mrb[0].mxu0
  %v1378 = vadd.f32 0.0, %v1377
  %1379 = vmatprep.mubr.bf16.mxu0 %v641
  %1380 = vmatmul.mubr.bf16.gmra.mrb[0].mxu0 %v293
  %v1381 = vpop.f32.mrb[0].mxu0
  %v1382 = vadd.f32 0.0, %v1381
  %v1383 = vpop.f32.mrb[0].mxu0
  %v1384 = vadd.f32 0.0, %v1383
  %v1385 = vpop.f32.mrb[0].mxu0
  %v1386 = vadd.f32 0.0, %v1385
  %v1387 = vpop.f32.mrb[0].mxu0
  %v1388 = vadd.f32 0.0, %v1387
  %1389 = vmatprep.mubr.bf16.mxu0 %v644
  %1390 = vmatmul.mubr.bf16.gmra.mrb[0].mxu0 %v295
  %v1391 = vpop.f32.mrb[0].mxu0
  %v1392 = vadd.f32 0.0, %v1391
  %v1393 = vpop.f32.mrb[0].mxu0
  %v1394 = vadd.f32 0.0, %v1393
  %v1395 = vpop.f32.mrb[0].mxu0
  %v1396 = vadd.f32 0.0, %v1395
  %v1397 = vpop.f32.mrb[0].mxu0
  %v1398 = vadd.f32 0.0, %v1397
  %1399 = vmatprep.mubr.bf16.mxu0 %v647
  %1400 = vmatmul.mubr.bf16.gmra.mrb[0].mxu0 %v297
  %v1401 = vpop.f32.mrb[0].mxu0
  %v1402 = vadd.f32 0.0, %v1401
  %v1403 = vpop.f32.mrb[0].mxu0
  %v1404 = vadd.f32 0.0, %v1403
  %v1405 = vpop.f32.mrb[0].mxu0
  %v1406 = vadd.f32 0.0, %v1405
  %v1407 = vpop.f32.mrb[0].mxu0
  %v1408 = vadd.f32 0.0, %v1407
  %1409 = vmatprep.mubr.bf16.mxu0 %v650
  %1410 = vmatmul.mubr.bf16.gmra.mrb[0].mxu0 %v299
  %v1411 = vpop.f32.mrb[0].mxu0
  %v1412 = vadd.f32 0.0, %v1411
  %v1413 = vpop.f32.mrb[0].mxu0
  %v1414 = vadd.f32 0.0, %v1413
  %v1415 = vpop.f32.mrb[0].mxu0
  %v1416 = vadd.f32 0.0, %v1415
  %v1417 = vpop.f32.mrb[0].mxu0
  %v1418 = vadd.f32 0.0, %v1417
  %1419 = vmatprep.mubr.bf16.mxu0 %v653
  %1420 = vmatmul.mubr.bf16.gmra.mrb[0].mxu0 %v301
  %v1421 = vpop.f32.mrb[0].mxu0
  %v1422 = vadd.f32 0.0, %v1421
  %v1423 = vpop.f32.mrb[0].mxu0
  %v1424 = vadd.f32 0.0, %v1423
  %v1425 = vpop.f32.mrb[0].mxu0
  %v1426 = vadd.f32 0.0, %v1425
  %v1427 = vpop.f32.mrb[0].mxu0
  %v1428 = vadd.f32 0.0, %v1427
  %1429 = vmatprep.mubr.bf16.mxu0 %v656
  %1430 = vmatmul.mubr.bf16.gmra.mrb[0].mxu0 %v303
  %v1431 = vpop.f32.mrb[0].mxu0
  %v1432 = vadd.f32 0.0, %v1431
  %v1433 = vpop.f32.mrb[0].mxu0
  %v1434 = vadd.f32 0.0, %v1433
  %v1435 = vpop.f32.mrb[0].mxu0
  %v1436 = vadd.f32 0.0, %v1435
  %v1437 = vpop.f32.mrb[0].mxu0
  %v1438 = vadd.f32 0.0, %v1437
  %1439 = vmatprep.mubr.bf16.mxu0 %v659
  %1440 = vmatmul.mubr.bf16.gmra.mrb[0].mxu0 %v305
  %v1441 = vpop.f32.mrb[0].mxu0
  %v1442 = vadd.f32 0.0, %v1441
  %v1443 = vpop.f32.mrb[0].mxu0
  %v1444 = vadd.f32 0.0, %v1443
  %v1445 = vpop.f32.mrb[0].mxu0
  %v1446 = vadd.f32 0.0, %v1445
  %v1447 = vpop.f32.mrb[0].mxu0
  %v1448 = vadd.f32 0.0, %v1447
  %1449 = vmatprep.mubr.bf16.mxu0 %v662
  %1450 = vmatmul.mubr.bf16.gmra.mrb[0].mxu0 %v307
  %v1451 = vpop.f32.mrb[0].mxu0
  %v1452 = vadd.f32 0.0, %v1451
  %v1453 = vpop.f32.mrb[0].mxu0
  %v1454 = vadd.f32 0.0, %v1453
  %v1455 = vpop.f32.mrb[0].mxu0
  %v1456 = vadd.f32 0.0, %v1455
  %v1457 = vpop.f32.mrb[0].mxu0
  %v1458 = vadd.f32 0.0, %v1457
  %1459 = vmatprep.mubr.bf16.mxu0 %v665
  %1460 = vmatmul.mubr.bf16.gmra.mrb[0].mxu0 %v309
  %v1461 = vpop.f32.mrb[0].mxu0
  %v1462 = vadd.f32 0.0, %v1461
  %v1463 = vpop.f32.mrb[0].mxu0
  %v1464 = vadd.f32 0.0, %v1463
  %v1465 = vpop.f32.mrb[0].mxu0
  %v1466 = vadd.f32 0.0, %v1465
  %v1467 = vpop.f32.mrb[0].mxu0
  %v1468 = vadd.f32 0.0, %v1467
  %1469 = vmatprep.mubr.bf16.mxu0 %v668
  %1470 = vmatmul.mubr.bf16.gmra.mrb[0].mxu0 %v311
  %v1471 = vpop.f32.mrb[0].mxu0
  %v1472 = vadd.f32 0.0, %v1471
  %v1473 = vpop.f32.mrb[0].mxu0
  %v1474 = vadd.f32 0.0, %v1473
  %v1475 = vpop.f32.mrb[0].mxu0
  %v1476 = vadd.f32 0.0, %v1475
  %v1477 = vpop.f32.mrb[0].mxu0
  %v1478 = vadd.f32 0.0, %v1477
  %1479 = vmatprep.mubr.bf16.mxu0 %v671
  %1480 = vmatmul.mubr.bf16.gmra.mrb[0].mxu0 %v313
  %v1481 = vpop.f32.mrb[0].mxu0
  %v1482 = vadd.f32 0.0, %v1481
  %v1483 = vpop.f32.mrb[0].mxu0
  %v1484 = vadd.f32 0.0, %v1483
  %v1485 = vpop.f32.mrb[0].mxu0
  %v1486 = vadd.f32 0.0, %v1485
  %v1487 = vpop.f32.mrb[0].mxu0
  %v1488 = vadd.f32 0.0, %v1487
  %1489 = vmatprep.mubr.bf16.mxu0 %v674
  %1490 = vmatmul.mubr.bf16.gmra.mrb[0].mxu0 %v315
  %v1491 = vpop.f32.mrb[0].mxu0
  %v1492 = vadd.f32 0.0, %v1491
  %v1493 = vpop.f32.mrb[0].mxu0
  %v1494 = vadd.f32 0.0, %v1493
  %v1495 = vpop.f32.mrb[0].mxu0
  %v1496 = vadd.f32 0.0, %v1495
  %v1497 = vpop.f32.mrb[0].mxu0
  %v1498 = vadd.f32 0.0, %v1497
  %1499 = vmatprep.mubr.bf16.mxu0 %v677
  %1500 = vmatmul.mubr.bf16.gmra.mrb[0].mxu0 %v317
  %v1501 = vpop.f32.mrb[0].mxu0
  %v1502 = vadd.f32 0.0, %v1501
  %v1503 = vpop.f32.mrb[0].mxu0
  %v1504 = vadd.f32 0.0, %v1503
  %v1505 = vpop.f32.mrb[0].mxu0
  %v1506 = vadd.f32 0.0, %v1505
  %v1507 = vpop.f32.mrb[0].mxu0
  %v1508 = vadd.f32 0.0, %v1507
  %1509 = vmatprep.mubr.bf16.mxu0 %v680
  %1510 = vmatmul.mubr.bf16.gmra.mrb[0].mxu0 %v319
  %v1511 = vpop.f32.mrb[0].mxu0
  %v1512 = vadd.f32 0.0, %v1511
  %v1513 = vpop.f32.mrb[0].mxu0
  %v1514 = vadd.f32 0.0, %v1513
  %v1515 = vpop.f32.mrb[0].mxu0
  %v1516 = vadd.f32 0.0, %v1515
  %v1517 = vpop.f32.mrb[0].mxu0
  %v1518 = vadd.f32 0.0, %v1517
  %1519 = vdwg.mxu0
  %v1520 = vmax.f32 %v736, %v856
  %v1521 = vmax.f32 %v738, %v858
  %v1522 = vmax.f32 %v1009, %v1129
  %v1523 = vmax.f32 %v1011, %v1131
  %v1524 = vmax.f32 %v1282, %v1402
  %v1525 = vmax.f32 %v1284, %v1404
  %v1526 = vmax.f32 %v740, %v860
  %v1527 = vmax.f32 %v742, %v862
  %v1528 = vmax.f32 %v1013, %v1133
  %v1529 = vmax.f32 %v1015, %v1135
  %v1530 = vmax.f32 %v1286, %v1406
  %v1531 = vmax.f32 %v1288, %v1408
  %v1532 = vmax.f32 %v746, %v866
  %v1533 = vmax.f32 %v748, %v868
  %v1534 = vmax.f32 %v1019, %v1139
  %v1535 = vmax.f32 %v1021, %v1141
  %v1536 = vmax.f32 %v1292, %v1412
  %v1537 = vmax.f32 %v1294, %v1414
  %v1538 = vmax.f32 %v750, %v870
  %v1539 = vmax.f32 %v752, %v872
  %v1540 = vmax.f32 %v1023, %v1143
  %v1541 = vmax.f32 %v1025, %v1145
  %v1542 = vmax.f32 %v1296, %v1416
  %v1543 = vmax.f32 %v1298, %v1418
  %v1544 = vmax.f32 %v756, %v876
  %v1545 = vmax.f32 %v758, %v878
  %v1546 = vmax.f32 %v1029, %v1149
  %v1547 = vmax.f32 %v1031, %v1151
  %v1548 = vmax.f32 %v1302, %v1422
  %v1549 = vmax.f32 %v1304, %v1424
  %v1550 = vmax.f32 %v760, %v880
  %v1551 = vmax.f32 %v762, %v882
  %v1552 = vmax.f32 %v1033, %v1153
  %v1553 = vmax.f32 %v1035, %v1155
  %v1554 = vmax.f32 %v1306, %v1426
  %v1555 = vmax.f32 %v1308, %v1428
  %v1556 = vmax.f32 %v766, %v886
  %v1557 = vmax.f32 %v768, %v888
  %v1558 = vmax.f32 %v1039, %v1159
  %v1559 = vmax.f32 %v1041, %v1161
  %v1560 = vmax.f32 %v1312, %v1432
  %v1561 = vmax.f32 %v1314, %v1434
  %v1562 = vmax.f32 %v770, %v890
  %v1563 = vmax.f32 %v772, %v892
  %v1564 = vmax.f32 %v1043, %v1163
  %v1565 = vmax.f32 %v1045, %v1165
  %v1566 = vmax.f32 %v1316, %v1436
  %v1567 = vmax.f32 %v1318, %v1438
  %v1568 = vmax.f32 %v776, %v896
  %v1569 = vmax.f32 %v778, %v898
  %v1570 = vmax.f32 %v1049, %v1169
  %v1571 = vmax.f32 %v1051, %v1171
  %v1572 = vmax.f32 %v1322, %v1442
  %v1573 = vmax.f32 %v1324, %v1444
  %v1574 = vmax.f32 %v780, %v900
  %v1575 = vmax.f32 %v782, %v902
  %v1576 = vmax.f32 %v1053, %v1173
  %v1577 = vmax.f32 %v1055, %v1175
  %v1578 = vmax.f32 %v1326, %v1446
  %v1579 = vmax.f32 %v1328, %v1448
  %v1580 = vmax.f32 %v786, %v906
  %v1581 = vmax.f32 %v788, %v908
  %v1582 = vmax.f32 %v1059, %v1179
  %v1583 = vmax.f32 %v1061, %v1181
  %v1584 = vmax.f32 %v1332, %v1452
  %v1585 = vmax.f32 %v1334, %v1454
  %v1586 = vmax.f32 %v790, %v910
  %v1587 = vmax.f32 %v792, %v912
  %v1588 = vmax.f32 %v1063, %v1183
  %v1589 = vmax.f32 %v1065, %v1185
  %v1590 = vmax.f32 %v1336, %v1456
  %v1591 = vmax.f32 %v1338, %v1458
  %v1592 = vmax.f32 %v796, %v916
  %v1593 = vmax.f32 %v798, %v918
  %v1594 = vmax.f32 %v1069, %v1189
  %v1595 = vmax.f32 %v1071, %v1191
  %v1596 = vmax.f32 %v1342, %v1462
  %v1597 = vmax.f32 %v1344, %v1464
  %v1598 = vmax.f32 %v800, %v920
  %v1599 = vmax.f32 %v802, %v922
  %v1600 = vmax.f32 %v1073, %v1193
  %v1601 = vmax.f32 %v1075, %v1195
  %v1602 = vmax.f32 %v1346, %v1466
  %v1603 = vmax.f32 %v1348, %v1468
  %v1604 = vmax.f32 %v806, %v926
  %v1605 = vmax.f32 %v808, %v928
  %v1606 = vmax.f32 %v1079, %v1199
  %v1607 = vmax.f32 %v1081, %v1201
  %v1608 = vmax.f32 %v1352, %v1472
  %v1609 = vmax.f32 %v1354, %v1474
  %v1610 = vmax.f32 %v810, %v930
  %v1611 = vmax.f32 %v812, %v932
  %v1612 = vmax.f32 %v1083, %v1203
  %v1613 = vmax.f32 %v1085, %v1205
  %v1614 = vmax.f32 %v1356, %v1476
  %v1615 = vmax.f32 %v1358, %v1478
  %v1616 = vmax.f32 %v816, %v936
  %v1617 = vmax.f32 %v818, %v938
  %v1618 = vmax.f32 %v1089, %v1209
  %v1619 = vmax.f32 %v1091, %v1211
  %v1620 = vmax.f32 %v1362, %v1482
  %v1621 = vmax.f32 %v1364, %v1484
  %v1622 = vmax.f32 %v820, %v940
  %v1623 = vmax.f32 %v822, %v942
  %v1624 = vmax.f32 %v1093, %v1213
  %v1625 = vmax.f32 %v1095, %v1215
  %v1626 = vmax.f32 %v1366, %v1486
  %v1627 = vmax.f32 %v1368, %v1488
  %v1628 = vmax.f32 %v826, %v946
  %v1629 = vmax.f32 %v828, %v948
  %v1630 = vmax.f32 %v1099, %v1219
  %v1631 = vmax.f32 %v1101, %v1221
  %v1632 = vmax.f32 %v1372, %v1492
  %v1633 = vmax.f32 %v1374, %v1494
  %v1634 = vmax.f32 %v830, %v950
  %v1635 = vmax.f32 %v832, %v952
  %v1636 = vmax.f32 %v1103, %v1223
  %v1637 = vmax.f32 %v1105, %v1225
  %v1638 = vmax.f32 %v1376, %v1496
  %v1639 = vmax.f32 %v1378, %v1498
  %v1640 = vmax.f32 %v836, %v956
  %v1641 = vmax.f32 %v838, %v958
  %v1642 = vmax.f32 %v1109, %v1229
  %v1643 = vmax.f32 %v1111, %v1231
  %v1644 = vmax.f32 %v1382, %v1502
  %v1645 = vmax.f32 %v1384, %v1504
  %v1646 = vmax.f32 %v840, %v960
  %v1647 = vmax.f32 %v842, %v962
  %v1648 = vmax.f32 %v1113, %v1233
  %v1649 = vmax.f32 %v1115, %v1235
  %v1650 = vmax.f32 %v1386, %v1506
  %v1651 = vmax.f32 %v1388, %v1508
  %v1652 = vmax.f32 %v846, %v966
  %v1653 = vmax.f32 %v848, %v968
  %v1654 = vmax.f32 %v1119, %v1239
  %v1655 = vmax.f32 %v1121, %v1241
  %v1656 = vmax.f32 %v1392, %v1512
  %v1657 = vmax.f32 %v1394, %v1514
  %v1658 = vmax.f32 %v850, %v970
  %v1659 = vmax.f32 %v852, %v972
  %v1660 = vmax.f32 %v1123, %v1243
  %v1661 = vmax.f32 %v1125, %v1245
  %v1662 = vmax.f32 %v1396, %v1516
  %v1663 = vmax.f32 %v1398, %v1518
  %v1664 = vmax.f32 %v1520, %v1523
  %v1665 = vmax.f32 %v1521, %v1524
  %v1666 = vmax.f32 %v1522, %v1525
  %v1667 = vmax.f32 %v1526, %v1529
  %v1668 = vmax.f32 %v1527, %v1530
  %v1669 = vmax.f32 %v1528, %v1531
  %v1670 = vmax.f32 %v1532, %v1535
  %v1671 = vmax.f32 %v1533, %v1536
  %v1672 = vmax.f32 %v1534, %v1537
  %v1673 = vmax.f32 %v1538, %v1541
  %v1674 = vmax.f32 %v1539, %v1542
  %v1675 = vmax.f32 %v1540, %v1543
  %v1676 = vmax.f32 %v1544, %v1547
  %v1677 = vmax.f32 %v1545, %v1548
  %v1678 = vmax.f32 %v1546, %v1549
  %v1679 = vmax.f32 %v1550, %v1553
  %v1680 = vmax.f32 %v1551, %v1554
  %v1681 = vmax.f32 %v1552, %v1555
  %v1682 = vmax.f32 %v1556, %v1559
  %v1683 = vmax.f32 %v1557, %v1560
  %v1684 = vmax.f32 %v1558, %v1561
  %v1685 = vmax.f32 %v1562, %v1565
  %v1686 = vmax.f32 %v1563, %v1566
  %v1687 = vmax.f32 %v1564, %v1567
  %v1688 = vmax.f32 %v1568, %v1571
  %v1689 = vmax.f32 %v1569, %v1572
  %v1690 = vmax.f32 %v1570, %v1573
  %v1691 = vmax.f32 %v1574, %v1577
  %v1692 = vmax.f32 %v1575, %v1578
  %v1693 = vmax.f32 %v1576, %v1579
  %v1694 = vmax.f32 %v1580, %v1583
  %v1695 = vmax.f32 %v1581, %v1584
  %v1696 = vmax.f32 %v1582, %v1585
  %v1697 = vmax.f32 %v1586, %v1589
  %v1698 = vmax.f32 %v1587, %v1590
  %v1699 = vmax.f32 %v1588, %v1591
  %v1700 = vmax.f32 %v1592, %v1595
  %v1701 = vmax.f32 %v1593, %v1596
  %v1702 = vmax.f32 %v1594, %v1597
  %v1703 = vmax.f32 %v1598, %v1601
  %v1704 = vmax.f32 %v1599, %v1602
  %v1705 = vmax.f32 %v1600, %v1603
  %v1706 = vmax.f32 %v1604, %v1607
  %v1707 = vmax.f32 %v1605, %v1608
  %v1708 = vmax.f32 %v1606, %v1609
  %v1709 = vmax.f32 %v1610, %v1613
  %v1710 = vmax.f32 %v1611, %v1614
  %v1711 = vmax.f32 %v1612, %v1615
  %v1712 = vmax.f32 %v1616, %v1619
  %v1713 = vmax.f32 %v1617, %v1620
  %v1714 = vmax.f32 %v1618, %v1621
  %v1715 = vmax.f32 %v1622, %v1625
  %v1716 = vmax.f32 %v1623, %v1626
  %v1717 = vmax.f32 %v1624, %v1627
  %v1718 = vmax.f32 %v1628, %v1631
  %v1719 = vmax.f32 %v1629, %v1632
  %v1720 = vmax.f32 %v1630, %v1633
  %v1721 = vmax.f32 %v1634, %v1637
  %v1722 = vmax.f32 %v1635, %v1638
  %v1723 = vmax.f32 %v1636, %v1639
  %v1724 = vmax.f32 %v1640, %v1643
  %v1725 = vmax.f32 %v1641, %v1644
  %v1726 = vmax.f32 %v1642, %v1645
  %v1727 = vmax.f32 %v1646, %v1649
  %v1728 = vmax.f32 %v1647, %v1650
  %v1729 = vmax.f32 %v1648, %v1651
  %v1730 = vmax.f32 %v1652, %v1655
  %v1731 = vmax.f32 %v1653, %v1656
  %v1732 = vmax.f32 %v1654, %v1657
  %v1733 = vmax.f32 %v1658, %v1661
  %v1734 = vmax.f32 %v1659, %v1662
  %v1735 = vmax.f32 %v1660, %v1663
  %v1736 = vld [vmem:[%s2] sm:$0x7]
  %v1738 = vlaneseq
  %v1739 = vshrl.u32 %v1738, 7
  %v1740 = vsub.s32 0, %v1739
  %v1741 = vrot.slane %v1736, %v1740
  %v1742 = vlaneseq
  %v1743 = vshrl.u32 %v1742, 7
  %v1744 = vsub.s32 1, %v1743
  %v1745 = vrot.slane %v1736, %v1744
  %v1746 = vlaneseq
  %v1747 = vshrl.u32 %v1746, 7
  %v1748 = vsub.s32 2, %v1747
  %v1749 = vrot.slane %v1736, %v1748
  %v1753 = vadd.f32 %v1664, %v1741
  %v1754 = vadd.f32 %v1665, %v1745
  %v1755 = vadd.f32 %v1666, %v1749
  %v1756 = vadd.f32 %v1667, %v1741
  %v1757 = vadd.f32 %v1668, %v1745
  %v1758 = vadd.f32 %v1669, %v1749
  %v1759 = vadd.f32 %v1670, %v1741
  %v1760 = vadd.f32 %v1671, %v1745
  %v1761 = vadd.f32 %v1672, %v1749
  %v1762 = vadd.f32 %v1673, %v1741
  %v1763 = vadd.f32 %v1674, %v1745
  %v1764 = vadd.f32 %v1675, %v1749
  %v1765 = vadd.f32 %v1676, %v1741
  %v1766 = vadd.f32 %v1677, %v1745
  %v1767 = vadd.f32 %v1678, %v1749
  %v1768 = vadd.f32 %v1679, %v1741
  %v1769 = vadd.f32 %v1680, %v1745
  %v1770 = vadd.f32 %v1681, %v1749
  %v1771 = vadd.f32 %v1682, %v1741
  %v1772 = vadd.f32 %v1683, %v1745
  %v1773 = vadd.f32 %v1684, %v1749
  %v1774 = vadd.f32 %v1685, %v1741
  %v1775 = vadd.f32 %v1686, %v1745
  %v1776 = vadd.f32 %v1687, %v1749
  %v1777 = vadd.f32 %v1688, %v1741
  %v1778 = vadd.f32 %v1689, %v1745
  %v1779 = vadd.f32 %v1690, %v1749
  %v1780 = vadd.f32 %v1691, %v1741
  %v1781 = vadd.f32 %v1692, %v1745
  %v1782 = vadd.f32 %v1693, %v1749
  %v1783 = vadd.f32 %v1694, %v1741
  %v1784 = vadd.f32 %v1695, %v1745
  %v1785 = vadd.f32 %v1696, %v1749
  %v1786 = vadd.f32 %v1697, %v1741
  %v1787 = vadd.f32 %v1698, %v1745
  %v1788 = vadd.f32 %v1699, %v1749
  %v1789 = vadd.f32 %v1700, %v1741
  %v1790 = vadd.f32 %v1701, %v1745
  %v1791 = vadd.f32 %v1702, %v1749
  %v1792 = vadd.f32 %v1703, %v1741
  %v1793 = vadd.f32 %v1704, %v1745
  %v1794 = vadd.f32 %v1705, %v1749
  %v1795 = vadd.f32 %v1706, %v1741
  %v1796 = vadd.f32 %v1707, %v1745
  %v1797 = vadd.f32 %v1708, %v1749
  %v1798 = vadd.f32 %v1709, %v1741
  %v1799 = vadd.f32 %v1710, %v1745
  %v1800 = vadd.f32 %v1711, %v1749
  %v1801 = vadd.f32 %v1712, %v1741
  %v1802 = vadd.f32 %v1713, %v1745
  %v1803 = vadd.f32 %v1714, %v1749
  %v1804 = vadd.f32 %v1715, %v1741
  %v1805 = vadd.f32 %v1716, %v1745
  %v1806 = vadd.f32 %v1717, %v1749
  %v1807 = vadd.f32 %v1718, %v1741
  %v1808 = vadd.f32 %v1719, %v1745
  %v1809 = vadd.f32 %v1720, %v1749
  %v1810 = vadd.f32 %v1721, %v1741
  %v1811 = vadd.f32 %v1722, %v1745
  %v1812 = vadd.f32 %v1723, %v1749
  %v1813 = vadd.f32 %v1724, %v1741
  %v1814 = vadd.f32 %v1725, %v1745
  %v1815 = vadd.f32 %v1726, %v1749
  %v1816 = vadd.f32 %v1727, %v1741
  %v1817 = vadd.f32 %v1728, %v1745
  %v1818 = vadd.f32 %v1729, %v1749
  %v1819 = vadd.f32 %v1730, %v1741
  %v1820 = vadd.f32 %v1731, %v1745
  %v1821 = vadd.f32 %v1732, %v1749
  %v1822 = vadd.f32 %v1733, %v1741
  %v1823 = vadd.f32 %v1734, %v1745
  %v1824 = vadd.f32 %v1735, %v1749
  %v1825 = vmax.f32 %v1753, 0.0
  %v1826 = vmax.f32 %v1754, 0.0
  %v1827 = vmax.f32 %v1755, 0.0
  %v1828 = vmax.f32 %v1756, 0.0
  %v1829 = vmax.f32 %v1757, 0.0
  %v1830 = vmax.f32 %v1758, 0.0
  %v1831 = vmax.f32 %v1759, 0.0
  %v1832 = vmax.f32 %v1760, 0.0
  %v1833 = vmax.f32 %v1761, 0.0
  %v1834 = vmax.f32 %v1762, 0.0
  %v1835 = vmax.f32 %v1763, 0.0
  %v1836 = vmax.f32 %v1764, 0.0
  %v1837 = vmax.f32 %v1765, 0.0
  %v1838 = vmax.f32 %v1766, 0.0
  %v1839 = vmax.f32 %v1767, 0.0
  %v1840 = vmax.f32 %v1768, 0.0
  %v1841 = vmax.f32 %v1769, 0.0
  %v1842 = vmax.f32 %v1770, 0.0
  %v1843 = vmax.f32 %v1771, 0.0
  %v1844 = vmax.f32 %v1772, 0.0
  %v1845 = vmax.f32 %v1773, 0.0
  %v1846 = vmax.f32 %v1774, 0.0
  %v1847 = vmax.f32 %v1775, 0.0
  %v1848 = vmax.f32 %v1776, 0.0
  %v1849 = vmax.f32 %v1777, 0.0
  %v1850 = vmax.f32 %v1778, 0.0
  %v1851 = vmax.f32 %v1779, 0.0
  %v1852 = vmax.f32 %v1780, 0.0
  %v1853 = vmax.f32 %v1781, 0.0
  %v1854 = vmax.f32 %v1782, 0.0
  %v1855 = vmax.f32 %v1783, 0.0
  %v1856 = vmax.f32 %v1784, 0.0
  %v1857 = vmax.f32 %v1785, 0.0
  %v1858 = vmax.f32 %v1786, 0.0
  %v1859 = vmax.f32 %v1787, 0.0
  %v1860 = vmax.f32 %v1788, 0.0
  %v1861 = vmax.f32 %v1789, 0.0
  %v1862 = vmax.f32 %v1790, 0.0
  %v1863 = vmax.f32 %v1791, 0.0
  %v1864 = vmax.f32 %v1792, 0.0
  %v1865 = vmax.f32 %v1793, 0.0
  %v1866 = vmax.f32 %v1794, 0.0
  %v1867 = vmax.f32 %v1795, 0.0
  %v1868 = vmax.f32 %v1796, 0.0
  %v1869 = vmax.f32 %v1797, 0.0
  %v1870 = vmax.f32 %v1798, 0.0
  %v1871 = vmax.f32 %v1799, 0.0
  %v1872 = vmax.f32 %v1800, 0.0
  %v1873 = vmax.f32 %v1801, 0.0
  %v1874 = vmax.f32 %v1802, 0.0
  %v1875 = vmax.f32 %v1803, 0.0
  %v1876 = vmax.f32 %v1804, 0.0
  %v1877 = vmax.f32 %v1805, 0.0
  %v1878 = vmax.f32 %v1806, 0.0
  %v1879 = vmax.f32 %v1807, 0.0
  %v1880 = vmax.f32 %v1808, 0.0
  %v1881 = vmax.f32 %v1809, 0.0
  %v1882 = vmax.f32 %v1810, 0.0
  %v1883 = vmax.f32 %v1811, 0.0
  %v1884 = vmax.f32 %v1812, 0.0
  %v1885 = vmax.f32 %v1813, 0.0
  %v1886 = vmax.f32 %v1814, 0.0
  %v1887 = vmax.f32 %v1815, 0.0
  %v1888 = vmax.f32 %v1816, 0.0
  %v1889 = vmax.f32 %v1817, 0.0
  %v1890 = vmax.f32 %v1818, 0.0
  %v1891 = vmax.f32 %v1819, 0.0
  %v1892 = vmax.f32 %v1820, 0.0
  %v1893 = vmax.f32 %v1821, 0.0
  %v1894 = vmax.f32 %v1822, 0.0
  %v1895 = vmax.f32 %v1823, 0.0
  %v1896 = vmax.f32 %v1824, 0.0
  %v1897 = vpack.c.bf16 %v1828, %v1825
  %v1898 = vpack.c.bf16 %v1829, %v1826
  %v1899 = vpack.c.bf16 %v1830, %v1827
  %v1900 = vpack.c.bf16 %v1834, %v1831
  %v1901 = vpack.c.bf16 %v1835, %v1832
  %v1902 = vpack.c.bf16 %v1836, %v1833
  %v1903 = vpack.c.bf16 %v1840, %v1837
  %v1904 = vpack.c.bf16 %v1841, %v1838
  %v1905 = vpack.c.bf16 %v1842, %v1839
  %v1906 = vpack.c.bf16 %v1846, %v1843
  %v1907 = vpack.c.bf16 %v1847, %v1844
  %v1908 = vpack.c.bf16 %v1848, %v1845
  %v1909 = vpack.c.bf16 %v1852, %v1849
  %v1910 = vpack.c.bf16 %v1853, %v1850
  %v1911 = vpack.c.bf16 %v1854, %v1851
  %v1912 = vpack.c.bf16 %v1858, %v1855
  %v1913 = vpack.c.bf16 %v1859, %v1856
  %v1914 = vpack.c.bf16 %v1860, %v1857
  %v1915 = vpack.c.bf16 %v1864, %v1861
  %v1916 = vpack.c.bf16 %v1865, %v1862
  %v1917 = vpack.c.bf16 %v1866, %v1863
  %v1918 = vpack.c.bf16 %v1870, %v1867
  %v1919 = vpack.c.bf16 %v1871, %v1868
  %v1920 = vpack.c.bf16 %v1872, %v1869
  %v1921 = vpack.c.bf16 %v1876, %v1873
  %v1922 = vpack.c.bf16 %v1877, %v1874
  %v1923 = vpack.c.bf16 %v1878, %v1875
  %v1924 = vpack.c.bf16 %v1882, %v1879
  %v1925 = vpack.c.bf16 %v1883, %v1880
  %v1926 = vpack.c.bf16 %v1884, %v1881
  %v1927 = vpack.c.bf16 %v1888, %v1885
  %v1928 = vpack.c.bf16 %v1889, %v1886
  %v1929 = vpack.c.bf16 %v1890, %v1887
  %v1930 = vpack.c.bf16 %v1894, %v1891
  %v1931 = vpack.c.bf16 %v1895, %v1892
  %v1932 = vpack.c.bf16 %v1896, %v1893
  %v1933 = vld [vmem:[%s3] sm:$0xff]
  %v1934 = vld [vmem:[%s3 + $0x8] sm:$0xff]
  %v1935 = vld [vmem:[%s3 + $0x10] sm:$0xff]
  %v1936 = vld [vmem:[%s3 + $0x18] sm:$0xff]
  %v1937 = vld [vmem:[%s3 + $0x20] sm:$0xff]
  %v1938 = vld [vmem:[%s3 + $0x28] sm:$0xff]
  %v1939 = vld [vmem:[%s3 + $0x30] sm:$0xff]
  %v1940 = vld [vmem:[%s3 + $0x38] sm:$0xff]
  %v1941 = vld [vmem:[%s3 + $0x40] sm:$0xff]
  %v1942 = vld [vmem:[%s3 + $0x48] sm:$0xff]
  %v1943 = vld [vmem:[%s3 + $0x50] sm:$0xff]
  %v1944 = vld [vmem:[%s3 + $0x58] sm:$0xff]
  %v1945 = vld [vmem:[%s3 + $0x60] sm:$0xff]
  %v1946 = vld [vmem:[%s3 + $0x68] sm:$0xff]
  %v1947 = vld [vmem:[%s3 + $0x70] sm:$0xff]
  %v1948 = vld [vmem:[%s3 + $0x78] sm:$0xff]
  %v1949 = vld [vmem:[%s3 + $0x80] sm:$0xff]
  %v1950 = vld [vmem:[%s3 + $0x88] sm:$0xff]
  %v1951 = vld [vmem:[%s3 + $0x90] sm:$0xff]
  %v1952 = vld [vmem:[%s3 + $0x98] sm:$0xff]
  %v1953 = vld [vmem:[%s3 + $0xa0] sm:$0xff]
  %v1954 = vld [vmem:[%s3 + $0xa8] sm:$0xff]
  %v1955 = vld [vmem:[%s3 + $0xb0] sm:$0xff]
  %v1956 = vld [vmem:[%s3 + $0xb8] sm:$0xff]
  %v1957 = vld [vmem:[%s3 + $0xc0] sm:$0xff]
  %v1958 = vld [vmem:[%s3 + $0xc8] sm:$0xff]
  %v1959 = vld [vmem:[%s3 + $0xd0] sm:$0xff]
  %v1960 = vld [vmem:[%s3 + $0xd8] sm:$0xff]
  %v1961 = vld [vmem:[%s3 + $0xe0] sm:$0xff]
  %v1962 = vld [vmem:[%s3 + $0xe8] sm:$0xff]
  %v1963 = vld [vmem:[%s3 + $0xf0] sm:$0xff]
  %v1964 = vld [vmem:[%s3 + $0xf8] sm:$0xff]
  %v1965 = vld [vmem:[%s3 + $0x100] sm:$0xff]
  %v1966 = vld [vmem:[%s3 + $0x108] sm:$0xff]
  %v1967 = vld [vmem:[%s3 + $0x110] sm:$0xff]
  %v1968 = vld [vmem:[%s3 + $0x118] sm:$0xff]
  %v1969 = vld [vmem:[%s3 + $0x120] sm:$0xff]
  %v1970 = vld [vmem:[%s3 + $0x128] sm:$0xff]
  %v1971 = vld [vmem:[%s3 + $0x130] sm:$0xff]
  %v1972 = vld [vmem:[%s3 + $0x138] sm:$0xff]
  %v1973 = vld [vmem:[%s3 + $0x140] sm:$0xff]
  %v1974 = vld [vmem:[%s3 + $0x148] sm:$0xff]
  %v1975 = vld [vmem:[%s3 + $0x150] sm:$0xff]
  %v1976 = vld [vmem:[%s3 + $0x158] sm:$0xff]
  %v1977 = vld [vmem:[%s3 + $0x160] sm:$0xff]
  %v1978 = vld [vmem:[%s3 + $0x168] sm:$0xff]
  %v1979 = vld [vmem:[%s3 + $0x170] sm:$0xff]
  %v1980 = vld [vmem:[%s3 + $0x178] sm:$0xff]
  %s1981 = scalar_lea.vmem %s3, 384
  %v1982 = vld [vmem:[%s1981] sm:$0xff]
  %v1983 = vld [vmem:[%s1981 + $0x8] sm:$0xff]
  %v1984 = vld [vmem:[%s1981 + $0x10] sm:$0xff]
  %v1985 = vld [vmem:[%s1981 + $0x18] sm:$0xff]
  %v1986 = vld [vmem:[%s1981 + $0x20] sm:$0xff]
  %v1987 = vld [vmem:[%s1981 + $0x28] sm:$0xff]
  %v1988 = vld [vmem:[%s1981 + $0x30] sm:$0xff]
  %v1989 = vld [vmem:[%s1981 + $0x38] sm:$0xff]
  %v1990 = vld [vmem:[%s1981 + $0x40] sm:$0xff]
  %v1991 = vld [vmem:[%s1981 + $0x48] sm:$0xff]
  %v1992 = vld [vmem:[%s1981 + $0x50] sm:$0xff]
  %v1993 = vld [vmem:[%s1981 + $0x58] sm:$0xff]
  %v1994 = vld [vmem:[%s1981 + $0x60] sm:$0xff]
  %v1995 = vld [vmem:[%s1981 + $0x68] sm:$0xff]
  %v1996 = vld [vmem:[%s1981 + $0x70] sm:$0xff]
  %v1997 = vld [vmem:[%s1981 + $0x78] sm:$0xff]
  %v1998 = vld [vmem:[%s1981 + $0x80] sm:$0xff]
  %v1999 = vld [vmem:[%s1981 + $0x88] sm:$0xff]
  %v2000 = vld [vmem:[%s1981 + $0x90] sm:$0xff]
  %v2001 = vld [vmem:[%s1981 + $0x98] sm:$0xff]
  %v2002 = vld [vmem:[%s1981 + $0xa0] sm:$0xff]
  %v2003 = vld [vmem:[%s1981 + $0xa8] sm:$0xff]
  %v2004 = vld [vmem:[%s1981 + $0xb0] sm:$0xff]
  %v2005 = vld [vmem:[%s1981 + $0xb8] sm:$0xff]
  %v2006 = vld [vmem:[%s1981 + $0xc0] sm:$0xff]
  %v2007 = vld [vmem:[%s1981 + $0xc8] sm:$0xff]
  %v2008 = vld [vmem:[%s1981 + $0xd0] sm:$0xff]
  %v2009 = vld [vmem:[%s1981 + $0xd8] sm:$0xff]
  %v2010 = vld [vmem:[%s1981 + $0xe0] sm:$0xff]
  %v2011 = vld [vmem:[%s1981 + $0xe8] sm:$0xff]
  %v2012 = vld [vmem:[%s1981 + $0xf0] sm:$0xff]
  %v2013 = vld [vmem:[%s1981 + $0xf8] sm:$0xff]
  %v2014 = vld [vmem:[%s1981 + $0x100] sm:$0xff]
  %v2015 = vld [vmem:[%s1981 + $0x108] sm:$0xff]
  %v2016 = vld [vmem:[%s1981 + $0x110] sm:$0xff]
  %v2017 = vld [vmem:[%s1981 + $0x118] sm:$0xff]
  %v2018 = vld [vmem:[%s1981 + $0x120] sm:$0xff]
  %v2019 = vld [vmem:[%s1981 + $0x128] sm:$0xff]
  %v2020 = vld [vmem:[%s1981 + $0x130] sm:$0xff]
  %v2021 = vld [vmem:[%s1981 + $0x138] sm:$0xff]
  %v2022 = vld [vmem:[%s1981 + $0x140] sm:$0xff]
  %v2023 = vld [vmem:[%s1981 + $0x148] sm:$0xff]
  %v2024 = vld [vmem:[%s1981 + $0x150] sm:$0xff]
  %v2025 = vld [vmem:[%s1981 + $0x158] sm:$0xff]
  %v2026 = vld [vmem:[%s1981 + $0x160] sm:$0xff]
  %v2027 = vld [vmem:[%s1981 + $0x168] sm:$0xff]
  %v2028 = vld [vmem:[%s1981 + $0x170] sm:$0xff]
  %v2029 = vld [vmem:[%s1981 + $0x178] sm:$0xff]
  %v2078 = vunpack.c.l.b16 %v1982
  %v2079 = vunpack.c.h.b16 %v1982
  %v2080 = vunpack.c.l.b16 %v1983
  %v2081 = vunpack.c.h.b16 %v1983
  %v2082 = vunpack.c.l.b16 %v1984
  %v2083 = vunpack.c.h.b16 %v1984
  %v2084 = vunpack.c.l.b16 %v1985
  %v2085 = vunpack.c.h.b16 %v1985
  %v2086 = vunpack.c.l.b16 %v1986
  %v2087 = vunpack.c.h.b16 %v1986
  %v2088 = vunpack.c.l.b16 %v1987
  %v2089 = vunpack.c.h.b16 %v1987
  %v2090 = vunpack.c.l.b16 %v1988
  %v2091 = vunpack.c.h.b16 %v1988
  %v2092 = vunpack.c.l.b16 %v1989
  %v2093 = vunpack.c.h.b16 %v1989
  %v2094 = vunpack.c.l.b16 %v1990
  %v2095 = vunpack.c.h.b16 %v1990
  %v2096 = vunpack.c.l.b16 %v1991
  %v2097 = vunpack.c.h.b16 %v1991
  %v2098 = vunpack.c.l.b16 %v1992
  %v2099 = vunpack.c.h.b16 %v1992
  %v2100 = vunpack.c.l.b16 %v1993
  %v2101 = vunpack.c.h.b16 %v1993
  %v2102 = vunpack.c.l.b16 %v1994
  %v2103 = vunpack.c.h.b16 %v1994
  %v2104 = vunpack.c.l.b16 %v1995
  %v2105 = vunpack.c.h.b16 %v1995
  %v2106 = vunpack.c.l.b16 %v1996
  %v2107 = vunpack.c.h.b16 %v1996
  %v2108 = vunpack.c.l.b16 %v1997
  %v2109 = vunpack.c.h.b16 %v1997
  %v2110 = vunpack.c.l.b16 %v1998
  %v2111 = vunpack.c.h.b16 %v1998
  %v2112 = vunpack.c.l.b16 %v1999
  %v2113 = vunpack.c.h.b16 %v1999
  %v2114 = vunpack.c.l.b16 %v2000
  %v2115 = vunpack.c.h.b16 %v2000
  %v2116 = vunpack.c.l.b16 %v2001
  %v2117 = vunpack.c.h.b16 %v2001
  %v2118 = vunpack.c.l.b16 %v2002
  %v2119 = vunpack.c.h.b16 %v2002
  %v2120 = vunpack.c.l.b16 %v2003
  %v2121 = vunpack.c.h.b16 %v2003
  %v2122 = vunpack.c.l.b16 %v2004
  %v2123 = vunpack.c.h.b16 %v2004
  %v2124 = vunpack.c.l.b16 %v2005
  %v2125 = vunpack.c.h.b16 %v2005
  %v2126 = vunpack.c.l.b16 %v2006
  %v2127 = vunpack.c.h.b16 %v2006
  %v2128 = vunpack.c.l.b16 %v2007
  %v2129 = vunpack.c.h.b16 %v2007
  %v2130 = vunpack.c.l.b16 %v2008
  %v2131 = vunpack.c.h.b16 %v2008
  %v2132 = vunpack.c.l.b16 %v2009
  %v2133 = vunpack.c.h.b16 %v2009
  %v2134 = vunpack.c.l.b16 %v2010
  %v2135 = vunpack.c.h.b16 %v2010
  %v2136 = vunpack.c.l.b16 %v2011
  %v2137 = vunpack.c.h.b16 %v2011
  %v2138 = vunpack.c.l.b16 %v2012
  %v2139 = vunpack.c.h.b16 %v2012
  %v2140 = vunpack.c.l.b16 %v2013
  %v2141 = vunpack.c.h.b16 %v2013
  %v2142 = vunpack.c.l.b16 %v2014
  %v2143 = vunpack.c.h.b16 %v2014
  %v2144 = vunpack.c.l.b16 %v2015
  %v2145 = vunpack.c.h.b16 %v2015
  %v2146 = vunpack.c.l.b16 %v2016
  %v2147 = vunpack.c.h.b16 %v2016
  %v2148 = vunpack.c.l.b16 %v2017
  %v2149 = vunpack.c.h.b16 %v2017
  %v2150 = vunpack.c.l.b16 %v2018
  %v2151 = vunpack.c.h.b16 %v2018
  %v2152 = vunpack.c.l.b16 %v2019
  %v2153 = vunpack.c.h.b16 %v2019
  %v2154 = vunpack.c.l.b16 %v2020
  %v2155 = vunpack.c.h.b16 %v2020
  %v2156 = vunpack.c.l.b16 %v2021
  %v2157 = vunpack.c.h.b16 %v2021
  %v2158 = vunpack.c.l.b16 %v2022
  %v2159 = vunpack.c.h.b16 %v2022
  %v2160 = vunpack.c.l.b16 %v2023
  %v2161 = vunpack.c.h.b16 %v2023
  %v2162 = vunpack.c.l.b16 %v2024
  %v2163 = vunpack.c.h.b16 %v2024
  %v2164 = vunpack.c.l.b16 %v2025
  %v2165 = vunpack.c.h.b16 %v2025
  %v2166 = vunpack.c.l.b16 %v2026
  %v2167 = vunpack.c.h.b16 %v2026
  %v2168 = vunpack.c.l.b16 %v2027
  %v2169 = vunpack.c.h.b16 %v2027
  %v2170 = vunpack.c.l.b16 %v2028
  %v2171 = vunpack.c.h.b16 %v2028
  %v2172 = vunpack.c.l.b16 %v2029
  %v2173 = vunpack.c.h.b16 %v2029
  %v2174 = vpack.c.b16 %v2080, %v2078
  %v2175 = vpack.c.b16 %v2081, %v2079
  %v2176 = vpack.c.b16 %v2084, %v2082
  %v2177 = vpack.c.b16 %v2085, %v2083
  %v2178 = vpack.c.b16 %v2088, %v2086
  %v2179 = vpack.c.b16 %v2089, %v2087
  %v2180 = vpack.c.b16 %v2092, %v2090
  %v2181 = vpack.c.b16 %v2093, %v2091
  %v2182 = vpack.c.b16 %v2096, %v2094
  %v2183 = vpack.c.b16 %v2097, %v2095
  %v2184 = vpack.c.b16 %v2100, %v2098
  %v2185 = vpack.c.b16 %v2101, %v2099
  %v2186 = vpack.c.b16 %v2104, %v2102
  %v2187 = vpack.c.b16 %v2105, %v2103
  %v2188 = vpack.c.b16 %v2108, %v2106
  %v2189 = vpack.c.b16 %v2109, %v2107
  %v2190 = vpack.c.b16 %v2112, %v2110
  %v2191 = vpack.c.b16 %v2113, %v2111
  %v2192 = vpack.c.b16 %v2116, %v2114
  %v2193 = vpack.c.b16 %v2117, %v2115
  %v2194 = vpack.c.b16 %v2120, %v2118
  %v2195 = vpack.c.b16 %v2121, %v2119
  %v2196 = vpack.c.b16 %v2124, %v2122
  %v2197 = vpack.c.b16 %v2125, %v2123
  %v2198 = vpack.c.b16 %v2128, %v2126
  %v2199 = vpack.c.b16 %v2129, %v2127
  %v2200 = vpack.c.b16 %v2132, %v2130
  %v2201 = vpack.c.b16 %v2133, %v2131
  %v2202 = vpack.c.b16 %v2136, %v2134
  %v2203 = vpack.c.b16 %v2137, %v2135
  %v2204 = vpack.c.b16 %v2140, %v2138
  %v2205 = vpack.c.b16 %v2141, %v2139
  %v2206 = vpack.c.b16 %v2144, %v2142
  %v2207 = vpack.c.b16 %v2145, %v2143
  %v2208 = vpack.c.b16 %v2148, %v2146
  %v2209 = vpack.c.b16 %v2149, %v2147
  %v2210 = vpack.c.b16 %v2152, %v2150
  %v2211 = vpack.c.b16 %v2153, %v2151
  %v2212 = vpack.c.b16 %v2156, %v2154
  %v2213 = vpack.c.b16 %v2157, %v2155
  %v2214 = vpack.c.b16 %v2160, %v2158
  %v2215 = vpack.c.b16 %v2161, %v2159
  %v2216 = vpack.c.b16 %v2164, %v2162
  %v2217 = vpack.c.b16 %v2165, %v2163
  %v2218 = vpack.c.b16 %v2168, %v2166
  %v2219 = vpack.c.b16 %v2169, %v2167
  %v2220 = vpack.c.b16 %v2172, %v2170
  %v2221 = vpack.c.b16 %v2173, %v2171
  %2270 = vmatprep.subr.bf16.mxu0 %v2175
  %2271 = vmatpush1.bf16.msra.mxu0 %v2174
  %2272 = vmatprep.subr.bf16.mxu0 %v2177
  %2273 = vmatpush1.bf16.msra.mxu0 %v2176
  %2274 = vmatprep.subr.bf16.mxu0 %v2179
  %2275 = vmatpush1.bf16.msra.mxu0 %v2178
  %2276 = vmatprep.subr.bf16.mxu0 %v2181
  %2277 = vmatpush1.bf16.msra.mxu0 %v2180
  %2278 = vmatprep.subr.bf16.mxu0 %v2183
  %2279 = vmatpush1.bf16.msra.mxu0 %v2182
  %2280 = vmatprep.subr.bf16.mxu0 %v2185
  %2281 = vmatpush1.bf16.msra.mxu0 %v2184
  %2282 = vmatprep.subr.bf16.mxu0 %v2187
  %2283 = vmatpush1.bf16.msra.mxu0 %v2186
  %2284 = vmatprep.subr.bf16.mxu0 %v2189
  %2285 = vmatpush1.bf16.msra.mxu0 %v2188
  %2286 = vmatprep.subr.bf16.mxu0 %v2191
  %2287 = vmatpush1.bf16.msra.mxu0 %v2190
  %2288 = vmatprep.subr.bf16.mxu0 %v2193
  %2289 = vmatpush1.bf16.msra.mxu0 %v2192
  %2290 = vmatprep.subr.bf16.mxu0 %v2195
  %2291 = vmatpush1.bf16.msra.mxu0 %v2194
  %2292 = vmatprep.subr.bf16.mxu0 %v2197
  %2293 = vmatpush1.bf16.msra.mxu0 %v2196
  %2294 = vmatprep.subr.bf16.mxu0 %v2199
  %2295 = vmatpush1.bf16.msra.mxu0 %v2198
  %2296 = vmatprep.subr.bf16.mxu0 %v2201
  %2297 = vmatpush1.bf16.msra.mxu0 %v2200
  %2298 = vmatprep.subr.bf16.mxu0 %v2203
  %2299 = vmatpush1.bf16.msra.mxu0 %v2202
  %2300 = vmatprep.subr.bf16.mxu0 %v2205
  %2301 = vmatpush1.bf16.msra.mxu0 %v2204
  %2302 = vmatprep.mubr.bf16.mxu0 %v1901
  %2303 = vmatmul.mubr.bf16.gmra.mrb[0].mxu0 %v1900
  %v2304 = vpop.f32.mrb[0].mxu0
  %v2305 = vadd.f32 0.0, %v2304
  %v2306 = vpop.f32.mrb[0].mxu0
  %v2307 = vadd.f32 0.0, %v2306
  %v2308 = vpop.f32.mrb[0].mxu0
  %v2309 = vadd.f32 0.0, %v2308
  %v2310 = vpop.f32.mrb[0].mxu0
  %v2311 = vadd.f32 0.0, %v2310
  %2312 = vmatprep.mubr.bf16.mxu0 %v1904
  %2313 = vmatmul.mubr.bf16.gmra.mrb[0].mxu0 %v1903
  %v2314 = vpop.f32.mrb[0].mxu0
  %v2315 = vadd.f32 0.0, %v2314
  %v2316 = vpop.f32.mrb[0].mxu0
  %v2317 = vadd.f32 0.0, %v2316
  %v2318 = vpop.f32.mrb[0].mxu0
  %v2319 = vadd.f32 0.0, %v2318
  %v2320 = vpop.f32.mrb[0].mxu0
  %v2321 = vadd.f32 0.0, %v2320
  %2322 = vmatprep.mubr.bf16.mxu0 %v1907
  %2323 = vmatmul.mubr.bf16.gmra.mrb[0].mxu0 %v1906
  %v2324 = vpop.f32.mrb[0].mxu0
  %v2325 = vadd.f32 0.0, %v2324
  %v2326 = vpop.f32.mrb[0].mxu0
  %v2327 = vadd.f32 0.0, %v2326
  %v2328 = vpop.f32.mrb[0].mxu0
  %v2329 = vadd.f32 0.0, %v2328
  %v2330 = vpop.f32.mrb[0].mxu0
  %v2331 = vadd.f32 0.0, %v2330
  %2332 = vmatprep.mubr.bf16.mxu0 %v1910
  %2333 = vmatmul.mubr.bf16.gmra.mrb[0].mxu0 %v1909
  %v2334 = vpop.f32.mrb[0].mxu0
  %v2335 = vadd.f32 0.0, %v2334
  %v2336 = vpop.f32.mrb[0].mxu0
  %v2337 = vadd.f32 0.0, %v2336
  %v2338 = vpop.f32.mrb[0].mxu0
  %v2339 = vadd.f32 0.0, %v2338
  %v2340 = vpop.f32.mrb[0].mxu0
  %v2341 = vadd.f32 0.0, %v2340
  %2342 = vmatprep.mubr.bf16.mxu0 %v1913
  %2343 = vmatmul.mubr.bf16.gmra.mrb[0].mxu0 %v1912
  %v2344 = vpop.f32.mrb[0].mxu0
  %v2345 = vadd.f32 0.0, %v2344
  %v2346 = vpop.f32.mrb[0].mxu0
  %v2347 = vadd.f32 0.0, %v2346
  %v2348 = vpop.f32.mrb[0].mxu0
  %v2349 = vadd.f32 0.0, %v2348
  %v2350 = vpop.f32.mrb[0].mxu0
  %v2351 = vadd.f32 0.0, %v2350
  %2352 = vmatprep.mubr.bf16.mxu0 %v1916
  %2353 = vmatmul.mubr.bf16.gmra.mrb[0].mxu0 %v1915
  %v2354 = vpop.f32.mrb[0].mxu0
  %v2355 = vadd.f32 0.0, %v2354
  %v2356 = vpop.f32.mrb[0].mxu0
  %v2357 = vadd.f32 0.0, %v2356
  %v2358 = vpop.f32.mrb[0].mxu0
  %v2359 = vadd.f32 0.0, %v2358
  %v2360 = vpop.f32.mrb[0].mxu0
  %v2361 = vadd.f32 0.0, %v2360
  %2362 = vmatprep.mubr.bf16.mxu0 %v1919
  %2363 = vmatmul.mubr.bf16.gmra.mrb[0].mxu0 %v1918
  %v2364 = vpop.f32.mrb[0].mxu0
  %v2365 = vadd.f32 0.0, %v2364
  %v2366 = vpop.f32.mrb[0].mxu0
  %v2367 = vadd.f32 0.0, %v2366
  %v2368 = vpop.f32.mrb[0].mxu0
  %v2369 = vadd.f32 0.0, %v2368
  %v2370 = vpop.f32.mrb[0].mxu0
  %v2371 = vadd.f32 0.0, %v2370
  %2372 = vmatprep.mubr.bf16.mxu0 %v1922
  %2373 = vmatmul.mubr.bf16.gmra.mrb[0].mxu0 %v1921
  %v2374 = vpop.f32.mrb[0].mxu0
  %v2375 = vadd.f32 0.0, %v2374
  %v2376 = vpop.f32.mrb[0].mxu0
  %v2377 = vadd.f32 0.0, %v2376
  %v2378 = vpop.f32.mrb[0].mxu0
  %v2379 = vadd.f32 0.0, %v2378
  %v2380 = vpop.f32.mrb[0].mxu0
  %v2381 = vadd.f32 0.0, %v2380
  %2382 = vdwg.mxu0
  %2383 = vmatprep.subr.bf16.mxu0 %v2207
  %2384 = vmatpush1.bf16.msra.mxu0 %v2206
  %2385 = vmatprep.subr.bf16.mxu0 %v2209
  %2386 = vmatpush1.bf16.msra.mxu0 %v2208
  %2387 = vmatprep.subr.bf16.mxu0 %v2211
  %2388 = vmatpush1.bf16.msra.mxu0 %v2210
  %2389 = vmatprep.subr.bf16.mxu0 %v2213
  %2390 = vmatpush1.bf16.msra.mxu0 %v2212
  %2391 = vmatprep.subr.bf16.mxu0 %v2215
  %2392 = vmatpush1.bf16.msra.mxu0 %v2214
  %2393 = vmatprep.subr.bf16.mxu0 %v2217
  %2394 = vmatpush1.bf16.msra.mxu0 %v2216
  %2395 = vmatprep.subr.bf16.mxu0 %v2219
  %2396 = vmatpush1.bf16.msra.mxu0 %v2218
  %2397 = vmatprep.subr.bf16.mxu0 %v2221
  %2398 = vmatpush1.bf16.msra.mxu0 %v2220
  %2399 = vmatprep.subr.bf16.mxu0 0
  %2400 = vmatpush1.bf16.msra.mxu0 0
  %2401 = vmatprep.subr.bf16.mxu0 0
  %2402 = vmatpush1.bf16.msra.mxu0 0
  %2403 = vmatprep.subr.bf16.mxu0 0
  %2404 = vmatpush1.bf16.msra.mxu0 0
  %2405 = vmatprep.subr.bf16.mxu0 0
  %2406 = vmatpush1.bf16.msra.mxu0 0
  %2407 = vmatprep.subr.bf16.mxu0 0
  %2408 = vmatpush1.bf16.msra.mxu0 0
  %2409 = vmatprep.subr.bf16.mxu0 0
  %2410 = vmatpush1.bf16.msra.mxu0 0
  %2411 = vmatprep.subr.bf16.mxu0 0
  %2412 = vmatpush1.bf16.msra.mxu0 0
  %2413 = vmatprep.subr.bf16.mxu0 0
  %2414 = vmatpush1.bf16.msra.mxu0 0
  %2415 = vmatprep.mubr.bf16.mxu0 0
  %2416 = vmatmul.mubr.bf16.gmra.mrb[0].mxu0 %v1902
  %v2417 = vpop.f32.mrb[0].mxu0
  %v2418 = vadd.f32 %v2305, %v2417
  %v2419 = vpop.f32.mrb[0].mxu0
  %v2420 = vadd.f32 %v2307, %v2419
  %v2421 = vpop.f32.mrb[0].mxu0
  %v2422 = vadd.f32 %v2309, %v2421
  %v2423 = vpop.f32.mrb[0].mxu0
  %v2424 = vadd.f32 %v2311, %v2423
  %2425 = vmatprep.mubr.bf16.mxu0 0
  %2426 = vmatmul.mubr.bf16.gmra.mrb[0].mxu0 %v1905
  %v2427 = vpop.f32.mrb[0].mxu0
  %v2428 = vadd.f32 %v2315, %v2427
  %v2429 = vpop.f32.mrb[0].mxu0
  %v2430 = vadd.f32 %v2317, %v2429
  %v2431 = vpop.f32.mrb[0].mxu0
  %v2432 = vadd.f32 %v2319, %v2431
  %v2433 = vpop.f32.mrb[0].mxu0
  %v2434 = vadd.f32 %v2321, %v2433
  %2435 = vmatprep.mubr.bf16.mxu0 0
  %2436 = vmatmul.mubr.bf16.gmra.mrb[0].mxu0 %v1908
  %v2437 = vpop.f32.mrb[0].mxu0
  %v2438 = vadd.f32 %v2325, %v2437
  %v2439 = vpop.f32.mrb[0].mxu0
  %v2440 = vadd.f32 %v2327, %v2439
  %v2441 = vpop.f32.mrb[0].mxu0
  %v2442 = vadd.f32 %v2329, %v2441
  %v2443 = vpop.f32.mrb[0].mxu0
  %v2444 = vadd.f32 %v2331, %v2443
  %2445 = vmatprep.mubr.bf16.mxu0 0
  %2446 = vmatmul.mubr.bf16.gmra.mrb[0].mxu0 %v1911
  %v2447 = vpop.f32.mrb[0].mxu0
  %v2448 = vadd.f32 %v2335, %v2447
  %v2449 = vpop.f32.mrb[0].mxu0
  %v2450 = vadd.f32 %v2337, %v2449
  %v2451 = vpop.f32.mrb[0].mxu0
  %v2452 = vadd.f32 %v2339, %v2451
  %v2453 = vpop.f32.mrb[0].mxu0
  %v2454 = vadd.f32 %v2341, %v2453
  %2455 = vmatprep.mubr.bf16.mxu0 0
  %2456 = vmatmul.mubr.bf16.gmra.mrb[0].mxu0 %v1914
  %v2457 = vpop.f32.mrb[0].mxu0
  %v2458 = vadd.f32 %v2345, %v2457
  %v2459 = vpop.f32.mrb[0].mxu0
  %v2460 = vadd.f32 %v2347, %v2459
  %v2461 = vpop.f32.mrb[0].mxu0
  %v2462 = vadd.f32 %v2349, %v2461
  %v2463 = vpop.f32.mrb[0].mxu0
  %v2464 = vadd.f32 %v2351, %v2463
  %2465 = vmatprep.mubr.bf16.mxu0 0
  %2466 = vmatmul.mubr.bf16.gmra.mrb[0].mxu0 %v1917
  %v2467 = vpop.f32.mrb[0].mxu0
  %v2468 = vadd.f32 %v2355, %v2467
  %v2469 = vpop.f32.mrb[0].mxu0
  %v2470 = vadd.f32 %v2357, %v2469
  %v2471 = vpop.f32.mrb[0].mxu0
  %v2472 = vadd.f32 %v2359, %v2471
  %v2473 = vpop.f32.mrb[0].mxu0
  %v2474 = vadd.f32 %v2361, %v2473
  %2475 = vmatprep.mubr.bf16.mxu0 0
  %2476 = vmatmul.mubr.bf16.gmra.mrb[0].mxu0 %v1920
  %v2477 = vpop.f32.mrb[0].mxu0
  %v2478 = vadd.f32 %v2365, %v2477
  %v2479 = vpop.f32.mrb[0].mxu0
  %v2480 = vadd.f32 %v2367, %v2479
  %v2481 = vpop.f32.mrb[0].mxu0
  %v2482 = vadd.f32 %v2369, %v2481
  %v2483 = vpop.f32.mrb[0].mxu0
  %v2484 = vadd.f32 %v2371, %v2483
  %2485 = vmatprep.mubr.bf16.mxu0 0
  %2486 = vmatmul.mubr.bf16.gmra.mrb[0].mxu0 %v1923
  %v2487 = vpop.f32.mrb[0].mxu0
  %v2488 = vadd.f32 %v2375, %v2487
  %v2489 = vpop.f32.mrb[0].mxu0
  %v2490 = vadd.f32 %v2377, %v2489
  %v2491 = vpop.f32.mrb[0].mxu0
  %v2492 = vadd.f32 %v2379, %v2491
  %v2493 = vpop.f32.mrb[0].mxu0
  %v2494 = vadd.f32 %v2381, %v2493
  %2495 = vdwg.mxu0
  %v2544 = vunpack.c.l.b16 %v1933
  %v2545 = vunpack.c.h.b16 %v1933
  %v2546 = vunpack.c.l.b16 %v1934
  %v2547 = vunpack.c.h.b16 %v1934
  %v2548 = vunpack.c.l.b16 %v1935
  %v2549 = vunpack.c.h.b16 %v1935
  %v2550 = vunpack.c.l.b16 %v1936
  %v2551 = vunpack.c.h.b16 %v1936
  %v2552 = vunpack.c.l.b16 %v1937
  %v2553 = vunpack.c.h.b16 %v1937
  %v2554 = vunpack.c.l.b16 %v1938
  %v2555 = vunpack.c.h.b16 %v1938
  %v2556 = vunpack.c.l.b16 %v1939
  %v2557 = vunpack.c.h.b16 %v1939
  %v2558 = vunpack.c.l.b16 %v1940
  %v2559 = vunpack.c.h.b16 %v1940
  %v2560 = vunpack.c.l.b16 %v1941
  %v2561 = vunpack.c.h.b16 %v1941
  %v2562 = vunpack.c.l.b16 %v1942
  %v2563 = vunpack.c.h.b16 %v1942
  %v2564 = vunpack.c.l.b16 %v1943
  %v2565 = vunpack.c.h.b16 %v1943
  %v2566 = vunpack.c.l.b16 %v1944
  %v2567 = vunpack.c.h.b16 %v1944
  %v2568 = vunpack.c.l.b16 %v1945
  %v2569 = vunpack.c.h.b16 %v1945
  %v2570 = vunpack.c.l.b16 %v1946
  %v2571 = vunpack.c.h.b16 %v1946
  %v2572 = vunpack.c.l.b16 %v1947
  %v2573 = vunpack.c.h.b16 %v1947
  %v2574 = vunpack.c.l.b16 %v1948
  %v2575 = vunpack.c.h.b16 %v1948
  %v2576 = vunpack.c.l.b16 %v1949
  %v2577 = vunpack.c.h.b16 %v1949
  %v2578 = vunpack.c.l.b16 %v1950
  %v2579 = vunpack.c.h.b16 %v1950
  %v2580 = vunpack.c.l.b16 %v1951
  %v2581 = vunpack.c.h.b16 %v1951
  %v2582 = vunpack.c.l.b16 %v1952
  %v2583 = vunpack.c.h.b16 %v1952
  %v2584 = vunpack.c.l.b16 %v1953
  %v2585 = vunpack.c.h.b16 %v1953
  %v2586 = vunpack.c.l.b16 %v1954
  %v2587 = vunpack.c.h.b16 %v1954
  %v2588 = vunpack.c.l.b16 %v1955
  %v2589 = vunpack.c.h.b16 %v1955
  %v2590 = vunpack.c.l.b16 %v1956
  %v2591 = vunpack.c.h.b16 %v1956
  %v2592 = vunpack.c.l.b16 %v1957
  %v2593 = vunpack.c.h.b16 %v1957
  %v2594 = vunpack.c.l.b16 %v1958
  %v2595 = vunpack.c.h.b16 %v1958
  %v2596 = vunpack.c.l.b16 %v1959
  %v2597 = vunpack.c.h.b16 %v1959
  %v2598 = vunpack.c.l.b16 %v1960
  %v2599 = vunpack.c.h.b16 %v1960
  %v2600 = vunpack.c.l.b16 %v1961
  %v2601 = vunpack.c.h.b16 %v1961
  %v2602 = vunpack.c.l.b16 %v1962
  %v2603 = vunpack.c.h.b16 %v1962
  %v2604 = vunpack.c.l.b16 %v1963
  %v2605 = vunpack.c.h.b16 %v1963
  %v2606 = vunpack.c.l.b16 %v1964
  %v2607 = vunpack.c.h.b16 %v1964
  %v2608 = vunpack.c.l.b16 %v1965
  %v2609 = vunpack.c.h.b16 %v1965
  %v2610 = vunpack.c.l.b16 %v1966
  %v2611 = vunpack.c.h.b16 %v1966
  %v2612 = vunpack.c.l.b16 %v1967
  %v2613 = vunpack.c.h.b16 %v1967
  %v2614 = vunpack.c.l.b16 %v1968
  %v2615 = vunpack.c.h.b16 %v1968
  %v2616 = vunpack.c.l.b16 %v1969
  %v2617 = vunpack.c.h.b16 %v1969
  %v2618 = vunpack.c.l.b16 %v1970
  %v2619 = vunpack.c.h.b16 %v1970
  %v2620 = vunpack.c.l.b16 %v1971
  %v2621 = vunpack.c.h.b16 %v1971
  %v2622 = vunpack.c.l.b16 %v1972
  %v2623 = vunpack.c.h.b16 %v1972
  %v2624 = vunpack.c.l.b16 %v1973
  %v2625 = vunpack.c.h.b16 %v1973
  %v2626 = vunpack.c.l.b16 %v1974
  %v2627 = vunpack.c.h.b16 %v1974
  %v2628 = vunpack.c.l.b16 %v1975
  %v2629 = vunpack.c.h.b16 %v1975
  %v2630 = vunpack.c.l.b16 %v1976
  %v2631 = vunpack.c.h.b16 %v1976
  %v2632 = vunpack.c.l.b16 %v1977
  %v2633 = vunpack.c.h.b16 %v1977
  %v2634 = vunpack.c.l.b16 %v1978
  %v2635 = vunpack.c.h.b16 %v1978
  %v2636 = vunpack.c.l.b16 %v1979
  %v2637 = vunpack.c.h.b16 %v1979
  %v2638 = vunpack.c.l.b16 %v1980
  %v2639 = vunpack.c.h.b16 %v1980
  %v2640 = vpack.c.b16 %v2546, %v2544
  %v2641 = vpack.c.b16 %v2547, %v2545
  %v2642 = vpack.c.b16 %v2550, %v2548
  %v2643 = vpack.c.b16 %v2551, %v2549
  %v2644 = vpack.c.b16 %v2554, %v2552
  %v2645 = vpack.c.b16 %v2555, %v2553
  %v2646 = vpack.c.b16 %v2558, %v2556
  %v2647 = vpack.c.b16 %v2559, %v2557
  %v2648 = vpack.c.b16 %v2562, %v2560
  %v2649 = vpack.c.b16 %v2563, %v2561
  %v2650 = vpack.c.b16 %v2566, %v2564
  %v2651 = vpack.c.b16 %v2567, %v2565
  %v2652 = vpack.c.b16 %v2570, %v2568
  %v2653 = vpack.c.b16 %v2571, %v2569
  %v2654 = vpack.c.b16 %v2574, %v2572
  %v2655 = vpack.c.b16 %v2575, %v2573
  %v2656 = vpack.c.b16 %v2578, %v2576
  %v2657 = vpack.c.b16 %v2579, %v2577
  %v2658 = vpack.c.b16 %v2582, %v2580
  %v2659 = vpack.c.b16 %v2583, %v2581
  %v2660 = vpack.c.b16 %v2586, %v2584
  %v2661 = vpack.c.b16 %v2587, %v2585
  %v2662 = vpack.c.b16 %v2590, %v2588
  %v2663 = vpack.c.b16 %v2591, %v2589
  %v2664 = vpack.c.b16 %v2594, %v2592
  %v2665 = vpack.c.b16 %v2595, %v2593
  %v2666 = vpack.c.b16 %v2598, %v2596
  %v2667 = vpack.c.b16 %v2599, %v2597
  %v2668 = vpack.c.b16 %v2602, %v2600
  %v2669 = vpack.c.b16 %v2603, %v2601
  %v2670 = vpack.c.b16 %v2606, %v2604
  %v2671 = vpack.c.b16 %v2607, %v2605
  %v2672 = vpack.c.b16 %v2610, %v2608
  %v2673 = vpack.c.b16 %v2611, %v2609
  %v2674 = vpack.c.b16 %v2614, %v2612
  %v2675 = vpack.c.b16 %v2615, %v2613
  %v2676 = vpack.c.b16 %v2618, %v2616
  %v2677 = vpack.c.b16 %v2619, %v2617
  %v2678 = vpack.c.b16 %v2622, %v2620
  %v2679 = vpack.c.b16 %v2623, %v2621
  %v2680 = vpack.c.b16 %v2626, %v2624
  %v2681 = vpack.c.b16 %v2627, %v2625
  %v2682 = vpack.c.b16 %v2630, %v2628
  %v2683 = vpack.c.b16 %v2631, %v2629
  %v2684 = vpack.c.b16 %v2634, %v2632
  %v2685 = vpack.c.b16 %v2635, %v2633
  %v2686 = vpack.c.b16 %v2638, %v2636
  %v2687 = vpack.c.b16 %v2639, %v2637
  %2736 = vmatprep.subr.bf16.mxu0 %v2641
  %2737 = vmatpush1.bf16.msra.mxu0 %v2640
  %2738 = vmatprep.subr.bf16.mxu0 %v2643
  %2739 = vmatpush1.bf16.msra.mxu0 %v2642
  %2740 = vmatprep.subr.bf16.mxu0 %v2645
  %2741 = vmatpush1.bf16.msra.mxu0 %v2644
  %2742 = vmatprep.subr.bf16.mxu0 %v2647
  %2743 = vmatpush1.bf16.msra.mxu0 %v2646
  %2744 = vmatprep.subr.bf16.mxu0 %v2649
  %2745 = vmatpush1.bf16.msra.mxu0 %v2648
  %2746 = vmatprep.subr.bf16.mxu0 %v2651
  %2747 = vmatpush1.bf16.msra.mxu0 %v2650
  %2748 = vmatprep.subr.bf16.mxu0 %v2653
  %2749 = vmatpush1.bf16.msra.mxu0 %v2652
  %2750 = vmatprep.subr.bf16.mxu0 %v2655
  %2751 = vmatpush1.bf16.msra.mxu0 %v2654
  %2752 = vmatprep.subr.bf16.mxu0 %v2657
  %2753 = vmatpush1.bf16.msra.mxu0 %v2656
  %2754 = vmatprep.subr.bf16.mxu0 %v2659
  %2755 = vmatpush1.bf16.msra.mxu0 %v2658
  %2756 = vmatprep.subr.bf16.mxu0 %v2661
  %2757 = vmatpush1.bf16.msra.mxu0 %v2660
  %2758 = vmatprep.subr.bf16.mxu0 %v2663
  %2759 = vmatpush1.bf16.msra.mxu0 %v2662
  %2760 = vmatprep.subr.bf16.mxu0 %v2665
  %2761 = vmatpush1.bf16.msra.mxu0 %v2664
  %2762 = vmatprep.subr.bf16.mxu0 %v2667
  %2763 = vmatpush1.bf16.msra.mxu0 %v2666
  %2764 = vmatprep.subr.bf16.mxu0 %v2669
  %2765 = vmatpush1.bf16.msra.mxu0 %v2668
  %2766 = vmatprep.subr.bf16.mxu0 %v2671
  %2767 = vmatpush1.bf16.msra.mxu0 %v2670
  %2768 = vmatprep.mubr.bf16.mxu0 %v1898
  %2769 = vmatmul.mubr.bf16.gmra.mrb[0].mxu0 %v1897
  %v2770 = vpop.f32.mrb[0].mxu0
  %v2771 = vadd.f32 %v2418, %v2770
  %v2772 = vpop.f32.mrb[0].mxu0
  %v2773 = vadd.f32 %v2420, %v2772
  %v2774 = vpop.f32.mrb[0].mxu0
  %v2775 = vadd.f32 %v2422, %v2774
  %v2776 = vpop.f32.mrb[0].mxu0
  %v2777 = vadd.f32 %v2424, %v2776
  %2778 = vmatprep.mubr.bf16.mxu0 %v1901
  %2779 = vmatmul.mubr.bf16.gmra.mrb[0].mxu0 %v1900
  %v2780 = vpop.f32.mrb[0].mxu0
  %v2781 = vadd.f32 %v2428, %v2780
  %v2782 = vpop.f32.mrb[0].mxu0
  %v2783 = vadd.f32 %v2430, %v2782
  %v2784 = vpop.f32.mrb[0].mxu0
  %v2785 = vadd.f32 %v2432, %v2784
  %v2786 = vpop.f32.mrb[0].mxu0
  %v2787 = vadd.f32 %v2434, %v2786
  %2788 = vmatprep.mubr.bf16.mxu0 %v1904
  %2789 = vmatmul.mubr.bf16.gmra.mrb[0].mxu0 %v1903
  %v2790 = vpop.f32.mrb[0].mxu0
  %v2791 = vadd.f32 %v2438, %v2790
  %v2792 = vpop.f32.mrb[0].mxu0
  %v2793 = vadd.f32 %v2440, %v2792
  %v2794 = vpop.f32.mrb[0].mxu0
  %v2795 = vadd.f32 %v2442, %v2794
  %v2796 = vpop.f32.mrb[0].mxu0
  %v2797 = vadd.f32 %v2444, %v2796
  %2798 = vmatprep.mubr.bf16.mxu0 %v1907
  %2799 = vmatmul.mubr.bf16.gmra.mrb[0].mxu0 %v1906
  %v2800 = vpop.f32.mrb[0].mxu0
  %v2801 = vadd.f32 %v2448, %v2800
  %v2802 = vpop.f32.mrb[0].mxu0
  %v2803 = vadd.f32 %v2450, %v2802
  %v2804 = vpop.f32.mrb[0].mxu0
  %v2805 = vadd.f32 %v2452, %v2804
  %v2806 = vpop.f32.mrb[0].mxu0
  %v2807 = vadd.f32 %v2454, %v2806
  %2808 = vmatprep.mubr.bf16.mxu0 %v1910
  %2809 = vmatmul.mubr.bf16.gmra.mrb[0].mxu0 %v1909
  %v2810 = vpop.f32.mrb[0].mxu0
  %v2811 = vadd.f32 %v2458, %v2810
  %v2812 = vpop.f32.mrb[0].mxu0
  %v2813 = vadd.f32 %v2460, %v2812
  %v2814 = vpop.f32.mrb[0].mxu0
  %v2815 = vadd.f32 %v2462, %v2814
  %v2816 = vpop.f32.mrb[0].mxu0
  %v2817 = vadd.f32 %v2464, %v2816
  %2818 = vmatprep.mubr.bf16.mxu0 %v1913
  %2819 = vmatmul.mubr.bf16.gmra.mrb[0].mxu0 %v1912
  %v2820 = vpop.f32.mrb[0].mxu0
  %v2821 = vadd.f32 %v2468, %v2820
  %v2822 = vpop.f32.mrb[0].mxu0
  %v2823 = vadd.f32 %v2470, %v2822
  %v2824 = vpop.f32.mrb[0].mxu0
  %v2825 = vadd.f32 %v2472, %v2824
  %v2826 = vpop.f32.mrb[0].mxu0
  %v2827 = vadd.f32 %v2474, %v2826
  %2828 = vmatprep.mubr.bf16.mxu0 %v1916
  %2829 = vmatmul.mubr.bf16.gmra.mrb[0].mxu0 %v1915
  %v2830 = vpop.f32.mrb[0].mxu0
  %v2831 = vadd.f32 %v2478, %v2830
  %v2832 = vpop.f32.mrb[0].mxu0
  %v2833 = vadd.f32 %v2480, %v2832
  %v2834 = vpop.f32.mrb[0].mxu0
  %v2835 = vadd.f32 %v2482, %v2834
  %v2836 = vpop.f32.mrb[0].mxu0
  %v2837 = vadd.f32 %v2484, %v2836
  %2838 = vmatprep.mubr.bf16.mxu0 %v1919
  %2839 = vmatmul.mubr.bf16.gmra.mrb[0].mxu0 %v1918
  %v2840 = vpop.f32.mrb[0].mxu0
  %v2841 = vadd.f32 %v2488, %v2840
  %v2842 = vpop.f32.mrb[0].mxu0
  %v2843 = vadd.f32 %v2490, %v2842
  %v2844 = vpop.f32.mrb[0].mxu0
  %v2845 = vadd.f32 %v2492, %v2844
  %v2846 = vpop.f32.mrb[0].mxu0
  %v2847 = vadd.f32 %v2494, %v2846
  %2848 = vdwg.mxu0
  %2849 = vmatprep.subr.bf16.mxu0 %v2673
  %2850 = vmatpush1.bf16.msra.mxu0 %v2672
  %2851 = vmatprep.subr.bf16.mxu0 %v2675
  %2852 = vmatpush1.bf16.msra.mxu0 %v2674
  %2853 = vmatprep.subr.bf16.mxu0 %v2677
  %2854 = vmatpush1.bf16.msra.mxu0 %v2676
  %2855 = vmatprep.subr.bf16.mxu0 %v2679
  %2856 = vmatpush1.bf16.msra.mxu0 %v2678
  %2857 = vmatprep.subr.bf16.mxu0 %v2681
  %2858 = vmatpush1.bf16.msra.mxu0 %v2680
  %2859 = vmatprep.subr.bf16.mxu0 %v2683
  %2860 = vmatpush1.bf16.msra.mxu0 %v2682
  %2861 = vmatprep.subr.bf16.mxu0 %v2685
  %2862 = vmatpush1.bf16.msra.mxu0 %v2684
  %2863 = vmatprep.subr.bf16.mxu0 %v2687
  %2864 = vmatpush1.bf16.msra.mxu0 %v2686
  %2865 = vmatprep.subr.bf16.mxu0 0
  %2866 = vmatpush1.bf16.msra.mxu0 0
  %2867 = vmatprep.subr.bf16.mxu0 0
  %2868 = vmatpush1.bf16.msra.mxu0 0
  %2869 = vmatprep.subr.bf16.mxu0 0
  %2870 = vmatpush1.bf16.msra.mxu0 0
  %2871 = vmatprep.subr.bf16.mxu0 0
  %2872 = vmatpush1.bf16.msra.mxu0 0
  %2873 = vmatprep.subr.bf16.mxu0 0
  %2874 = vmatpush1.bf16.msra.mxu0 0
  %2875 = vmatprep.subr.bf16.mxu0 0
  %2876 = vmatpush1.bf16.msra.mxu0 0
  %2877 = vmatprep.subr.bf16.mxu0 0
  %2878 = vmatpush1.bf16.msra.mxu0 0
  %2879 = vmatprep.subr.bf16.mxu0 0
  %2880 = vmatpush1.bf16.msra.mxu0 0
  %2881 = vmatprep.mubr.bf16.mxu0 0
  %2882 = vmatmul.mubr.bf16.gmra.mrb[0].mxu0 %v1899
  %v2883 = vpop.f32.mrb[0].mxu0
  %v2884 = vadd.f32 %v2771, %v2883
  %v2885 = vpop.f32.mrb[0].mxu0
  %v2886 = vadd.f32 %v2773, %v2885
  %v2887 = vpop.f32.mrb[0].mxu0
  %v2888 = vadd.f32 %v2775, %v2887
  %v2889 = vpop.f32.mrb[0].mxu0
  %v2890 = vadd.f32 %v2777, %v2889
  %2891 = vmatprep.mubr.bf16.mxu0 0
  %2892 = vmatmul.mubr.bf16.gmra.mrb[0].mxu0 %v1902
  %v2893 = vpop.f32.mrb[0].mxu0
  %v2894 = vadd.f32 %v2781, %v2893
  %v2895 = vpop.f32.mrb[0].mxu0
  %v2896 = vadd.f32 %v2783, %v2895
  %v2897 = vpop.f32.mrb[0].mxu0
  %v2898 = vadd.f32 %v2785, %v2897
  %v2899 = vpop.f32.mrb[0].mxu0
  %v2900 = vadd.f32 %v2787, %v2899
  %2901 = vmatprep.mubr.bf16.mxu0 0
  %2902 = vmatmul.mubr.bf16.gmra.mrb[0].mxu0 %v1905
  %v2903 = vpop.f32.mrb[0].mxu0
  %v2904 = vadd.f32 %v2791, %v2903
  %v2905 = vpop.f32.mrb[0].mxu0
  %v2906 = vadd.f32 %v2793, %v2905
  %v2907 = vpop.f32.mrb[0].mxu0
  %v2908 = vadd.f32 %v2795, %v2907
  %v2909 = vpop.f32.mrb[0].mxu0
  %v2910 = vadd.f32 %v2797, %v2909
  %2911 = vmatprep.mubr.bf16.mxu0 0
  %2912 = vmatmul.mubr.bf16.gmra.mrb[0].mxu0 %v1908
  %v2913 = vpop.f32.mrb[0].mxu0
  %v2914 = vadd.f32 %v2801, %v2913
  %v2915 = vpop.f32.mrb[0].mxu0
  %v2916 = vadd.f32 %v2803, %v2915
  %v2917 = vpop.f32.mrb[0].mxu0
  %v2918 = vadd.f32 %v2805, %v2917
  %v2919 = vpop.f32.mrb[0].mxu0
  %v2920 = vadd.f32 %v2807, %v2919
  %2921 = vmatprep.mubr.bf16.mxu0 0
  %2922 = vmatmul.mubr.bf16.gmra.mrb[0].mxu0 %v1911
  %v2923 = vpop.f32.mrb[0].mxu0
  %v2924 = vadd.f32 %v2811, %v2923
  %v2925 = vpop.f32.mrb[0].mxu0
  %v2926 = vadd.f32 %v2813, %v2925
  %v2927 = vpop.f32.mrb[0].mxu0
  %v2928 = vadd.f32 %v2815, %v2927
  %v2929 = vpop.f32.mrb[0].mxu0
  %v2930 = vadd.f32 %v2817, %v2929
  %2931 = vmatprep.mubr.bf16.mxu0 0
  %2932 = vmatmul.mubr.bf16.gmra.mrb[0].mxu0 %v1914
  %v2933 = vpop.f32.mrb[0].mxu0
  %v2934 = vadd.f32 %v2821, %v2933
  %v2935 = vpop.f32.mrb[0].mxu0
  %v2936 = vadd.f32 %v2823, %v2935
  %v2937 = vpop.f32.mrb[0].mxu0
  %v2938 = vadd.f32 %v2825, %v2937
  %v2939 = vpop.f32.mrb[0].mxu0
  %v2940 = vadd.f32 %v2827, %v2939
  %2941 = vmatprep.mubr.bf16.mxu0 0
  %2942 = vmatmul.mubr.bf16.gmra.mrb[0].mxu0 %v1917
  %v2943 = vpop.f32.mrb[0].mxu0
  %v2944 = vadd.f32 %v2831, %v2943
  %v2945 = vpop.f32.mrb[0].mxu0
  %v2946 = vadd.f32 %v2833, %v2945
  %v2947 = vpop.f32.mrb[0].mxu0
  %v2948 = vadd.f32 %v2835, %v2947
  %v2949 = vpop.f32.mrb[0].mxu0
  %v2950 = vadd.f32 %v2837, %v2949
  %2951 = vmatprep.mubr.bf16.mxu0 0
  %2952 = vmatmul.mubr.bf16.gmra.mrb[0].mxu0 %v1920
  %v2953 = vpop.f32.mrb[0].mxu0
  %v2954 = vadd.f32 %v2841, %v2953
  %v2955 = vpop.f32.mrb[0].mxu0
  %v2956 = vadd.f32 %v2843, %v2955
  %v2957 = vpop.f32.mrb[0].mxu0
  %v2958 = vadd.f32 %v2845, %v2957
  %v2959 = vpop.f32.mrb[0].mxu0
  %v2960 = vadd.f32 %v2847, %v2959
  %2961 = vdwg.mxu0
  %s2962 = scalar_lea.vmem %s3, 768
  %v2963 = vld [vmem:[%s2962] sm:$0xff]
  %v2964 = vld [vmem:[%s2962 + $0x8] sm:$0xff]
  %v2965 = vld [vmem:[%s2962 + $0x10] sm:$0xff]
  %v2966 = vld [vmem:[%s2962 + $0x18] sm:$0xff]
  %v2967 = vld [vmem:[%s2962 + $0x20] sm:$0xff]
  %v2968 = vld [vmem:[%s2962 + $0x28] sm:$0xff]
  %v2969 = vld [vmem:[%s2962 + $0x30] sm:$0xff]
  %v2970 = vld [vmem:[%s2962 + $0x38] sm:$0xff]
  %v2971 = vld [vmem:[%s2962 + $0x40] sm:$0xff]
  %v2972 = vld [vmem:[%s2962 + $0x48] sm:$0xff]
  %v2973 = vld [vmem:[%s2962 + $0x50] sm:$0xff]
  %v2974 = vld [vmem:[%s2962 + $0x58] sm:$0xff]
  %v2975 = vld [vmem:[%s2962 + $0x60] sm:$0xff]
  %v2976 = vld [vmem:[%s2962 + $0x68] sm:$0xff]
  %v2977 = vld [vmem:[%s2962 + $0x70] sm:$0xff]
  %v2978 = vld [vmem:[%s2962 + $0x78] sm:$0xff]
  %v2979 = vld [vmem:[%s2962 + $0x80] sm:$0xff]
  %v2980 = vld [vmem:[%s2962 + $0x88] sm:$0xff]
  %v2981 = vld [vmem:[%s2962 + $0x90] sm:$0xff]
  %v2982 = vld [vmem:[%s2962 + $0x98] sm:$0xff]
  %v2983 = vld [vmem:[%s2962 + $0xa0] sm:$0xff]
  %v2984 = vld [vmem:[%s2962 + $0xa8] sm:$0xff]
  %v2985 = vld [vmem:[%s2962 + $0xb0] sm:$0xff]
  %v2986 = vld [vmem:[%s2962 + $0xb8] sm:$0xff]
  %v2987 = vld [vmem:[%s2962 + $0xc0] sm:$0xff]
  %v2988 = vld [vmem:[%s2962 + $0xc8] sm:$0xff]
  %v2989 = vld [vmem:[%s2962 + $0xd0] sm:$0xff]
  %v2990 = vld [vmem:[%s2962 + $0xd8] sm:$0xff]
  %v2991 = vld [vmem:[%s2962 + $0xe0] sm:$0xff]
  %v2992 = vld [vmem:[%s2962 + $0xe8] sm:$0xff]
  %v2993 = vld [vmem:[%s2962 + $0xf0] sm:$0xff]
  %v2994 = vld [vmem:[%s2962 + $0xf8] sm:$0xff]
  %v2995 = vld [vmem:[%s2962 + $0x100] sm:$0xff]
  %v2996 = vld [vmem:[%s2962 + $0x108] sm:$0xff]
  %v2997 = vld [vmem:[%s2962 + $0x110] sm:$0xff]
  %v2998 = vld [vmem:[%s2962 + $0x118] sm:$0xff]
  %v2999 = vld [vmem:[%s2962 + $0x120] sm:$0xff]
  %v3000 = vld [vmem:[%s2962 + $0x128] sm:$0xff]
  %v3001 = vld [vmem:[%s2962 + $0x130] sm:$0xff]
  %v3002 = vld [vmem:[%s2962 + $0x138] sm:$0xff]
  %v3003 = vld [vmem:[%s2962 + $0x140] sm:$0xff]
  %v3004 = vld [vmem:[%s2962 + $0x148] sm:$0xff]
  %v3005 = vld [vmem:[%s2962 + $0x150] sm:$0xff]
  %v3006 = vld [vmem:[%s2962 + $0x158] sm:$0xff]
  %v3007 = vld [vmem:[%s2962 + $0x160] sm:$0xff]
  %v3008 = vld [vmem:[%s2962 + $0x168] sm:$0xff]
  %v3009 = vld [vmem:[%s2962 + $0x170] sm:$0xff]
  %v3010 = vld [vmem:[%s2962 + $0x178] sm:$0xff]
  %v3059 = vunpack.c.l.b16 %v2963
  %v3060 = vunpack.c.h.b16 %v2963
  %v3061 = vunpack.c.l.b16 %v2964
  %v3062 = vunpack.c.h.b16 %v2964
  %v3063 = vunpack.c.l.b16 %v2965
  %v3064 = vunpack.c.h.b16 %v2965
  %v3065 = vunpack.c.l.b16 %v2966
  %v3066 = vunpack.c.h.b16 %v2966
  %v3067 = vunpack.c.l.b16 %v2967
  %v3068 = vunpack.c.h.b16 %v2967
  %v3069 = vunpack.c.l.b16 %v2968
  %v3070 = vunpack.c.h.b16 %v2968
  %v3071 = vunpack.c.l.b16 %v2969
  %v3072 = vunpack.c.h.b16 %v2969
  %v3073 = vunpack.c.l.b16 %v2970
  %v3074 = vunpack.c.h.b16 %v2970
  %v3075 = vunpack.c.l.b16 %v2971
  %v3076 = vunpack.c.h.b16 %v2971
  %v3077 = vunpack.c.l.b16 %v2972
  %v3078 = vunpack.c.h.b16 %v2972
  %v3079 = vunpack.c.l.b16 %v2973
  %v3080 = vunpack.c.h.b16 %v2973
  %v3081 = vunpack.c.l.b16 %v2974
  %v3082 = vunpack.c.h.b16 %v2974
  %v3083 = vunpack.c.l.b16 %v2975
  %v3084 = vunpack.c.h.b16 %v2975
  %v3085 = vunpack.c.l.b16 %v2976
  %v3086 = vunpack.c.h.b16 %v2976
  %v3087 = vunpack.c.l.b16 %v2977
  %v3088 = vunpack.c.h.b16 %v2977
  %v3089 = vunpack.c.l.b16 %v2978
  %v3090 = vunpack.c.h.b16 %v2978
  %v3091 = vunpack.c.l.b16 %v2979
  %v3092 = vunpack.c.h.b16 %v2979
  %v3093 = vunpack.c.l.b16 %v2980
  %v3094 = vunpack.c.h.b16 %v2980
  %v3095 = vunpack.c.l.b16 %v2981
  %v3096 = vunpack.c.h.b16 %v2981
  %v3097 = vunpack.c.l.b16 %v2982
  %v3098 = vunpack.c.h.b16 %v2982
  %v3099 = vunpack.c.l.b16 %v2983
  %v3100 = vunpack.c.h.b16 %v2983
  %v3101 = vunpack.c.l.b16 %v2984
  %v3102 = vunpack.c.h.b16 %v2984
  %v3103 = vunpack.c.l.b16 %v2985
  %v3104 = vunpack.c.h.b16 %v2985
  %v3105 = vunpack.c.l.b16 %v2986
  %v3106 = vunpack.c.h.b16 %v2986
  %v3107 = vunpack.c.l.b16 %v2987
  %v3108 = vunpack.c.h.b16 %v2987
  %v3109 = vunpack.c.l.b16 %v2988
  %v3110 = vunpack.c.h.b16 %v2988
  %v3111 = vunpack.c.l.b16 %v2989
  %v3112 = vunpack.c.h.b16 %v2989
  %v3113 = vunpack.c.l.b16 %v2990
  %v3114 = vunpack.c.h.b16 %v2990
  %v3115 = vunpack.c.l.b16 %v2991
  %v3116 = vunpack.c.h.b16 %v2991
  %v3117 = vunpack.c.l.b16 %v2992
  %v3118 = vunpack.c.h.b16 %v2992
  %v3119 = vunpack.c.l.b16 %v2993
  %v3120 = vunpack.c.h.b16 %v2993
  %v3121 = vunpack.c.l.b16 %v2994
  %v3122 = vunpack.c.h.b16 %v2994
  %v3123 = vunpack.c.l.b16 %v2995
  %v3124 = vunpack.c.h.b16 %v2995
  %v3125 = vunpack.c.l.b16 %v2996
  %v3126 = vunpack.c.h.b16 %v2996
  %v3127 = vunpack.c.l.b16 %v2997
  %v3128 = vunpack.c.h.b16 %v2997
  %v3129 = vunpack.c.l.b16 %v2998
  %v3130 = vunpack.c.h.b16 %v2998
  %v3131 = vunpack.c.l.b16 %v2999
  %v3132 = vunpack.c.h.b16 %v2999
  %v3133 = vunpack.c.l.b16 %v3000
  %v3134 = vunpack.c.h.b16 %v3000
  %v3135 = vunpack.c.l.b16 %v3001
  %v3136 = vunpack.c.h.b16 %v3001
  %v3137 = vunpack.c.l.b16 %v3002
  %v3138 = vunpack.c.h.b16 %v3002
  %v3139 = vunpack.c.l.b16 %v3003
  %v3140 = vunpack.c.h.b16 %v3003
  %v3141 = vunpack.c.l.b16 %v3004
  %v3142 = vunpack.c.h.b16 %v3004
  %v3143 = vunpack.c.l.b16 %v3005
  %v3144 = vunpack.c.h.b16 %v3005
  %v3145 = vunpack.c.l.b16 %v3006
  %v3146 = vunpack.c.h.b16 %v3006
  %v3147 = vunpack.c.l.b16 %v3007
  %v3148 = vunpack.c.h.b16 %v3007
  %v3149 = vunpack.c.l.b16 %v3008
  %v3150 = vunpack.c.h.b16 %v3008
  %v3151 = vunpack.c.l.b16 %v3009
  %v3152 = vunpack.c.h.b16 %v3009
  %v3153 = vunpack.c.l.b16 %v3010
  %v3154 = vunpack.c.h.b16 %v3010
  %v3155 = vpack.c.b16 %v3061, %v3059
  %v3156 = vpack.c.b16 %v3062, %v3060
  %v3157 = vpack.c.b16 %v3065, %v3063
  %v3158 = vpack.c.b16 %v3066, %v3064
  %v3159 = vpack.c.b16 %v3069, %v3067
  %v3160 = vpack.c.b16 %v3070, %v3068
  %v3161 = vpack.c.b16 %v3073, %v3071
  %v3162 = vpack.c.b16 %v3074, %v3072
  %v3163 = vpack.c.b16 %v3077, %v3075
  %v3164 = vpack.c.b16 %v3078, %v3076
  %v3165 = vpack.c.b16 %v3081, %v3079
  %v3166 = vpack.c.b16 %v3082, %v3080
  %v3167 = vpack.c.b16 %v3085, %v3083
  %v3168 = vpack.c.b16 %v3086, %v3084
  %v3169 = vpack.c.b16 %v3089, %v3087
  %v3170 = vpack.c.b16 %v3090, %v3088
  %v3171 = vpack.c.b16 %v3093, %v3091
  %v3172 = vpack.c.b16 %v3094, %v3092
  %v3173 = vpack.c.b16 %v3097, %v3095
  %v3174 = vpack.c.b16 %v3098, %v3096
  %v3175 = vpack.c.b16 %v3101, %v3099
  %v3176 = vpack.c.b16 %v3102, %v3100
  %v3177 = vpack.c.b16 %v3105, %v3103
  %v3178 = vpack.c.b16 %v3106, %v3104
  %v3179 = vpack.c.b16 %v3109, %v3107
  %v3180 = vpack.c.b16 %v3110, %v3108
  %v3181 = vpack.c.b16 %v3113, %v3111
  %v3182 = vpack.c.b16 %v3114, %v3112
  %v3183 = vpack.c.b16 %v3117, %v3115
  %v3184 = vpack.c.b16 %v3118, %v3116
  %v3185 = vpack.c.b16 %v3121, %v3119
  %v3186 = vpack.c.b16 %v3122, %v3120
  %v3187 = vpack.c.b16 %v3125, %v3123
  %v3188 = vpack.c.b16 %v3126, %v3124
  %v3189 = vpack.c.b16 %v3129, %v3127
  %v3190 = vpack.c.b16 %v3130, %v3128
  %v3191 = vpack.c.b16 %v3133, %v3131
  %v3192 = vpack.c.b16 %v3134, %v3132
  %v3193 = vpack.c.b16 %v3137, %v3135
  %v3194 = vpack.c.b16 %v3138, %v3136
  %v3195 = vpack.c.b16 %v3141, %v3139
  %v3196 = vpack.c.b16 %v3142, %v3140
  %v3197 = vpack.c.b16 %v3145, %v3143
  %v3198 = vpack.c.b16 %v3146, %v3144
  %v3199 = vpack.c.b16 %v3149, %v3147
  %v3200 = vpack.c.b16 %v3150, %v3148
  %v3201 = vpack.c.b16 %v3153, %v3151
  %v3202 = vpack.c.b16 %v3154, %v3152
  %3251 = vmatprep.subr.bf16.mxu0 %v3156
  %3252 = vmatpush1.bf16.msra.mxu0 %v3155
  %3253 = vmatprep.subr.bf16.mxu0 %v3158
  %3254 = vmatpush1.bf16.msra.mxu0 %v3157
  %3255 = vmatprep.subr.bf16.mxu0 %v3160
  %3256 = vmatpush1.bf16.msra.mxu0 %v3159
  %3257 = vmatprep.subr.bf16.mxu0 %v3162
  %3258 = vmatpush1.bf16.msra.mxu0 %v3161
  %3259 = vmatprep.subr.bf16.mxu0 %v3164
  %3260 = vmatpush1.bf16.msra.mxu0 %v3163
  %3261 = vmatprep.subr.bf16.mxu0 %v3166
  %3262 = vmatpush1.bf16.msra.mxu0 %v3165
  %3263 = vmatprep.subr.bf16.mxu0 %v3168
  %3264 = vmatpush1.bf16.msra.mxu0 %v3167
  %3265 = vmatprep.subr.bf16.mxu0 %v3170
  %3266 = vmatpush1.bf16.msra.mxu0 %v3169
  %3267 = vmatprep.subr.bf16.mxu0 %v3172
  %3268 = vmatpush1.bf16.msra.mxu0 %v3171
  %3269 = vmatprep.subr.bf16.mxu0 %v3174
  %3270 = vmatpush1.bf16.msra.mxu0 %v3173
  %3271 = vmatprep.subr.bf16.mxu0 %v3176
  %3272 = vmatpush1.bf16.msra.mxu0 %v3175
  %3273 = vmatprep.subr.bf16.mxu0 %v3178
  %3274 = vmatpush1.bf16.msra.mxu0 %v3177
  %3275 = vmatprep.subr.bf16.mxu0 %v3180
  %3276 = vmatpush1.bf16.msra.mxu0 %v3179
  %3277 = vmatprep.subr.bf16.mxu0 %v3182
  %3278 = vmatpush1.bf16.msra.mxu0 %v3181
  %3279 = vmatprep.subr.bf16.mxu0 %v3184
  %3280 = vmatpush1.bf16.msra.mxu0 %v3183
  %3281 = vmatprep.subr.bf16.mxu0 %v3186
  %3282 = vmatpush1.bf16.msra.mxu0 %v3185
  %3283 = vmatprep.mubr.bf16.mxu0 %v1904
  %3284 = vmatmul.mubr.bf16.gmra.mrb[0].mxu0 %v1903
  %v3285 = vpop.f32.mrb[0].mxu0
  %v3286 = vadd.f32 0.0, %v3285
  %v3287 = vpop.f32.mrb[0].mxu0
  %v3288 = vadd.f32 0.0, %v3287
  %v3289 = vpop.f32.mrb[0].mxu0
  %v3290 = vadd.f32 0.0, %v3289
  %v3291 = vpop.f32.mrb[0].mxu0
  %v3292 = vadd.f32 0.0, %v3291
  %3293 = vmatprep.mubr.bf16.mxu0 %v1907
  %3294 = vmatmul.mubr.bf16.gmra.mrb[0].mxu0 %v1906
  %v3295 = vpop.f32.mrb[0].mxu0
  %v3296 = vadd.f32 0.0, %v3295
  %v3297 = vpop.f32.mrb[0].mxu0
  %v3298 = vadd.f32 0.0, %v3297
  %v3299 = vpop.f32.mrb[0].mxu0
  %v3300 = vadd.f32 0.0, %v3299
  %v3301 = vpop.f32.mrb[0].mxu0
  %v3302 = vadd.f32 0.0, %v3301
  %3303 = vmatprep.mubr.bf16.mxu0 %v1910
  %3304 = vmatmul.mubr.bf16.gmra.mrb[0].mxu0 %v1909
  %v3305 = vpop.f32.mrb[0].mxu0
  %v3306 = vadd.f32 0.0, %v3305
  %v3307 = vpop.f32.mrb[0].mxu0
  %v3308 = vadd.f32 0.0, %v3307
  %v3309 = vpop.f32.mrb[0].mxu0
  %v3310 = vadd.f32 0.0, %v3309
  %v3311 = vpop.f32.mrb[0].mxu0
  %v3312 = vadd.f32 0.0, %v3311
  %3313 = vmatprep.mubr.bf16.mxu0 %v1913
  %3314 = vmatmul.mubr.bf16.gmra.mrb[0].mxu0 %v1912
  %v3315 = vpop.f32.mrb[0].mxu0
  %v3316 = vadd.f32 0.0, %v3315
  %v3317 = vpop.f32.mrb[0].mxu0
  %v3318 = vadd.f32 0.0, %v3317
  %v3319 = vpop.f32.mrb[0].mxu0
  %v3320 = vadd.f32 0.0, %v3319
  %v3321 = vpop.f32.mrb[0].mxu0
  %v3322 = vadd.f32 0.0, %v3321
  %3323 = vmatprep.mubr.bf16.mxu0 %v1916
  %3324 = vmatmul.mubr.bf16.gmra.mrb[0].mxu0 %v1915
  %v3325 = vpop.f32.mrb[0].mxu0
  %v3326 = vadd.f32 0.0, %v3325
  %v3327 = vpop.f32.mrb[0].mxu0
  %v3328 = vadd.f32 0.0, %v3327
  %v3329 = vpop.f32.mrb[0].mxu0
  %v3330 = vadd.f32 0.0, %v3329
  %v3331 = vpop.f32.mrb[0].mxu0
  %v3332 = vadd.f32 0.0, %v3331
  %3333 = vmatprep.mubr.bf16.mxu0 %v1919
  %3334 = vmatmul.mubr.bf16.gmra.mrb[0].mxu0 %v1918
  %v3335 = vpop.f32.mrb[0].mxu0
  %v3336 = vadd.f32 0.0, %v3335
  %v3337 = vpop.f32.mrb[0].mxu0
  %v3338 = vadd.f32 0.0, %v3337
  %v3339 = vpop.f32.mrb[0].mxu0
  %v3340 = vadd.f32 0.0, %v3339
  %v3341 = vpop.f32.mrb[0].mxu0
  %v3342 = vadd.f32 0.0, %v3341
  %3343 = vmatprep.mubr.bf16.mxu0 %v1922
  %3344 = vmatmul.mubr.bf16.gmra.mrb[0].mxu0 %v1921
  %v3345 = vpop.f32.mrb[0].mxu0
  %v3346 = vadd.f32 0.0, %v3345
  %v3347 = vpop.f32.mrb[0].mxu0
  %v3348 = vadd.f32 0.0, %v3347
  %v3349 = vpop.f32.mrb[0].mxu0
  %v3350 = vadd.f32 0.0, %v3349
  %v3351 = vpop.f32.mrb[0].mxu0
  %v3352 = vadd.f32 0.0, %v3351
  %3353 = vmatprep.mubr.bf16.mxu0 %v1925
  %3354 = vmatmul.mubr.bf16.gmra.mrb[0].mxu0 %v1924
  %v3355 = vpop.f32.mrb[0].mxu0
  %v3356 = vadd.f32 0.0, %v3355
  %v3357 = vpop.f32.mrb[0].mxu0
  %v3358 = vadd.f32 0.0, %v3357
  %v3359 = vpop.f32.mrb[0].mxu0
  %v3360 = vadd.f32 0.0, %v3359
  %v3361 = vpop.f32.mrb[0].mxu0
  %v3362 = vadd.f32 0.0, %v3361
  %3363 = vdwg.mxu0
  %3364 = vmatprep.subr.bf16.mxu0 %v3188
  %3365 = vmatpush1.bf16.msra.mxu0 %v3187
  %3366 = vmatprep.subr.bf16.mxu0 %v3190
  %3367 = vmatpush1.bf16.msra.mxu0 %v3189
  %3368 = vmatprep.subr.bf16.mxu0 %v3192
  %3369 = vmatpush1.bf16.msra.mxu0 %v3191
  %3370 = vmatprep.subr.bf16.mxu0 %v3194
  %3371 = vmatpush1.bf16.msra.mxu0 %v3193
  %3372 = vmatprep.subr.bf16.mxu0 %v3196
  %3373 = vmatpush1.bf16.msra.mxu0 %v3195
  %3374 = vmatprep.subr.bf16.mxu0 %v3198
  %3375 = vmatpush1.bf16.msra.mxu0 %v3197
  %3376 = vmatprep.subr.bf16.mxu0 %v3200
  %3377 = vmatpush1.bf16.msra.mxu0 %v3199
  %3378 = vmatprep.subr.bf16.mxu0 %v3202
  %3379 = vmatpush1.bf16.msra.mxu0 %v3201
  %3380 = vmatprep.subr.bf16.mxu0 0
  %3381 = vmatpush1.bf16.msra.mxu0 0
  %3382 = vmatprep.subr.bf16.mxu0 0
  %3383 = vmatpush1.bf16.msra.mxu0 0
  %3384 = vmatprep.subr.bf16.mxu0 0
  %3385 = vmatpush1.bf16.msra.mxu0 0
  %3386 = vmatprep.subr.bf16.mxu0 0
  %3387 = vmatpush1.bf16.msra.mxu0 0
  %3388 = vmatprep.subr.bf16.mxu0 0
  %3389 = vmatpush1.bf16.msra.mxu0 0
  %3390 = vmatprep.subr.bf16.mxu0 0
  %3391 = vmatpush1.bf16.msra.mxu0 0
  %3392 = vmatprep.subr.bf16.mxu0 0
  %3393 = vmatpush1.bf16.msra.mxu0 0
  %3394 = vmatprep.subr.bf16.mxu0 0
  %3395 = vmatpush1.bf16.msra.mxu0 0
  %3396 = vmatprep.mubr.bf16.mxu0 0
  %3397 = vmatmul.mubr.bf16.gmra.mrb[0].mxu0 %v1905
  %v3398 = vpop.f32.mrb[0].mxu0
  %v3399 = vadd.f32 %v3286, %v3398
  %v3400 = vpop.f32.mrb[0].mxu0
  %v3401 = vadd.f32 %v3288, %v3400
  %v3402 = vpop.f32.mrb[0].mxu0
  %v3403 = vadd.f32 %v3290, %v3402
  %v3404 = vpop.f32.mrb[0].mxu0
  %v3405 = vadd.f32 %v3292, %v3404
  %3406 = vmatprep.mubr.bf16.mxu0 0
  %3407 = vmatmul.mubr.bf16.gmra.mrb[0].mxu0 %v1908
  %v3408 = vpop.f32.mrb[0].mxu0
  %v3409 = vadd.f32 %v3296, %v3408
  %v3410 = vpop.f32.mrb[0].mxu0
  %v3411 = vadd.f32 %v3298, %v3410
  %v3412 = vpop.f32.mrb[0].mxu0
  %v3413 = vadd.f32 %v3300, %v3412
  %v3414 = vpop.f32.mrb[0].mxu0
  %v3415 = vadd.f32 %v3302, %v3414
  %3416 = vmatprep.mubr.bf16.mxu0 0
  %3417 = vmatmul.mubr.bf16.gmra.mrb[0].mxu0 %v1911
  %v3418 = vpop.f32.mrb[0].mxu0
  %v3419 = vadd.f32 %v3306, %v3418
  %v3420 = vpop.f32.mrb[0].mxu0
  %v3421 = vadd.f32 %v3308, %v3420
  %v3422 = vpop.f32.mrb[0].mxu0
  %v3423 = vadd.f32 %v3310, %v3422
  %v3424 = vpop.f32.mrb[0].mxu0
  %v3425 = vadd.f32 %v3312, %v3424
  %3426 = vmatprep.mubr.bf16.mxu0 0
  %3427 = vmatmul.mubr.bf16.gmra.mrb[0].mxu0 %v1914
  %v3428 = vpop.f32.mrb[0].mxu0
  %v3429 = vadd.f32 %v3316, %v3428
  %v3430 = vpop.f32.mrb[0].mxu0
  %v3431 = vadd.f32 %v3318, %v3430
  %v3432 = vpop.f32.mrb[0].mxu0
  %v3433 = vadd.f32 %v3320, %v3432
  %v3434 = vpop.f32.mrb[0].mxu0
  %v3435 = vadd.f32 %v3322, %v3434
  %3436 = vmatprep.mubr.bf16.mxu0 0
  %3437 = vmatmul.mubr.bf16.gmra.mrb[0].mxu0 %v1917
  %v3438 = vpop.f32.mrb[0].mxu0
  %v3439 = vadd.f32 %v3326, %v3438
  %v3440 = vpop.f32.mrb[0].mxu0
  %v3441 = vadd.f32 %v3328, %v3440
  %v3442 = vpop.f32.mrb[0].mxu0
  %v3443 = vadd.f32 %v3330, %v3442
  %v3444 = vpop.f32.mrb[0].mxu0
  %v3445 = vadd.f32 %v3332, %v3444
  %3446 = vmatprep.mubr.bf16.mxu0 0
  %3447 = vmatmul.mubr.bf16.gmra.mrb[0].mxu0 %v1920
  %v3448 = vpop.f32.mrb[0].mxu0
  %v3449 = vadd.f32 %v3336, %v3448
  %v3450 = vpop.f32.mrb[0].mxu0
  %v3451 = vadd.f32 %v3338, %v3450
  %v3452 = vpop.f32.mrb[0].mxu0
  %v3453 = vadd.f32 %v3340, %v3452
  %v3454 = vpop.f32.mrb[0].mxu0
  %v3455 = vadd.f32 %v3342, %v3454
  %3456 = vmatprep.mubr.bf16.mxu0 0
  %3457 = vmatmul.mubr.bf16.gmra.mrb[0].mxu0 %v1923
  %v3458 = vpop.f32.mrb[0].mxu0
  %v3459 = vadd.f32 %v3346, %v3458
  %v3460 = vpop.f32.mrb[0].mxu0
  %v3461 = vadd.f32 %v3348, %v3460
  %v3462 = vpop.f32.mrb[0].mxu0
  %v3463 = vadd.f32 %v3350, %v3462
  %v3464 = vpop.f32.mrb[0].mxu0
  %v3465 = vadd.f32 %v3352, %v3464
  %3466 = vmatprep.mubr.bf16.mxu0 0
  %3467 = vmatmul.mubr.bf16.gmra.mrb[0].mxu0 %v1926
  %v3468 = vpop.f32.mrb[0].mxu0
  %v3469 = vadd.f32 %v3356, %v3468
  %v3470 = vpop.f32.mrb[0].mxu0
  %v3471 = vadd.f32 %v3358, %v3470
  %v3472 = vpop.f32.mrb[0].mxu0
  %v3473 = vadd.f32 %v3360, %v3472
  %v3474 = vpop.f32.mrb[0].mxu0
  %v3475 = vadd.f32 %v3362, %v3474
  %3476 = vdwg.mxu0
  %v3477 = vadd.f32 %v2884, %v3399
  %v3478 = vadd.f32 %v2886, %v3401
  %v3479 = vadd.f32 %v2888, %v3403
  %v3480 = vadd.f32 %v2890, %v3405
  %v3481 = vadd.f32 %v2894, %v3409
  %v3482 = vadd.f32 %v2896, %v3411
  %v3483 = vadd.f32 %v2898, %v3413
  %v3484 = vadd.f32 %v2900, %v3415
  %v3485 = vadd.f32 %v2904, %v3419
  %v3486 = vadd.f32 %v2906, %v3421
  %v3487 = vadd.f32 %v2908, %v3423
  %v3488 = vadd.f32 %v2910, %v3425
  %v3489 = vadd.f32 %v2914, %v3429
  %v3490 = vadd.f32 %v2916, %v3431
  %v3491 = vadd.f32 %v2918, %v3433
  %v3492 = vadd.f32 %v2920, %v3435
  %v3493 = vadd.f32 %v2924, %v3439
  %v3494 = vadd.f32 %v2926, %v3441
  %v3495 = vadd.f32 %v2928, %v3443
  %v3496 = vadd.f32 %v2930, %v3445
  %v3497 = vadd.f32 %v2934, %v3449
  %v3498 = vadd.f32 %v2936, %v3451
  %v3499 = vadd.f32 %v2938, %v3453
  %v3500 = vadd.f32 %v2940, %v3455
  %v3501 = vadd.f32 %v2944, %v3459
  %v3502 = vadd.f32 %v2946, %v3461
  %v3503 = vadd.f32 %v2948, %v3463
  %v3504 = vadd.f32 %v2950, %v3465
  %v3505 = vadd.f32 %v2954, %v3469
  %v3506 = vadd.f32 %v2956, %v3471
  %v3507 = vadd.f32 %v2958, %v3473
  %v3508 = vadd.f32 %v2960, %v3475
  %s3509 = scalar_lea.vmem %s3, 1152
  %v3510 = vld [vmem:[%s3509] sm:$0xff]
  %v3511 = vld [vmem:[%s3509 + $0x8] sm:$0xff]
  %v3512 = vld [vmem:[%s3509 + $0x10] sm:$0xff]
  %v3513 = vld [vmem:[%s3509 + $0x18] sm:$0xff]
  %v3514 = vld [vmem:[%s3509 + $0x20] sm:$0xff]
  %v3515 = vld [vmem:[%s3509 + $0x28] sm:$0xff]
  %v3516 = vld [vmem:[%s3509 + $0x30] sm:$0xff]
  %v3517 = vld [vmem:[%s3509 + $0x38] sm:$0xff]
  %v3518 = vld [vmem:[%s3509 + $0x40] sm:$0xff]
  %v3519 = vld [vmem:[%s3509 + $0x48] sm:$0xff]
  %v3520 = vld [vmem:[%s3509 + $0x50] sm:$0xff]
  %v3521 = vld [vmem:[%s3509 + $0x58] sm:$0xff]
  %v3522 = vld [vmem:[%s3509 + $0x60] sm:$0xff]
  %v3523 = vld [vmem:[%s3509 + $0x68] sm:$0xff]
  %v3524 = vld [vmem:[%s3509 + $0x70] sm:$0xff]
  %v3525 = vld [vmem:[%s3509 + $0x78] sm:$0xff]
  %v3526 = vld [vmem:[%s3509 + $0x80] sm:$0xff]
  %v3527 = vld [vmem:[%s3509 + $0x88] sm:$0xff]
  %v3528 = vld [vmem:[%s3509 + $0x90] sm:$0xff]
  %v3529 = vld [vmem:[%s3509 + $0x98] sm:$0xff]
  %v3530 = vld [vmem:[%s3509 + $0xa0] sm:$0xff]
  %v3531 = vld [vmem:[%s3509 + $0xa8] sm:$0xff]
  %v3532 = vld [vmem:[%s3509 + $0xb0] sm:$0xff]
  %v3533 = vld [vmem:[%s3509 + $0xb8] sm:$0xff]
  %v3534 = vld [vmem:[%s3509 + $0xc0] sm:$0xff]
  %v3535 = vld [vmem:[%s3509 + $0xc8] sm:$0xff]
  %v3536 = vld [vmem:[%s3509 + $0xd0] sm:$0xff]
  %v3537 = vld [vmem:[%s3509 + $0xd8] sm:$0xff]
  %v3538 = vld [vmem:[%s3509 + $0xe0] sm:$0xff]
  %v3539 = vld [vmem:[%s3509 + $0xe8] sm:$0xff]
  %v3540 = vld [vmem:[%s3509 + $0xf0] sm:$0xff]
  %v3541 = vld [vmem:[%s3509 + $0xf8] sm:$0xff]
  %v3542 = vld [vmem:[%s3509 + $0x100] sm:$0xff]
  %v3543 = vld [vmem:[%s3509 + $0x108] sm:$0xff]
  %v3544 = vld [vmem:[%s3509 + $0x110] sm:$0xff]
  %v3545 = vld [vmem:[%s3509 + $0x118] sm:$0xff]
  %v3546 = vld [vmem:[%s3509 + $0x120] sm:$0xff]
  %v3547 = vld [vmem:[%s3509 + $0x128] sm:$0xff]
  %v3548 = vld [vmem:[%s3509 + $0x130] sm:$0xff]
  %v3549 = vld [vmem:[%s3509 + $0x138] sm:$0xff]
  %v3550 = vld [vmem:[%s3509 + $0x140] sm:$0xff]
  %v3551 = vld [vmem:[%s3509 + $0x148] sm:$0xff]
  %v3552 = vld [vmem:[%s3509 + $0x150] sm:$0xff]
  %v3553 = vld [vmem:[%s3509 + $0x158] sm:$0xff]
  %v3554 = vld [vmem:[%s3509 + $0x160] sm:$0xff]
  %v3555 = vld [vmem:[%s3509 + $0x168] sm:$0xff]
  %v3556 = vld [vmem:[%s3509 + $0x170] sm:$0xff]
  %v3557 = vld [vmem:[%s3509 + $0x178] sm:$0xff]
  %v3606 = vunpack.c.l.b16 %v3510
  %v3607 = vunpack.c.h.b16 %v3510
  %v3608 = vunpack.c.l.b16 %v3511
  %v3609 = vunpack.c.h.b16 %v3511
  %v3610 = vunpack.c.l.b16 %v3512
  %v3611 = vunpack.c.h.b16 %v3512
  %v3612 = vunpack.c.l.b16 %v3513
  %v3613 = vunpack.c.h.b16 %v3513
  %v3614 = vunpack.c.l.b16 %v3514
  %v3615 = vunpack.c.h.b16 %v3514
  %v3616 = vunpack.c.l.b16 %v3515
  %v3617 = vunpack.c.h.b16 %v3515
  %v3618 = vunpack.c.l.b16 %v3516
  %v3619 = vunpack.c.h.b16 %v3516
  %v3620 = vunpack.c.l.b16 %v3517
  %v3621 = vunpack.c.h.b16 %v3517
  %v3622 = vunpack.c.l.b16 %v3518
  %v3623 = vunpack.c.h.b16 %v3518
  %v3624 = vunpack.c.l.b16 %v3519
  %v3625 = vunpack.c.h.b16 %v3519
  %v3626 = vunpack.c.l.b16 %v3520
  %v3627 = vunpack.c.h.b16 %v3520
  %v3628 = vunpack.c.l.b16 %v3521
  %v3629 = vunpack.c.h.b16 %v3521
  %v3630 = vunpack.c.l.b16 %v3522
  %v3631 = vunpack.c.h.b16 %v3522
  %v3632 = vunpack.c.l.b16 %v3523
  %v3633 = vunpack.c.h.b16 %v3523
  %v3634 = vunpack.c.l.b16 %v3524
  %v3635 = vunpack.c.h.b16 %v3524
  %v3636 = vunpack.c.l.b16 %v3525
  %v3637 = vunpack.c.h.b16 %v3525
  %v3638 = vunpack.c.l.b16 %v3526
  %v3639 = vunpack.c.h.b16 %v3526
  %v3640 = vunpack.c.l.b16 %v3527
  %v3641 = vunpack.c.h.b16 %v3527
  %v3642 = vunpack.c.l.b16 %v3528
  %v3643 = vunpack.c.h.b16 %v3528
  %v3644 = vunpack.c.l.b16 %v3529
  %v3645 = vunpack.c.h.b16 %v3529
  %v3646 = vunpack.c.l.b16 %v3530
  %v3647 = vunpack.c.h.b16 %v3530
  %v3648 = vunpack.c.l.b16 %v3531
  %v3649 = vunpack.c.h.b16 %v3531
  %v3650 = vunpack.c.l.b16 %v3532
  %v3651 = vunpack.c.h.b16 %v3532
  %v3652 = vunpack.c.l.b16 %v3533
  %v3653 = vunpack.c.h.b16 %v3533
  %v3654 = vunpack.c.l.b16 %v3534
  %v3655 = vunpack.c.h.b16 %v3534
  %v3656 = vunpack.c.l.b16 %v3535
  %v3657 = vunpack.c.h.b16 %v3535
  %v3658 = vunpack.c.l.b16 %v3536
  %v3659 = vunpack.c.h.b16 %v3536
  %v3660 = vunpack.c.l.b16 %v3537
  %v3661 = vunpack.c.h.b16 %v3537
  %v3662 = vunpack.c.l.b16 %v3538
  %v3663 = vunpack.c.h.b16 %v3538
  %v3664 = vunpack.c.l.b16 %v3539
  %v3665 = vunpack.c.h.b16 %v3539
  %v3666 = vunpack.c.l.b16 %v3540
  %v3667 = vunpack.c.h.b16 %v3540
  %v3668 = vunpack.c.l.b16 %v3541
  %v3669 = vunpack.c.h.b16 %v3541
  %v3670 = vunpack.c.l.b16 %v3542
  %v3671 = vunpack.c.h.b16 %v3542
  %v3672 = vunpack.c.l.b16 %v3543
  %v3673 = vunpack.c.h.b16 %v3543
  %v3674 = vunpack.c.l.b16 %v3544
  %v3675 = vunpack.c.h.b16 %v3544
  %v3676 = vunpack.c.l.b16 %v3545
  %v3677 = vunpack.c.h.b16 %v3545
  %v3678 = vunpack.c.l.b16 %v3546
  %v3679 = vunpack.c.h.b16 %v3546
  %v3680 = vunpack.c.l.b16 %v3547
  %v3681 = vunpack.c.h.b16 %v3547
  %v3682 = vunpack.c.l.b16 %v3548
  %v3683 = vunpack.c.h.b16 %v3548
  %v3684 = vunpack.c.l.b16 %v3549
  %v3685 = vunpack.c.h.b16 %v3549
  %v3686 = vunpack.c.l.b16 %v3550
  %v3687 = vunpack.c.h.b16 %v3550
  %v3688 = vunpack.c.l.b16 %v3551
  %v3689 = vunpack.c.h.b16 %v3551
  %v3690 = vunpack.c.l.b16 %v3552
  %v3691 = vunpack.c.h.b16 %v3552
  %v3692 = vunpack.c.l.b16 %v3553
  %v3693 = vunpack.c.h.b16 %v3553
  %v3694 = vunpack.c.l.b16 %v3554
  %v3695 = vunpack.c.h.b16 %v3554
  %v3696 = vunpack.c.l.b16 %v3555
  %v3697 = vunpack.c.h.b16 %v3555
  %v3698 = vunpack.c.l.b16 %v3556
  %v3699 = vunpack.c.h.b16 %v3556
  %v3700 = vunpack.c.l.b16 %v3557
  %v3701 = vunpack.c.h.b16 %v3557
  %v3702 = vpack.c.b16 %v3608, %v3606
  %v3703 = vpack.c.b16 %v3609, %v3607
  %v3704 = vpack.c.b16 %v3612, %v3610
  %v3705 = vpack.c.b16 %v3613, %v3611
  %v3706 = vpack.c.b16 %v3616, %v3614
  %v3707 = vpack.c.b16 %v3617, %v3615
  %v3708 = vpack.c.b16 %v3620, %v3618
  %v3709 = vpack.c.b16 %v3621, %v3619
  %v3710 = vpack.c.b16 %v3624, %v3622
  %v3711 = vpack.c.b16 %v3625, %v3623
  %v3712 = vpack.c.b16 %v3628, %v3626
  %v3713 = vpack.c.b16 %v3629, %v3627
  %v3714 = vpack.c.b16 %v3632, %v3630
  %v3715 = vpack.c.b16 %v3633, %v3631
  %v3716 = vpack.c.b16 %v3636, %v3634
  %v3717 = vpack.c.b16 %v3637, %v3635
  %v3718 = vpack.c.b16 %v3640, %v3638
  %v3719 = vpack.c.b16 %v3641, %v3639
  %v3720 = vpack.c.b16 %v3644, %v3642
  %v3721 = vpack.c.b16 %v3645, %v3643
  %v3722 = vpack.c.b16 %v3648, %v3646
  %v3723 = vpack.c.b16 %v3649, %v3647
  %v3724 = vpack.c.b16 %v3652, %v3650
  %v3725 = vpack.c.b16 %v3653, %v3651
  %v3726 = vpack.c.b16 %v3656, %v3654
  %v3727 = vpack.c.b16 %v3657, %v3655
  %v3728 = vpack.c.b16 %v3660, %v3658
  %v3729 = vpack.c.b16 %v3661, %v3659
  %v3730 = vpack.c.b16 %v3664, %v3662
  %v3731 = vpack.c.b16 %v3665, %v3663
  %v3732 = vpack.c.b16 %v3668, %v3666
  %v3733 = vpack.c.b16 %v3669, %v3667
  %v3734 = vpack.c.b16 %v3672, %v3670
  %v3735 = vpack.c.b16 %v3673, %v3671
  %v3736 = vpack.c.b16 %v3676, %v3674
  %v3737 = vpack.c.b16 %v3677, %v3675
  %v3738 = vpack.c.b16 %v3680, %v3678
  %v3739 = vpack.c.b16 %v3681, %v3679
  %v3740 = vpack.c.b16 %v3684, %v3682
  %v3741 = vpack.c.b16 %v3685, %v3683
  %v3742 = vpack.c.b16 %v3688, %v3686
  %v3743 = vpack.c.b16 %v3689, %v3687
  %v3744 = vpack.c.b16 %v3692, %v3690
  %v3745 = vpack.c.b16 %v3693, %v3691
  %v3746 = vpack.c.b16 %v3696, %v3694
  %v3747 = vpack.c.b16 %v3697, %v3695
  %v3748 = vpack.c.b16 %v3700, %v3698
  %v3749 = vpack.c.b16 %v3701, %v3699
  %3798 = vmatprep.subr.bf16.mxu0 %v3703
  %3799 = vmatpush1.bf16.msra.mxu0 %v3702
  %3800 = vmatprep.subr.bf16.mxu0 %v3705
  %3801 = vmatpush1.bf16.msra.mxu0 %v3704
  %3802 = vmatprep.subr.bf16.mxu0 %v3707
  %3803 = vmatpush1.bf16.msra.mxu0 %v3706
  %3804 = vmatprep.subr.bf16.mxu0 %v3709
  %3805 = vmatpush1.bf16.msra.mxu0 %v3708
  %3806 = vmatprep.subr.bf16.mxu0 %v3711
  %3807 = vmatpush1.bf16.msra.mxu0 %v3710
  %3808 = vmatprep.subr.bf16.mxu0 %v3713
  %3809 = vmatpush1.bf16.msra.mxu0 %v3712
  %3810 = vmatprep.subr.bf16.mxu0 %v3715
  %3811 = vmatpush1.bf16.msra.mxu0 %v3714
  %3812 = vmatprep.subr.bf16.mxu0 %v3717
  %3813 = vmatpush1.bf16.msra.mxu0 %v3716
  %3814 = vmatprep.subr.bf16.mxu0 %v3719
  %3815 = vmatpush1.bf16.msra.mxu0 %v3718
  %3816 = vmatprep.subr.bf16.mxu0 %v3721
  %3817 = vmatpush1.bf16.msra.mxu0 %v3720
  %3818 = vmatprep.subr.bf16.mxu0 %v3723
  %3819 = vmatpush1.bf16.msra.mxu0 %v3722
  %3820 = vmatprep.subr.bf16.mxu0 %v3725
  %3821 = vmatpush1.bf16.msra.mxu0 %v3724
  %3822 = vmatprep.subr.bf16.mxu0 %v3727
  %3823 = vmatpush1.bf16.msra.mxu0 %v3726
  %3824 = vmatprep.subr.bf16.mxu0 %v3729
  %3825 = vmatpush1.bf16.msra.mxu0 %v3728
  %3826 = vmatprep.subr.bf16.mxu0 %v3731
  %3827 = vmatpush1.bf16.msra.mxu0 %v3730
  %3828 = vmatprep.subr.bf16.mxu0 %v3733
  %3829 = vmatpush1.bf16.msra.mxu0 %v3732
  %3830 = vmatprep.mubr.bf16.mxu0 %v1907
  %3831 = vmatmul.mubr.bf16.gmra.mrb[0].mxu0 %v1906
  %v3832 = vpop.f32.mrb[0].mxu0
  %v3833 = vadd.f32 0.0, %v3832
  %v3834 = vpop.f32.mrb[0].mxu0
  %v3835 = vadd.f32 0.0, %v3834
  %v3836 = vpop.f32.mrb[0].mxu0
  %v3837 = vadd.f32 0.0, %v3836
  %v3838 = vpop.f32.mrb[0].mxu0
  %v3839 = vadd.f32 0.0, %v3838
  %3840 = vmatprep.mubr.bf16.mxu0 %v1910
  %3841 = vmatmul.mubr.bf16.gmra.mrb[0].mxu0 %v1909
  %v3842 = vpop.f32.mrb[0].mxu0
  %v3843 = vadd.f32 0.0, %v3842
  %v3844 = vpop.f32.mrb[0].mxu0
  %v3845 = vadd.f32 0.0, %v3844
  %v3846 = vpop.f32.mrb[0].mxu0
  %v3847 = vadd.f32 0.0, %v3846
  %v3848 = vpop.f32.mrb[0].mxu0
  %v3849 = vadd.f32 0.0, %v3848
  %3850 = vmatprep.mubr.bf16.mxu0 %v1913
  %3851 = vmatmul.mubr.bf16.gmra.mrb[0].mxu0 %v1912
  %v3852 = vpop.f32.mrb[0].mxu0
  %v3853 = vadd.f32 0.0, %v3852
  %v3854 = vpop.f32.mrb[0].mxu0
  %v3855 = vadd.f32 0.0, %v3854
  %v3856 = vpop.f32.mrb[0].mxu0
  %v3857 = vadd.f32 0.0, %v3856
  %v3858 = vpop.f32.mrb[0].mxu0
  %v3859 = vadd.f32 0.0, %v3858
  %3860 = vmatprep.mubr.bf16.mxu0 %v1916
  %3861 = vmatmul.mubr.bf16.gmra.mrb[0].mxu0 %v1915
  %v3862 = vpop.f32.mrb[0].mxu0
  %v3863 = vadd.f32 0.0, %v3862
  %v3864 = vpop.f32.mrb[0].mxu0
  %v3865 = vadd.f32 0.0, %v3864
  %v3866 = vpop.f32.mrb[0].mxu0
  %v3867 = vadd.f32 0.0, %v3866
  %v3868 = vpop.f32.mrb[0].mxu0
  %v3869 = vadd.f32 0.0, %v3868
  %3870 = vmatprep.mubr.bf16.mxu0 %v1919
  %3871 = vmatmul.mubr.bf16.gmra.mrb[0].mxu0 %v1918
  %v3872 = vpop.f32.mrb[0].mxu0
  %v3873 = vadd.f32 0.0, %v3872
  %v3874 = vpop.f32.mrb[0].mxu0
  %v3875 = vadd.f32 0.0, %v3874
  %v3876 = vpop.f32.mrb[0].mxu0
  %v3877 = vadd.f32 0.0, %v3876
  %v3878 = vpop.f32.mrb[0].mxu0
  %v3879 = vadd.f32 0.0, %v3878
  %3880 = vmatprep.mubr.bf16.mxu0 %v1922
  %3881 = vmatmul.mubr.bf16.gmra.mrb[0].mxu0 %v1921
  %v3882 = vpop.f32.mrb[0].mxu0
  %v3883 = vadd.f32 0.0, %v3882
  %v3884 = vpop.f32.mrb[0].mxu0
  %v3885 = vadd.f32 0.0, %v3884
  %v3886 = vpop.f32.mrb[0].mxu0
  %v3887 = vadd.f32 0.0, %v3886
  %v3888 = vpop.f32.mrb[0].mxu0
  %v3889 = vadd.f32 0.0, %v3888
  %3890 = vmatprep.mubr.bf16.mxu0 %v1925
  %3891 = vmatmul.mubr.bf16.gmra.mrb[0].mxu0 %v1924
  %v3892 = vpop.f32.mrb[0].mxu0
  %v3893 = vadd.f32 0.0, %v3892
  %v3894 = vpop.f32.mrb[0].mxu0
  %v3895 = vadd.f32 0.0, %v3894
  %v3896 = vpop.f32.mrb[0].mxu0
  %v3897 = vadd.f32 0.0, %v3896
  %v3898 = vpop.f32.mrb[0].mxu0
  %v3899 = vadd.f32 0.0, %v3898
  %3900 = vmatprep.mubr.bf16.mxu0 %v1928
  %3901 = vmatmul.mubr.bf16.gmra.mrb[0].mxu0 %v1927
  %v3902 = vpop.f32.mrb[0].mxu0
  %v3903 = vadd.f32 0.0, %v3902
  %v3904 = vpop.f32.mrb[0].mxu0
  %v3905 = vadd.f32 0.0, %v3904
  %v3906 = vpop.f32.mrb[0].mxu0
  %v3907 = vadd.f32 0.0, %v3906
  %v3908 = vpop.f32.mrb[0].mxu0
  %v3909 = vadd.f32 0.0, %v3908
  %3910 = vdwg.mxu0
  %3911 = vmatprep.subr.bf16.mxu0 %v3735
  %3912 = vmatpush1.bf16.msra.mxu0 %v3734
  %3913 = vmatprep.subr.bf16.mxu0 %v3737
  %3914 = vmatpush1.bf16.msra.mxu0 %v3736
  %3915 = vmatprep.subr.bf16.mxu0 %v3739
  %3916 = vmatpush1.bf16.msra.mxu0 %v3738
  %3917 = vmatprep.subr.bf16.mxu0 %v3741
  %3918 = vmatpush1.bf16.msra.mxu0 %v3740
  %3919 = vmatprep.subr.bf16.mxu0 %v3743
  %3920 = vmatpush1.bf16.msra.mxu0 %v3742
  %3921 = vmatprep.subr.bf16.mxu0 %v3745
  %3922 = vmatpush1.bf16.msra.mxu0 %v3744
  %3923 = vmatprep.subr.bf16.mxu0 %v3747
  %3924 = vmatpush1.bf16.msra.mxu0 %v3746
  %3925 = vmatprep.subr.bf16.mxu0 %v3749
  %3926 = vmatpush1.bf16.msra.mxu0 %v3748
  %3927 = vmatprep.subr.bf16.mxu0 0
  %3928 = vmatpush1.bf16.msra.mxu0 0
  %3929 = vmatprep.subr.bf16.mxu0 0
  %3930 = vmatpush1.bf16.msra.mxu0 0
  %3931 = vmatprep.subr.bf16.mxu0 0
  %3932 = vmatpush1.bf16.msra.mxu0 0
  %3933 = vmatprep.subr.bf16.mxu0 0
  %3934 = vmatpush1.bf16.msra.mxu0 0
  %3935 = vmatprep.subr.bf16.mxu0 0
  %3936 = vmatpush1.bf16.msra.mxu0 0
  %3937 = vmatprep.subr.bf16.mxu0 0
  %3938 = vmatpush1.bf16.msra.mxu0 0
  %3939 = vmatprep.subr.bf16.mxu0 0
  %3940 = vmatpush1.bf16.msra.mxu0 0
  %3941 = vmatprep.subr.bf16.mxu0 0
  %3942 = vmatpush1.bf16.msra.mxu0 0
  %3943 = vmatprep.mubr.bf16.mxu0 0
  %3944 = vmatmul.mubr.bf16.gmra.mrb[0].mxu0 %v1908
  %v3945 = vpop.f32.mrb[0].mxu0
  %v3946 = vadd.f32 %v3833, %v3945
  %v3947 = vpop.f32.mrb[0].mxu0
  %v3948 = vadd.f32 %v3835, %v3947
  %v3949 = vpop.f32.mrb[0].mxu0
  %v3950 = vadd.f32 %v3837, %v3949
  %v3951 = vpop.f32.mrb[0].mxu0
  %v3952 = vadd.f32 %v3839, %v3951
  %3953 = vmatprep.mubr.bf16.mxu0 0
  %3954 = vmatmul.mubr.bf16.gmra.mrb[0].mxu0 %v1911
  %v3955 = vpop.f32.mrb[0].mxu0
  %v3956 = vadd.f32 %v3843, %v3955
  %v3957 = vpop.f32.mrb[0].mxu0
  %v3958 = vadd.f32 %v3845, %v3957
  %v3959 = vpop.f32.mrb[0].mxu0
  %v3960 = vadd.f32 %v3847, %v3959
  %v3961 = vpop.f32.mrb[0].mxu0
  %v3962 = vadd.f32 %v3849, %v3961
  %3963 = vmatprep.mubr.bf16.mxu0 0
  %3964 = vmatmul.mubr.bf16.gmra.mrb[0].mxu0 %v1914
  %v3965 = vpop.f32.mrb[0].mxu0
  %v3966 = vadd.f32 %v3853, %v3965
  %v3967 = vpop.f32.mrb[0].mxu0
  %v3968 = vadd.f32 %v3855, %v3967
  %v3969 = vpop.f32.mrb[0].mxu0
  %v3970 = vadd.f32 %v3857, %v3969
  %v3971 = vpop.f32.mrb[0].mxu0
  %v3972 = vadd.f32 %v3859, %v3971
  %3973 = vmatprep.mubr.bf16.mxu0 0
  %3974 = vmatmul.mubr.bf16.gmra.mrb[0].mxu0 %v1917
  %v3975 = vpop.f32.mrb[0].mxu0
  %v3976 = vadd.f32 %v3863, %v3975
  %v3977 = vpop.f32.mrb[0].mxu0
  %v3978 = vadd.f32 %v3865, %v3977
  %v3979 = vpop.f32.mrb[0].mxu0
  %v3980 = vadd.f32 %v3867, %v3979
  %v3981 = vpop.f32.mrb[0].mxu0
  %v3982 = vadd.f32 %v3869, %v3981
  %3983 = vmatprep.mubr.bf16.mxu0 0
  %3984 = vmatmul.mubr.bf16.gmra.mrb[0].mxu0 %v1920
  %v3985 = vpop.f32.mrb[0].mxu0
  %v3986 = vadd.f32 %v3873, %v3985
  %v3987 = vpop.f32.mrb[0].mxu0
  %v3988 = vadd.f32 %v3875, %v3987
  %v3989 = vpop.f32.mrb[0].mxu0
  %v3990 = vadd.f32 %v3877, %v3989
  %v3991 = vpop.f32.mrb[0].mxu0
  %v3992 = vadd.f32 %v3879, %v3991
  %3993 = vmatprep.mubr.bf16.mxu0 0
  %3994 = vmatmul.mubr.bf16.gmra.mrb[0].mxu0 %v1923
  %v3995 = vpop.f32.mrb[0].mxu0
  %v3996 = vadd.f32 %v3883, %v3995
  %v3997 = vpop.f32.mrb[0].mxu0
  %v3998 = vadd.f32 %v3885, %v3997
  %v3999 = vpop.f32.mrb[0].mxu0
  %v4000 = vadd.f32 %v3887, %v3999
  %v4001 = vpop.f32.mrb[0].mxu0
  %v4002 = vadd.f32 %v3889, %v4001
  %4003 = vmatprep.mubr.bf16.mxu0 0
  %4004 = vmatmul.mubr.bf16.gmra.mrb[0].mxu0 %v1926
  %v4005 = vpop.f32.mrb[0].mxu0
  %v4006 = vadd.f32 %v3893, %v4005
  %v4007 = vpop.f32.mrb[0].mxu0
  %v4008 = vadd.f32 %v3895, %v4007
  %v4009 = vpop.f32.mrb[0].mxu0
  %v4010 = vadd.f32 %v3897, %v4009
  %v4011 = vpop.f32.mrb[0].mxu0
  %v4012 = vadd.f32 %v3899, %v4011
  %4013 = vmatprep.mubr.bf16.mxu0 0
  %4014 = vmatmul.mubr.bf16.gmra.mrb[0].mxu0 %v1929
  %v4015 = vpop.f32.mrb[0].mxu0
  %v4016 = vadd.f32 %v3903, %v4015
  %v4017 = vpop.f32.mrb[0].mxu0
  %v4018 = vadd.f32 %v3905, %v4017
  %v4019 = vpop.f32.mrb[0].mxu0
  %v4020 = vadd.f32 %v3907, %v4019
  %v4021 = vpop.f32.mrb[0].mxu0
  %v4022 = vadd.f32 %v3909, %v4021
  %4023 = vdwg.mxu0
  %v4024 = vadd.f32 %v3477, %v3946
  %v4025 = vadd.f32 %v3478, %v3948
  %v4026 = vadd.f32 %v3479, %v3950
  %v4027 = vadd.f32 %v3480, %v3952
  %v4028 = vadd.f32 %v3481, %v3956
  %v4029 = vadd.f32 %v3482, %v3958
  %v4030 = vadd.f32 %v3483, %v3960
  %v4031 = vadd.f32 %v3484, %v3962
  %v4032 = vadd.f32 %v3485, %v3966
  %v4033 = vadd.f32 %v3486, %v3968
  %v4034 = vadd.f32 %v3487, %v3970
  %v4035 = vadd.f32 %v3488, %v3972
  %v4036 = vadd.f32 %v3489, %v3976
  %v4037 = vadd.f32 %v3490, %v3978
  %v4038 = vadd.f32 %v3491, %v3980
  %v4039 = vadd.f32 %v3492, %v3982
  %v4040 = vadd.f32 %v3493, %v3986
  %v4041 = vadd.f32 %v3494, %v3988
  %v4042 = vadd.f32 %v3495, %v3990
  %v4043 = vadd.f32 %v3496, %v3992
  %v4044 = vadd.f32 %v3497, %v3996
  %v4045 = vadd.f32 %v3498, %v3998
  %v4046 = vadd.f32 %v3499, %v4000
  %v4047 = vadd.f32 %v3500, %v4002
  %v4048 = vadd.f32 %v3501, %v4006
  %v4049 = vadd.f32 %v3502, %v4008
  %v4050 = vadd.f32 %v3503, %v4010
  %v4051 = vadd.f32 %v3504, %v4012
  %v4052 = vadd.f32 %v3505, %v4016
  %v4053 = vadd.f32 %v3506, %v4018
  %v4054 = vadd.f32 %v3507, %v4020
  %v4055 = vadd.f32 %v3508, %v4022
  %s4056 = scalar_lea.vmem %s3, 1536
  %v4057 = vld [vmem:[%s4056] sm:$0xff]
  %v4058 = vld [vmem:[%s4056 + $0x8] sm:$0xff]
  %v4059 = vld [vmem:[%s4056 + $0x10] sm:$0xff]
  %v4060 = vld [vmem:[%s4056 + $0x18] sm:$0xff]
  %v4061 = vld [vmem:[%s4056 + $0x20] sm:$0xff]
  %v4062 = vld [vmem:[%s4056 + $0x28] sm:$0xff]
  %v4063 = vld [vmem:[%s4056 + $0x30] sm:$0xff]
  %v4064 = vld [vmem:[%s4056 + $0x38] sm:$0xff]
  %v4065 = vld [vmem:[%s4056 + $0x40] sm:$0xff]
  %v4066 = vld [vmem:[%s4056 + $0x48] sm:$0xff]
  %v4067 = vld [vmem:[%s4056 + $0x50] sm:$0xff]
  %v4068 = vld [vmem:[%s4056 + $0x58] sm:$0xff]
  %v4069 = vld [vmem:[%s4056 + $0x60] sm:$0xff]
  %v4070 = vld [vmem:[%s4056 + $0x68] sm:$0xff]
  %v4071 = vld [vmem:[%s4056 + $0x70] sm:$0xff]
  %v4072 = vld [vmem:[%s4056 + $0x78] sm:$0xff]
  %v4073 = vld [vmem:[%s4056 + $0x80] sm:$0xff]
  %v4074 = vld [vmem:[%s4056 + $0x88] sm:$0xff]
  %v4075 = vld [vmem:[%s4056 + $0x90] sm:$0xff]
  %v4076 = vld [vmem:[%s4056 + $0x98] sm:$0xff]
  %v4077 = vld [vmem:[%s4056 + $0xa0] sm:$0xff]
  %v4078 = vld [vmem:[%s4056 + $0xa8] sm:$0xff]
  %v4079 = vld [vmem:[%s4056 + $0xb0] sm:$0xff]
  %v4080 = vld [vmem:[%s4056 + $0xb8] sm:$0xff]
  %v4081 = vld [vmem:[%s4056 + $0xc0] sm:$0xff]
  %v4082 = vld [vmem:[%s4056 + $0xc8] sm:$0xff]
  %v4083 = vld [vmem:[%s4056 + $0xd0] sm:$0xff]
  %v4084 = vld [vmem:[%s4056 + $0xd8] sm:$0xff]
  %v4085 = vld [vmem:[%s4056 + $0xe0] sm:$0xff]
  %v4086 = vld [vmem:[%s4056 + $0xe8] sm:$0xff]
  %v4087 = vld [vmem:[%s4056 + $0xf0] sm:$0xff]
  %v4088 = vld [vmem:[%s4056 + $0xf8] sm:$0xff]
  %v4089 = vld [vmem:[%s4056 + $0x100] sm:$0xff]
  %v4090 = vld [vmem:[%s4056 + $0x108] sm:$0xff]
  %v4091 = vld [vmem:[%s4056 + $0x110] sm:$0xff]
  %v4092 = vld [vmem:[%s4056 + $0x118] sm:$0xff]
  %v4093 = vld [vmem:[%s4056 + $0x120] sm:$0xff]
  %v4094 = vld [vmem:[%s4056 + $0x128] sm:$0xff]
  %v4095 = vld [vmem:[%s4056 + $0x130] sm:$0xff]
  %v4096 = vld [vmem:[%s4056 + $0x138] sm:$0xff]
  %v4097 = vld [vmem:[%s4056 + $0x140] sm:$0xff]
  %v4098 = vld [vmem:[%s4056 + $0x148] sm:$0xff]
  %v4099 = vld [vmem:[%s4056 + $0x150] sm:$0xff]
  %v4100 = vld [vmem:[%s4056 + $0x158] sm:$0xff]
  %v4101 = vld [vmem:[%s4056 + $0x160] sm:$0xff]
  %v4102 = vld [vmem:[%s4056 + $0x168] sm:$0xff]
  %v4103 = vld [vmem:[%s4056 + $0x170] sm:$0xff]
  %v4104 = vld [vmem:[%s4056 + $0x178] sm:$0xff]
  %v4153 = vunpack.c.l.b16 %v4057
  %v4154 = vunpack.c.h.b16 %v4057
  %v4155 = vunpack.c.l.b16 %v4058
  %v4156 = vunpack.c.h.b16 %v4058
  %v4157 = vunpack.c.l.b16 %v4059
  %v4158 = vunpack.c.h.b16 %v4059
  %v4159 = vunpack.c.l.b16 %v4060
  %v4160 = vunpack.c.h.b16 %v4060
  %v4161 = vunpack.c.l.b16 %v4061
  %v4162 = vunpack.c.h.b16 %v4061
  %v4163 = vunpack.c.l.b16 %v4062
  %v4164 = vunpack.c.h.b16 %v4062
  %v4165 = vunpack.c.l.b16 %v4063
  %v4166 = vunpack.c.h.b16 %v4063
  %v4167 = vunpack.c.l.b16 %v4064
  %v4168 = vunpack.c.h.b16 %v4064
  %v4169 = vunpack.c.l.b16 %v4065
  %v4170 = vunpack.c.h.b16 %v4065
  %v4171 = vunpack.c.l.b16 %v4066
  %v4172 = vunpack.c.h.b16 %v4066
  %v4173 = vunpack.c.l.b16 %v4067
  %v4174 = vunpack.c.h.b16 %v4067
  %v4175 = vunpack.c.l.b16 %v4068
  %v4176 = vunpack.c.h.b16 %v4068
  %v4177 = vunpack.c.l.b16 %v4069
  %v4178 = vunpack.c.h.b16 %v4069
  %v4179 = vunpack.c.l.b16 %v4070
  %v4180 = vunpack.c.h.b16 %v4070
  %v4181 = vunpack.c.l.b16 %v4071
  %v4182 = vunpack.c.h.b16 %v4071
  %v4183 = vunpack.c.l.b16 %v4072
  %v4184 = vunpack.c.h.b16 %v4072
  %v4185 = vunpack.c.l.b16 %v4073
  %v4186 = vunpack.c.h.b16 %v4073
  %v4187 = vunpack.c.l.b16 %v4074
  %v4188 = vunpack.c.h.b16 %v4074
  %v4189 = vunpack.c.l.b16 %v4075
  %v4190 = vunpack.c.h.b16 %v4075
  %v4191 = vunpack.c.l.b16 %v4076
  %v4192 = vunpack.c.h.b16 %v4076
  %v4193 = vunpack.c.l.b16 %v4077
  %v4194 = vunpack.c.h.b16 %v4077
  %v4195 = vunpack.c.l.b16 %v4078
  %v4196 = vunpack.c.h.b16 %v4078
  %v4197 = vunpack.c.l.b16 %v4079
  %v4198 = vunpack.c.h.b16 %v4079
  %v4199 = vunpack.c.l.b16 %v4080
  %v4200 = vunpack.c.h.b16 %v4080
  %v4201 = vunpack.c.l.b16 %v4081
  %v4202 = vunpack.c.h.b16 %v4081
  %v4203 = vunpack.c.l.b16 %v4082
  %v4204 = vunpack.c.h.b16 %v4082
  %v4205 = vunpack.c.l.b16 %v4083
  %v4206 = vunpack.c.h.b16 %v4083
  %v4207 = vunpack.c.l.b16 %v4084
  %v4208 = vunpack.c.h.b16 %v4084
  %v4209 = vunpack.c.l.b16 %v4085
  %v4210 = vunpack.c.h.b16 %v4085
  %v4211 = vunpack.c.l.b16 %v4086
  %v4212 = vunpack.c.h.b16 %v4086
  %v4213 = vunpack.c.l.b16 %v4087
  %v4214 = vunpack.c.h.b16 %v4087
  %v4215 = vunpack.c.l.b16 %v4088
  %v4216 = vunpack.c.h.b16 %v4088
  %v4217 = vunpack.c.l.b16 %v4089
  %v4218 = vunpack.c.h.b16 %v4089
  %v4219 = vunpack.c.l.b16 %v4090
  %v4220 = vunpack.c.h.b16 %v4090
  %v4221 = vunpack.c.l.b16 %v4091
  %v4222 = vunpack.c.h.b16 %v4091
  %v4223 = vunpack.c.l.b16 %v4092
  %v4224 = vunpack.c.h.b16 %v4092
  %v4225 = vunpack.c.l.b16 %v4093
  %v4226 = vunpack.c.h.b16 %v4093
  %v4227 = vunpack.c.l.b16 %v4094
  %v4228 = vunpack.c.h.b16 %v4094
  %v4229 = vunpack.c.l.b16 %v4095
  %v4230 = vunpack.c.h.b16 %v4095
  %v4231 = vunpack.c.l.b16 %v4096
  %v4232 = vunpack.c.h.b16 %v4096
  %v4233 = vunpack.c.l.b16 %v4097
  %v4234 = vunpack.c.h.b16 %v4097
  %v4235 = vunpack.c.l.b16 %v4098
  %v4236 = vunpack.c.h.b16 %v4098
  %v4237 = vunpack.c.l.b16 %v4099
  %v4238 = vunpack.c.h.b16 %v4099
  %v4239 = vunpack.c.l.b16 %v4100
  %v4240 = vunpack.c.h.b16 %v4100
  %v4241 = vunpack.c.l.b16 %v4101
  %v4242 = vunpack.c.h.b16 %v4101
  %v4243 = vunpack.c.l.b16 %v4102
  %v4244 = vunpack.c.h.b16 %v4102
  %v4245 = vunpack.c.l.b16 %v4103
  %v4246 = vunpack.c.h.b16 %v4103
  %v4247 = vunpack.c.l.b16 %v4104
  %v4248 = vunpack.c.h.b16 %v4104
  %v4249 = vpack.c.b16 %v4155, %v4153
  %v4250 = vpack.c.b16 %v4156, %v4154
  %v4251 = vpack.c.b16 %v4159, %v4157
  %v4252 = vpack.c.b16 %v4160, %v4158
  %v4253 = vpack.c.b16 %v4163, %v4161
  %v4254 = vpack.c.b16 %v4164, %v4162
  %v4255 = vpack.c.b16 %v4167, %v4165
  %v4256 = vpack.c.b16 %v4168, %v4166
  %v4257 = vpack.c.b16 %v4171, %v4169
  %v4258 = vpack.c.b16 %v4172, %v4170
  %v4259 = vpack.c.b16 %v4175, %v4173
  %v4260 = vpack.c.b16 %v4176, %v4174
  %v4261 = vpack.c.b16 %v4179, %v4177
  %v4262 = vpack.c.b16 %v4180, %v4178
  %v4263 = vpack.c.b16 %v4183, %v4181
  %v4264 = vpack.c.b16 %v4184, %v4182
  %v4265 = vpack.c.b16 %v4187, %v4185
  %v4266 = vpack.c.b16 %v4188, %v4186
  %v4267 = vpack.c.b16 %v4191, %v4189
  %v4268 = vpack.c.b16 %v4192, %v4190
  %v4269 = vpack.c.b16 %v4195, %v4193
  %v4270 = vpack.c.b16 %v4196, %v4194
  %v4271 = vpack.c.b16 %v4199, %v4197
  %v4272 = vpack.c.b16 %v4200, %v4198
  %v4273 = vpack.c.b16 %v4203, %v4201
  %v4274 = vpack.c.b16 %v4204, %v4202
  %v4275 = vpack.c.b16 %v4207, %v4205
  %v4276 = vpack.c.b16 %v4208, %v4206
  %v4277 = vpack.c.b16 %v4211, %v4209
  %v4278 = vpack.c.b16 %v4212, %v4210
  %v4279 = vpack.c.b16 %v4215, %v4213
  %v4280 = vpack.c.b16 %v4216, %v4214
  %v4281 = vpack.c.b16 %v4219, %v4217
  %v4282 = vpack.c.b16 %v4220, %v4218
  %v4283 = vpack.c.b16 %v4223, %v4221
  %v4284 = vpack.c.b16 %v4224, %v4222
  %v4285 = vpack.c.b16 %v4227, %v4225
  %v4286 = vpack.c.b16 %v4228, %v4226
  %v4287 = vpack.c.b16 %v4231, %v4229
  %v4288 = vpack.c.b16 %v4232, %v4230
  %v4289 = vpack.c.b16 %v4235, %v4233
  %v4290 = vpack.c.b16 %v4236, %v4234
  %v4291 = vpack.c.b16 %v4239, %v4237
  %v4292 = vpack.c.b16 %v4240, %v4238
  %v4293 = vpack.c.b16 %v4243, %v4241
  %v4294 = vpack.c.b16 %v4244, %v4242
  %v4295 = vpack.c.b16 %v4247, %v4245
  %v4296 = vpack.c.b16 %v4248, %v4246
  %4345 = vmatprep.subr.bf16.mxu0 %v4250
  %4346 = vmatpush1.bf16.msra.mxu0 %v4249
  %4347 = vmatprep.subr.bf16.mxu0 %v4252
  %4348 = vmatpush1.bf16.msra.mxu0 %v4251
  %4349 = vmatprep.subr.bf16.mxu0 %v4254
  %4350 = vmatpush1.bf16.msra.mxu0 %v4253
  %4351 = vmatprep.subr.bf16.mxu0 %v4256
  %4352 = vmatpush1.bf16.msra.mxu0 %v4255
  %4353 = vmatprep.subr.bf16.mxu0 %v4258
  %4354 = vmatpush1.bf16.msra.mxu0 %v4257
  %4355 = vmatprep.subr.bf16.mxu0 %v4260
  %4356 = vmatpush1.bf16.msra.mxu0 %v4259
  %4357 = vmatprep.subr.bf16.mxu0 %v4262
  %4358 = vmatpush1.bf16.msra.mxu0 %v4261
  %4359 = vmatprep.subr.bf16.mxu0 %v4264
  %4360 = vmatpush1.bf16.msra.mxu0 %v4263
  %4361 = vmatprep.subr.bf16.mxu0 %v4266
  %4362 = vmatpush1.bf16.msra.mxu0 %v4265
  %4363 = vmatprep.subr.bf16.mxu0 %v4268
  %4364 = vmatpush1.bf16.msra.mxu0 %v4267
  %4365 = vmatprep.subr.bf16.mxu0 %v4270
  %4366 = vmatpush1.bf16.msra.mxu0 %v4269
  %4367 = vmatprep.subr.bf16.mxu0 %v4272
  %4368 = vmatpush1.bf16.msra.mxu0 %v4271
  %4369 = vmatprep.subr.bf16.mxu0 %v4274
  %4370 = vmatpush1.bf16.msra.mxu0 %v4273
  %4371 = vmatprep.subr.bf16.mxu0 %v4276
  %4372 = vmatpush1.bf16.msra.mxu0 %v4275
  %4373 = vmatprep.subr.bf16.mxu0 %v4278
  %4374 = vmatpush1.bf16.msra.mxu0 %v4277
  %4375 = vmatprep.subr.bf16.mxu0 %v4280
  %4376 = vmatpush1.bf16.msra.mxu0 %v4279
  %4377 = vmatprep.mubr.bf16.mxu0 %v1910
  %4378 = vmatmul.mubr.bf16.gmra.mrb[0].mxu0 %v1909
  %v4379 = vpop.f32.mrb[0].mxu0
  %v4380 = vadd.f32 0.0, %v4379
  %v4381 = vpop.f32.mrb[0].mxu0
  %v4382 = vadd.f32 0.0, %v4381
  %v4383 = vpop.f32.mrb[0].mxu0
  %v4384 = vadd.f32 0.0, %v4383
  %v4385 = vpop.f32.mrb[0].mxu0
  %v4386 = vadd.f32 0.0, %v4385
  %4387 = vmatprep.mubr.bf16.mxu0 %v1913
  %4388 = vmatmul.mubr.bf16.gmra.mrb[0].mxu0 %v1912
  %v4389 = vpop.f32.mrb[0].mxu0
  %v4390 = vadd.f32 0.0, %v4389
  %v4391 = vpop.f32.mrb[0].mxu0
  %v4392 = vadd.f32 0.0, %v4391
  %v4393 = vpop.f32.mrb[0].mxu0
  %v4394 = vadd.f32 0.0, %v4393
  %v4395 = vpop.f32.mrb[0].mxu0
  %v4396 = vadd.f32 0.0, %v4395
  %4397 = vmatprep.mubr.bf16.mxu0 %v1916
  %4398 = vmatmul.mubr.bf16.gmra.mrb[0].mxu0 %v1915
  %v4399 = vpop.f32.mrb[0].mxu0
  %v4400 = vadd.f32 0.0, %v4399
  %v4401 = vpop.f32.mrb[0].mxu0
  %v4402 = vadd.f32 0.0, %v4401
  %v4403 = vpop.f32.mrb[0].mxu0
  %v4404 = vadd.f32 0.0, %v4403
  %v4405 = vpop.f32.mrb[0].mxu0
  %v4406 = vadd.f32 0.0, %v4405
  %4407 = vmatprep.mubr.bf16.mxu0 %v1919
  %4408 = vmatmul.mubr.bf16.gmra.mrb[0].mxu0 %v1918
  %v4409 = vpop.f32.mrb[0].mxu0
  %v4410 = vadd.f32 0.0, %v4409
  %v4411 = vpop.f32.mrb[0].mxu0
  %v4412 = vadd.f32 0.0, %v4411
  %v4413 = vpop.f32.mrb[0].mxu0
  %v4414 = vadd.f32 0.0, %v4413
  %v4415 = vpop.f32.mrb[0].mxu0
  %v4416 = vadd.f32 0.0, %v4415
  %4417 = vmatprep.mubr.bf16.mxu0 %v1922
  %4418 = vmatmul.mubr.bf16.gmra.mrb[0].mxu0 %v1921
  %v4419 = vpop.f32.mrb[0].mxu0
  %v4420 = vadd.f32 0.0, %v4419
  %v4421 = vpop.f32.mrb[0].mxu0
  %v4422 = vadd.f32 0.0, %v4421
  %v4423 = vpop.f32.mrb[0].mxu0
  %v4424 = vadd.f32 0.0, %v4423
  %v4425 = vpop.f32.mrb[0].mxu0
  %v4426 = vadd.f32 0.0, %v4425
  %4427 = vmatprep.mubr.bf16.mxu0 %v1925
  %4428 = vmatmul.mubr.bf16.gmra.mrb[0].mxu0 %v1924
  %v4429 = vpop.f32.mrb[0].mxu0
  %v4430 = vadd.f32 0.0, %v4429
  %v4431 = vpop.f32.mrb[0].mxu0
  %v4432 = vadd.f32 0.0, %v4431
  %v4433 = vpop.f32.mrb[0].mxu0
  %v4434 = vadd.f32 0.0, %v4433
  %v4435 = vpop.f32.mrb[0].mxu0
  %v4436 = vadd.f32 0.0, %v4435
  %4437 = vmatprep.mubr.bf16.mxu0 %v1928
  %4438 = vmatmul.mubr.bf16.gmra.mrb[0].mxu0 %v1927
  %v4439 = vpop.f32.mrb[0].mxu0
  %v4440 = vadd.f32 0.0, %v4439
  %v4441 = vpop.f32.mrb[0].mxu0
  %v4442 = vadd.f32 0.0, %v4441
  %v4443 = vpop.f32.mrb[0].mxu0
  %v4444 = vadd.f32 0.0, %v4443
  %v4445 = vpop.f32.mrb[0].mxu0
  %v4446 = vadd.f32 0.0, %v4445
  %4447 = vmatprep.mubr.bf16.mxu0 %v1931
  %4448 = vmatmul.mubr.bf16.gmra.mrb[0].mxu0 %v1930
  %v4449 = vpop.f32.mrb[0].mxu0
  %v4450 = vadd.f32 0.0, %v4449
  %v4451 = vpop.f32.mrb[0].mxu0
  %v4452 = vadd.f32 0.0, %v4451
  %v4453 = vpop.f32.mrb[0].mxu0
  %v4454 = vadd.f32 0.0, %v4453
  %v4455 = vpop.f32.mrb[0].mxu0
  %v4456 = vadd.f32 0.0, %v4455
  %4457 = vdwg.mxu0
  %4458 = vmatprep.subr.bf16.mxu0 %v4282
  %4459 = vmatpush1.bf16.msra.mxu0 %v4281
  %4460 = vmatprep.subr.bf16.mxu0 %v4284
  %4461 = vmatpush1.bf16.msra.mxu0 %v4283
  %4462 = vmatprep.subr.bf16.mxu0 %v4286
  %4463 = vmatpush1.bf16.msra.mxu0 %v4285
  %4464 = vmatprep.subr.bf16.mxu0 %v4288
  %4465 = vmatpush1.bf16.msra.mxu0 %v4287
  %4466 = vmatprep.subr.bf16.mxu0 %v4290
  %4467 = vmatpush1.bf16.msra.mxu0 %v4289
  %4468 = vmatprep.subr.bf16.mxu0 %v4292
  %4469 = vmatpush1.bf16.msra.mxu0 %v4291
  %4470 = vmatprep.subr.bf16.mxu0 %v4294
  %4471 = vmatpush1.bf16.msra.mxu0 %v4293
  %4472 = vmatprep.subr.bf16.mxu0 %v4296
  %4473 = vmatpush1.bf16.msra.mxu0 %v4295
  %4474 = vmatprep.subr.bf16.mxu0 0
  %4475 = vmatpush1.bf16.msra.mxu0 0
  %4476 = vmatprep.subr.bf16.mxu0 0
  %4477 = vmatpush1.bf16.msra.mxu0 0
  %4478 = vmatprep.subr.bf16.mxu0 0
  %4479 = vmatpush1.bf16.msra.mxu0 0
  %4480 = vmatprep.subr.bf16.mxu0 0
  %4481 = vmatpush1.bf16.msra.mxu0 0
  %4482 = vmatprep.subr.bf16.mxu0 0
  %4483 = vmatpush1.bf16.msra.mxu0 0
  %4484 = vmatprep.subr.bf16.mxu0 0
  %4485 = vmatpush1.bf16.msra.mxu0 0
  %4486 = vmatprep.subr.bf16.mxu0 0
  %4487 = vmatpush1.bf16.msra.mxu0 0
  %4488 = vmatprep.subr.bf16.mxu0 0
  %4489 = vmatpush1.bf16.msra.mxu0 0
  %4490 = vmatprep.mubr.bf16.mxu0 0
  %4491 = vmatmul.mubr.bf16.gmra.mrb[0].mxu0 %v1911
  %v4492 = vpop.f32.mrb[0].mxu0
  %v4493 = vadd.f32 %v4380, %v4492
  %v4494 = vpop.f32.mrb[0].mxu0
  %v4495 = vadd.f32 %v4382, %v4494
  %v4496 = vpop.f32.mrb[0].mxu0
  %v4497 = vadd.f32 %v4384, %v4496
  %v4498 = vpop.f32.mrb[0].mxu0
  %v4499 = vadd.f32 %v4386, %v4498
  %4500 = vmatprep.mubr.bf16.mxu0 0
  %4501 = vmatmul.mubr.bf16.gmra.mrb[0].mxu0 %v1914
  %v4502 = vpop.f32.mrb[0].mxu0
  %v4503 = vadd.f32 %v4390, %v4502
  %v4504 = vpop.f32.mrb[0].mxu0
  %v4505 = vadd.f32 %v4392, %v4504
  %v4506 = vpop.f32.mrb[0].mxu0
  %v4507 = vadd.f32 %v4394, %v4506
  %v4508 = vpop.f32.mrb[0].mxu0
  %v4509 = vadd.f32 %v4396, %v4508
  %4510 = vmatprep.mubr.bf16.mxu0 0
  %4511 = vmatmul.mubr.bf16.gmra.mrb[0].mxu0 %v1917
  %v4512 = vpop.f32.mrb[0].mxu0
  %v4513 = vadd.f32 %v4400, %v4512
  %v4514 = vpop.f32.mrb[0].mxu0
  %v4515 = vadd.f32 %v4402, %v4514
  %v4516 = vpop.f32.mrb[0].mxu0
  %v4517 = vadd.f32 %v4404, %v4516
  %v4518 = vpop.f32.mrb[0].mxu0
  %v4519 = vadd.f32 %v4406, %v4518
  %4520 = vmatprep.mubr.bf16.mxu0 0
  %4521 = vmatmul.mubr.bf16.gmra.mrb[0].mxu0 %v1920
  %v4522 = vpop.f32.mrb[0].mxu0
  %v4523 = vadd.f32 %v4410, %v4522
  %v4524 = vpop.f32.mrb[0].mxu0
  %v4525 = vadd.f32 %v4412, %v4524
  %v4526 = vpop.f32.mrb[0].mxu0
  %v4527 = vadd.f32 %v4414, %v4526
  %v4528 = vpop.f32.mrb[0].mxu0
  %v4529 = vadd.f32 %v4416, %v4528
  %4530 = vmatprep.mubr.bf16.mxu0 0
  %4531 = vmatmul.mubr.bf16.gmra.mrb[0].mxu0 %v1923
  %v4532 = vpop.f32.mrb[0].mxu0
  %v4533 = vadd.f32 %v4420, %v4532
  %v4534 = vpop.f32.mrb[0].mxu0
  %v4535 = vadd.f32 %v4422, %v4534
  %v4536 = vpop.f32.mrb[0].mxu0
  %v4537 = vadd.f32 %v4424, %v4536
  %v4538 = vpop.f32.mrb[0].mxu0
  %v4539 = vadd.f32 %v4426, %v4538
  %4540 = vmatprep.mubr.bf16.mxu0 0
  %4541 = vmatmul.mubr.bf16.gmra.mrb[0].mxu0 %v1926
  %v4542 = vpop.f32.mrb[0].mxu0
  %v4543 = vadd.f32 %v4430, %v4542
  %v4544 = vpop.f32.mrb[0].mxu0
  %v4545 = vadd.f32 %v4432, %v4544
  %v4546 = vpop.f32.mrb[0].mxu0
  %v4547 = vadd.f32 %v4434, %v4546
  %v4548 = vpop.f32.mrb[0].mxu0
  %v4549 = vadd.f32 %v4436, %v4548
  %4550 = vmatprep.mubr.bf16.mxu0 0
  %4551 = vmatmul.mubr.bf16.gmra.mrb[0].mxu0 %v1929
  %v4552 = vpop.f32.mrb[0].mxu0
  %v4553 = vadd.f32 %v4440, %v4552
  %v4554 = vpop.f32.mrb[0].mxu0
  %v4555 = vadd.f32 %v4442, %v4554
  %v4556 = vpop.f32.mrb[0].mxu0
  %v4557 = vadd.f32 %v4444, %v4556
  %v4558 = vpop.f32.mrb[0].mxu0
  %v4559 = vadd.f32 %v4446, %v4558
  %4560 = vmatprep.mubr.bf16.mxu0 0
  %4561 = vmatmul.mubr.bf16.gmra.mrb[0].mxu0 %v1932
  %v4562 = vpop.f32.mrb[0].mxu0
  %v4563 = vadd.f32 %v4450, %v4562
  %v4564 = vpop.f32.mrb[0].mxu0
  %v4565 = vadd.f32 %v4452, %v4564
  %v4566 = vpop.f32.mrb[0].mxu0
  %v4567 = vadd.f32 %v4454, %v4566
  %v4568 = vpop.f32.mrb[0].mxu0
  %v4569 = vadd.f32 %v4456, %v4568
  %4570 = vdwg.mxu0
  %v4571 = vadd.f32 %v4024, %v4493
  %v4572 = vadd.f32 %v4025, %v4495
  %v4573 = vadd.f32 %v4026, %v4497
  %v4574 = vadd.f32 %v4027, %v4499
  %v4575 = vadd.f32 %v4028, %v4503
  %v4576 = vadd.f32 %v4029, %v4505
  %v4577 = vadd.f32 %v4030, %v4507
  %v4578 = vadd.f32 %v4031, %v4509
  %v4579 = vadd.f32 %v4032, %v4513
  %v4580 = vadd.f32 %v4033, %v4515
  %v4581 = vadd.f32 %v4034, %v4517
  %v4582 = vadd.f32 %v4035, %v4519
  %v4583 = vadd.f32 %v4036, %v4523
  %v4584 = vadd.f32 %v4037, %v4525
  %v4585 = vadd.f32 %v4038, %v4527
  %v4586 = vadd.f32 %v4039, %v4529
  %v4587 = vadd.f32 %v4040, %v4533
  %v4588 = vadd.f32 %v4041, %v4535
  %v4589 = vadd.f32 %v4042, %v4537
  %v4590 = vadd.f32 %v4043, %v4539
  %v4591 = vadd.f32 %v4044, %v4543
  %v4592 = vadd.f32 %v4045, %v4545
  %v4593 = vadd.f32 %v4046, %v4547
  %v4594 = vadd.f32 %v4047, %v4549
  %v4595 = vadd.f32 %v4048, %v4553
  %v4596 = vadd.f32 %v4049, %v4555
  %v4597 = vadd.f32 %v4050, %v4557
  %v4598 = vadd.f32 %v4051, %v4559
  %v4599 = vadd.f32 %v4052, %v4563
  %v4600 = vadd.f32 %v4053, %v4565
  %v4601 = vadd.f32 %v4054, %v4567
  %v4602 = vadd.f32 %v4055, %v4569
  %v4603 = vmax.f32 %v4571, %v4575
  %v4604 = vmax.f32 %v4572, %v4576
  %v4605 = vmax.f32 %v4573, %v4577
  %v4606 = vmax.f32 %v4574, %v4578
  %v4607 = vmax.f32 %v4579, %v4583
  %v4608 = vmax.f32 %v4580, %v4584
  %v4609 = vmax.f32 %v4581, %v4585
  %v4610 = vmax.f32 %v4582, %v4586
  %v4611 = vmax.f32 %v4587, %v4591
  %v4612 = vmax.f32 %v4588, %v4592
  %v4613 = vmax.f32 %v4589, %v4593
  %v4614 = vmax.f32 %v4590, %v4594
  %v4615 = vmax.f32 %v4595, %v4599
  %v4616 = vmax.f32 %v4596, %v4600
  %v4617 = vmax.f32 %v4597, %v4601
  %v4618 = vmax.f32 %v4598, %v4602
  %v4619 = vmax.f32 %v4603, %v4604
  %v4620 = vmax.f32 %v4605, %v4606
  %v4621 = vmax.f32 %v4607, %v4608
  %v4622 = vmax.f32 %v4609, %v4610
  %v4623 = vmax.f32 %v4611, %v4612
  %v4624 = vmax.f32 %v4613, %v4614
  %v4625 = vmax.f32 %v4615, %v4616
  %v4626 = vmax.f32 %v4617, %v4618
  %v4627 = vld [vmem:[%s4] sm:$0x1]
  %v4629 = vlaneseq
  %v4630 = vshrl.u32 %v4629, 7
  %v4631 = vsub.s32 0, %v4630
  %v4632 = vrot.slane %v4627, %v4631
  %v4634 = vadd.f32 %v4619, %v4632
  %v4635 = vadd.f32 %v4620, %v4632
  %v4636 = vadd.f32 %v4621, %v4632
  %v4637 = vadd.f32 %v4622, %v4632
  %v4638 = vadd.f32 %v4623, %v4632
  %v4639 = vadd.f32 %v4624, %v4632
  %v4640 = vadd.f32 %v4625, %v4632
  %v4641 = vadd.f32 %v4626, %v4632
  %v4642 = vmax.f32 %v4634, 0.0
  %v4643 = vmax.f32 %v4635, 0.0
  %v4644 = vmax.f32 %v4636, 0.0
  %v4645 = vmax.f32 %v4637, 0.0
  %v4646 = vmax.f32 %v4638, 0.0
  %v4647 = vmax.f32 %v4639, 0.0
  %v4648 = vmax.f32 %v4640, 0.0
  %v4649 = vmax.f32 %v4641, 0.0
  %v4650 = vld [vmem:[%s6] sm:$0x1]
  %v4651 = vld [vmem:[%s5] sm:$0xff]
  %v4652 = vld [vmem:[%s5 + $0x8] sm:$0xff]
  %v4653 = vld [vmem:[%s5 + $0x10] sm:$0xff]
  %v4654 = vld [vmem:[%s5 + $0x18] sm:$0xff]
  %v4655 = vld [vmem:[%s5 + $0x20] sm:$0xff]
  %v4656 = vld [vmem:[%s5 + $0x28] sm:$0xff]
  %v4657 = vld [vmem:[%s5 + $0x30] sm:$0xff]
  %v4658 = vld [vmem:[%s5 + $0x38] sm:$0xff]
  %v4659 = vld [vmem:[%s5 + $0x40] sm:$0xff]
  %v4660 = vld [vmem:[%s5 + $0x48] sm:$0xff]
  %v4661 = vld [vmem:[%s5 + $0x50] sm:$0xff]
  %v4662 = vld [vmem:[%s5 + $0x58] sm:$0xff]
  %v4663 = vld [vmem:[%s5 + $0x60] sm:$0xff]
  %v4664 = vld [vmem:[%s5 + $0x68] sm:$0xff]
  %v4665 = vld [vmem:[%s5 + $0x70] sm:$0xff]
  %v4666 = vld [vmem:[%s5 + $0x78] sm:$0xff]
  %4667 = vmatprep.subr.mxu0 0.0
  %4668 = vmatpush1.msra.mxu0 %v4651
  %4669 = vmatprep.subr.mxu0 0.0
  %4670 = vmatpush1.msra.mxu0 %v4652
  %4671 = vmatprep.subr.mxu0 0.0
  %4672 = vmatpush1.msra.mxu0 %v4653
  %4673 = vmatprep.subr.mxu0 0.0
  %4674 = vmatpush1.msra.mxu0 %v4654
  %4675 = vmatprep.subr.mxu0 0.0
  %4676 = vmatpush1.msra.mxu0 %v4655
  %4677 = vmatprep.subr.mxu0 0.0
  %4678 = vmatpush1.msra.mxu0 %v4656
  %4679 = vmatprep.subr.mxu0 0.0
  %4680 = vmatpush1.msra.mxu0 %v4657
  %4681 = vmatprep.subr.mxu0 0.0
  %4682 = vmatpush1.msra.mxu0 %v4658
  %4683 = vmatprep.subr.mxu0 0.0
  %4684 = vmatpush1.msra.mxu0 %v4659
  %4685 = vmatprep.subr.mxu0 0.0
  %4686 = vmatpush1.msra.mxu0 %v4660
  %4687 = vmatprep.subr.mxu0 0.0
  %4688 = vmatpush1.msra.mxu0 %v4661
  %4689 = vmatprep.subr.mxu0 0.0
  %4690 = vmatpush1.msra.mxu0 %v4662
  %4691 = vmatprep.subr.mxu0 0.0
  %4692 = vmatpush1.msra.mxu0 %v4663
  %4693 = vmatprep.subr.mxu0 0.0
  %4694 = vmatpush1.msra.mxu0 %v4664
  %4695 = vmatprep.subr.mxu0 0.0
  %4696 = vmatpush1.msra.mxu0 %v4665
  %4697 = vmatprep.subr.mxu0 0.0
  %4698 = vmatpush1.msra.mxu0 %v4666
  %4699 = vmatprep.subr.mxu0 0.0
  %4700 = vmatpush1.msra.mxu0 0.0
  %4701 = vmatprep.subr.mxu0 0.0
  %4702 = vmatpush1.msra.mxu0 0.0
  %4703 = vmatprep.subr.mxu0 0.0
  %4704 = vmatpush1.msra.mxu0 0.0
  %4705 = vmatprep.subr.mxu0 0.0
  %4706 = vmatpush1.msra.mxu0 0.0
  %4707 = vmatprep.subr.mxu0 0.0
  %4708 = vmatpush1.msra.mxu0 0.0
  %4709 = vmatprep.subr.mxu0 0.0
  %4710 = vmatpush1.msra.mxu0 0.0
  %4711 = vmatprep.subr.mxu0 0.0
  %4712 = vmatpush1.msra.mxu0 0.0
  %4713 = vmatprep.subr.mxu0 0.0
  %4714 = vmatpush1.msra.mxu0 0.0
  %4715 = vmatprep.subr.mxu0 0.0
  %4716 = vmatpush1.msra.mxu0 0.0
  %4717 = vmatprep.subr.mxu0 0.0
  %4718 = vmatpush1.msra.mxu0 0.0
  %4719 = vmatprep.subr.mxu0 0.0
  %4720 = vmatpush1.msra.mxu0 0.0
  %4721 = vmatprep.subr.mxu0 0.0
  %4722 = vmatpush1.msra.mxu0 0.0
  %4723 = vmatprep.subr.mxu0 0.0
  %4724 = vmatpush1.msra.mxu0 0.0
  %4725 = vmatprep.subr.mxu0 0.0
  %4726 = vmatpush1.msra.mxu0 0.0
  %4727 = vmatprep.subr.mxu0 0.0
  %4728 = vmatpush1.msra.mxu0 0.0
  %4729 = vmatprep.subr.mxu0 0.0
  %4730 = vmatpush1.msra.mxu0 0.0
  %4731 = vmatprep.mubr.f32.mxu0 0.0
  %4732 = vmatmul.mubr.f32.gmra.mrb[0].mxu0 %v4642
  %v4733 = vpop.f32.mrb[0].mxu0
  %v4734 = vadd.f32 0.0, %v4733
  %v4735 = vpop.f32.mrb[0].mxu0
  %4736 = vmatprep.mubr.f32.mxu0 0.0
  %4737 = vmatmul.mubr.f32.gmra.mrb[0].mxu0 %v4643
  %v4738 = vpop.f32.mrb[0].mxu0
  %v4739 = vadd.f32 0.0, %v4738
  %v4740 = vpop.f32.mrb[0].mxu0
  %4741 = vdwg.mxu0
  %v4743 = vlaneseq
  %v4744 = vshrl.u32 %v4743, 7
  %v4745 = vsub.s32 0, %v4744
  %v4746 = vrot.slane %v4650, %v4745
  %v4748 = vadd.f32 %v4746, %v4734
  %v4749 = vadd.f32 %v4746, %v4739
  %s4750 = scalar_lea.vmem %s5, 128
  %v4751 = vld [vmem:[%s4750] sm:$0xff]
  %v4752 = vld [vmem:[%s4750 + $0x8] sm:$0xff]
  %v4753 = vld [vmem:[%s4750 + $0x10] sm:$0xff]
  %v4754 = vld [vmem:[%s4750 + $0x18] sm:$0xff]
  %v4755 = vld [vmem:[%s4750 + $0x20] sm:$0xff]
  %v4756 = vld [vmem:[%s4750 + $0x28] sm:$0xff]
  %v4757 = vld [vmem:[%s4750 + $0x30] sm:$0xff]
  %v4758 = vld [vmem:[%s4750 + $0x38] sm:$0xff]
  %v4759 = vld [vmem:[%s4750 + $0x40] sm:$0xff]
  %v4760 = vld [vmem:[%s4750 + $0x48] sm:$0xff]
  %v4761 = vld [vmem:[%s4750 + $0x50] sm:$0xff]
  %v4762 = vld [vmem:[%s4750 + $0x58] sm:$0xff]
  %v4763 = vld [vmem:[%s4750 + $0x60] sm:$0xff]
  %v4764 = vld [vmem:[%s4750 + $0x68] sm:$0xff]
  %v4765 = vld [vmem:[%s4750 + $0x70] sm:$0xff]
  %v4766 = vld [vmem:[%s4750 + $0x78] sm:$0xff]
  %4767 = vmatprep.subr.mxu0 0.0
  %4768 = vmatpush1.msra.mxu0 %v4751
  %4769 = vmatprep.subr.mxu0 0.0
  %4770 = vmatpush1.msra.mxu0 %v4752
  %4771 = vmatprep.subr.mxu0 0.0
  %4772 = vmatpush1.msra.mxu0 %v4753
  %4773 = vmatprep.subr.mxu0 0.0
  %4774 = vmatpush1.msra.mxu0 %v4754
  %4775 = vmatprep.subr.mxu0 0.0
  %4776 = vmatpush1.msra.mxu0 %v4755
  %4777 = vmatprep.subr.mxu0 0.0
  %4778 = vmatpush1.msra.mxu0 %v4756
  %4779 = vmatprep.subr.mxu0 0.0
  %4780 = vmatpush1.msra.mxu0 %v4757
  %4781 = vmatprep.subr.mxu0 0.0
  %4782 = vmatpush1.msra.mxu0 %v4758
  %4783 = vmatprep.subr.mxu0 0.0
  %4784 = vmatpush1.msra.mxu0 %v4759
  %4785 = vmatprep.subr.mxu0 0.0
  %4786 = vmatpush1.msra.mxu0 %v4760
  %4787 = vmatprep.subr.mxu0 0.0
  %4788 = vmatpush1.msra.mxu0 %v4761
  %4789 = vmatprep.subr.mxu0 0.0
  %4790 = vmatpush1.msra.mxu0 %v4762
  %4791 = vmatprep.subr.mxu0 0.0
  %4792 = vmatpush1.msra.mxu0 %v4763
  %4793 = vmatprep.subr.mxu0 0.0
  %4794 = vmatpush1.msra.mxu0 %v4764
  %4795 = vmatprep.subr.mxu0 0.0
  %4796 = vmatpush1.msra.mxu0 %v4765
  %4797 = vmatprep.subr.mxu0 0.0
  %4798 = vmatpush1.msra.mxu0 %v4766
  %4799 = vmatprep.subr.mxu0 0.0
  %4800 = vmatpush1.msra.mxu0 0.0
  %4801 = vmatprep.subr.mxu0 0.0
  %4802 = vmatpush1.msra.mxu0 0.0
  %4803 = vmatprep.subr.mxu0 0.0
  %4804 = vmatpush1.msra.mxu0 0.0
  %4805 = vmatprep.subr.mxu0 0.0
  %4806 = vmatpush1.msra.mxu0 0.0
  %4807 = vmatprep.subr.mxu0 0.0
  %4808 = vmatpush1.msra.mxu0 0.0
  %4809 = vmatprep.subr.mxu0 0.0
  %4810 = vmatpush1.msra.mxu0 0.0
  %4811 = vmatprep.subr.mxu0 0.0
  %4812 = vmatpush1.msra.mxu0 0.0
  %4813 = vmatprep.subr.mxu0 0.0
  %4814 = vmatpush1.msra.mxu0 0.0
  %4815 = vmatprep.subr.mxu0 0.0
  %4816 = vmatpush1.msra.mxu0 0.0
  %4817 = vmatprep.subr.mxu0 0.0
  %4818 = vmatpush1.msra.mxu0 0.0
  %4819 = vmatprep.subr.mxu0 0.0
  %4820 = vmatpush1.msra.mxu0 0.0
  %4821 = vmatprep.subr.mxu0 0.0
  %4822 = vmatpush1.msra.mxu0 0.0
  %4823 = vmatprep.subr.mxu0 0.0
  %4824 = vmatpush1.msra.mxu0 0.0
  %4825 = vmatprep.subr.mxu0 0.0
  %4826 = vmatpush1.msra.mxu0 0.0
  %4827 = vmatprep.subr.mxu0 0.0
  %4828 = vmatpush1.msra.mxu0 0.0
  %4829 = vmatprep.subr.mxu0 0.0
  %4830 = vmatpush1.msra.mxu0 0.0
  %4831 = vmatprep.mubr.f32.mxu0 0.0
  %4832 = vmatmul.mubr.f32.gmra.mrb[0].mxu0 %v4644
  %v4833 = vpop.f32.mrb[0].mxu0
  %v4834 = vadd.f32 0.0, %v4833
  %v4835 = vpop.f32.mrb[0].mxu0
  %4836 = vmatprep.mubr.f32.mxu0 0.0
  %4837 = vmatmul.mubr.f32.gmra.mrb[0].mxu0 %v4645
  %v4838 = vpop.f32.mrb[0].mxu0
  %v4839 = vadd.f32 0.0, %v4838
  %v4840 = vpop.f32.mrb[0].mxu0
  %4841 = vdwg.mxu0
  %v4842 = vadd.f32 %v4748, %v4834
  %v4843 = vadd.f32 %v4749, %v4839
  %s4844 = scalar_lea.vmem %s5, 256
  %v4845 = vld [vmem:[%s4844] sm:$0xff]
  %v4846 = vld [vmem:[%s4844 + $0x8] sm:$0xff]
  %v4847 = vld [vmem:[%s4844 + $0x10] sm:$0xff]
  %v4848 = vld [vmem:[%s4844 + $0x18] sm:$0xff]
  %v4849 = vld [vmem:[%s4844 + $0x20] sm:$0xff]
  %v4850 = vld [vmem:[%s4844 + $0x28] sm:$0xff]
  %v4851 = vld [vmem:[%s4844 + $0x30] sm:$0xff]
  %v4852 = vld [vmem:[%s4844 + $0x38] sm:$0xff]
  %v4853 = vld [vmem:[%s4844 + $0x40] sm:$0xff]
  %v4854 = vld [vmem:[%s4844 + $0x48] sm:$0xff]
  %v4855 = vld [vmem:[%s4844 + $0x50] sm:$0xff]
  %v4856 = vld [vmem:[%s4844 + $0x58] sm:$0xff]
  %v4857 = vld [vmem:[%s4844 + $0x60] sm:$0xff]
  %v4858 = vld [vmem:[%s4844 + $0x68] sm:$0xff]
  %v4859 = vld [vmem:[%s4844 + $0x70] sm:$0xff]
  %v4860 = vld [vmem:[%s4844 + $0x78] sm:$0xff]
  %4861 = vmatprep.subr.mxu0 0.0
  %4862 = vmatpush1.msra.mxu0 %v4845
  %4863 = vmatprep.subr.mxu0 0.0
  %4864 = vmatpush1.msra.mxu0 %v4846
  %4865 = vmatprep.subr.mxu0 0.0
  %4866 = vmatpush1.msra.mxu0 %v4847
  %4867 = vmatprep.subr.mxu0 0.0
  %4868 = vmatpush1.msra.mxu0 %v4848
  %4869 = vmatprep.subr.mxu0 0.0
  %4870 = vmatpush1.msra.mxu0 %v4849
  %4871 = vmatprep.subr.mxu0 0.0
  %4872 = vmatpush1.msra.mxu0 %v4850
  %4873 = vmatprep.subr.mxu0 0.0
  %4874 = vmatpush1.msra.mxu0 %v4851
  %4875 = vmatprep.subr.mxu0 0.0
  %4876 = vmatpush1.msra.mxu0 %v4852
  %4877 = vmatprep.subr.mxu0 0.0
  %4878 = vmatpush1.msra.mxu0 %v4853
  %4879 = vmatprep.subr.mxu0 0.0
  %4880 = vmatpush1.msra.mxu0 %v4854
  %4881 = vmatprep.subr.mxu0 0.0
  %4882 = vmatpush1.msra.mxu0 %v4855
  %4883 = vmatprep.subr.mxu0 0.0
  %4884 = vmatpush1.msra.mxu0 %v4856
  %4885 = vmatprep.subr.mxu0 0.0
  %4886 = vmatpush1.msra.mxu0 %v4857
  %4887 = vmatprep.subr.mxu0 0.0
  %4888 = vmatpush1.msra.mxu0 %v4858
  %4889 = vmatprep.subr.mxu0 0.0
  %4890 = vmatpush1.msra.mxu0 %v4859
  %4891 = vmatprep.subr.mxu0 0.0
  %4892 = vmatpush1.msra.mxu0 %v4860
  %4893 = vmatprep.subr.mxu0 0.0
  %4894 = vmatpush1.msra.mxu0 0.0
  %4895 = vmatprep.subr.mxu0 0.0
  %4896 = vmatpush1.msra.mxu0 0.0
  %4897 = vmatprep.subr.mxu0 0.0
  %4898 = vmatpush1.msra.mxu0 0.0
  %4899 = vmatprep.subr.mxu0 0.0
  %4900 = vmatpush1.msra.mxu0 0.0
  %4901 = vmatprep.subr.mxu0 0.0
  %4902 = vmatpush1.msra.mxu0 0.0
  %4903 = vmatprep.subr.mxu0 0.0
  %4904 = vmatpush1.msra.mxu0 0.0
  %4905 = vmatprep.subr.mxu0 0.0
  %4906 = vmatpush1.msra.mxu0 0.0
  %4907 = vmatprep.subr.mxu0 0.0
  %4908 = vmatpush1.msra.mxu0 0.0
  %4909 = vmatprep.subr.mxu0 0.0
  %4910 = vmatpush1.msra.mxu0 0.0
  %4911 = vmatprep.subr.mxu0 0.0
  %4912 = vmatpush1.msra.mxu0 0.0
  %4913 = vmatprep.subr.mxu0 0.0
  %4914 = vmatpush1.msra.mxu0 0.0
  %4915 = vmatprep.subr.mxu0 0.0
  %4916 = vmatpush1.msra.mxu0 0.0
  %4917 = vmatprep.subr.mxu0 0.0
  %4918 = vmatpush1.msra.mxu0 0.0
  %4919 = vmatprep.subr.mxu0 0.0
  %4920 = vmatpush1.msra.mxu0 0.0
  %4921 = vmatprep.subr.mxu0 0.0
  %4922 = vmatpush1.msra.mxu0 0.0
  %4923 = vmatprep.subr.mxu0 0.0
  %4924 = vmatpush1.msra.mxu0 0.0
  %4925 = vmatprep.mubr.f32.mxu0 0.0
  %4926 = vmatmul.mubr.f32.gmra.mrb[0].mxu0 %v4646
  %v4927 = vpop.f32.mrb[0].mxu0
  %v4928 = vadd.f32 0.0, %v4927
  %v4929 = vpop.f32.mrb[0].mxu0
  %4930 = vmatprep.mubr.f32.mxu0 0.0
  %4931 = vmatmul.mubr.f32.gmra.mrb[0].mxu0 %v4647
  %v4932 = vpop.f32.mrb[0].mxu0
  %v4933 = vadd.f32 0.0, %v4932
  %v4934 = vpop.f32.mrb[0].mxu0
  %4935 = vdwg.mxu0
  %v4936 = vadd.f32 %v4842, %v4928
  %v4937 = vadd.f32 %v4843, %v4933
  %s4938 = scalar_lea.vmem %s5, 384
  %v4939 = vld [vmem:[%s4938] sm:$0xff]
  %v4940 = vld [vmem:[%s4938 + $0x8] sm:$0xff]
  %v4941 = vld [vmem:[%s4938 + $0x10] sm:$0xff]
  %v4942 = vld [vmem:[%s4938 + $0x18] sm:$0xff]
  %v4943 = vld [vmem:[%s4938 + $0x20] sm:$0xff]
  %v4944 = vld [vmem:[%s4938 + $0x28] sm:$0xff]
  %v4945 = vld [vmem:[%s4938 + $0x30] sm:$0xff]
  %v4946 = vld [vmem:[%s4938 + $0x38] sm:$0xff]
  %v4947 = vld [vmem:[%s4938 + $0x40] sm:$0xff]
  %v4948 = vld [vmem:[%s4938 + $0x48] sm:$0xff]
  %v4949 = vld [vmem:[%s4938 + $0x50] sm:$0xff]
  %v4950 = vld [vmem:[%s4938 + $0x58] sm:$0xff]
  %v4951 = vld [vmem:[%s4938 + $0x60] sm:$0xff]
  %v4952 = vld [vmem:[%s4938 + $0x68] sm:$0xff]
  %v4953 = vld [vmem:[%s4938 + $0x70] sm:$0xff]
  %v4954 = vld [vmem:[%s4938 + $0x78] sm:$0xff]
  %4955 = vmatprep.subr.mxu0 0.0
  %4956 = vmatpush1.msra.mxu0 %v4939
  %4957 = vmatprep.subr.mxu0 0.0
  %4958 = vmatpush1.msra.mxu0 %v4940
  %4959 = vmatprep.subr.mxu0 0.0
  %4960 = vmatpush1.msra.mxu0 %v4941
  %4961 = vmatprep.subr.mxu0 0.0
  %4962 = vmatpush1.msra.mxu0 %v4942
  %4963 = vmatprep.subr.mxu0 0.0
  %4964 = vmatpush1.msra.mxu0 %v4943
  %4965 = vmatprep.subr.mxu0 0.0
  %4966 = vmatpush1.msra.mxu0 %v4944
  %4967 = vmatprep.subr.mxu0 0.0
  %4968 = vmatpush1.msra.mxu0 %v4945
  %4969 = vmatprep.subr.mxu0 0.0
  %4970 = vmatpush1.msra.mxu0 %v4946
  %4971 = vmatprep.subr.mxu0 0.0
  %4972 = vmatpush1.msra.mxu0 %v4947
  %4973 = vmatprep.subr.mxu0 0.0
  %4974 = vmatpush1.msra.mxu0 %v4948
  %4975 = vmatprep.subr.mxu0 0.0
  %4976 = vmatpush1.msra.mxu0 %v4949
  %4977 = vmatprep.subr.mxu0 0.0
  %4978 = vmatpush1.msra.mxu0 %v4950
  %4979 = vmatprep.subr.mxu0 0.0
  %4980 = vmatpush1.msra.mxu0 %v4951
  %4981 = vmatprep.subr.mxu0 0.0
  %4982 = vmatpush1.msra.mxu0 %v4952
  %4983 = vmatprep.subr.mxu0 0.0
  %4984 = vmatpush1.msra.mxu0 %v4953
  %4985 = vmatprep.subr.mxu0 0.0
  %4986 = vmatpush1.msra.mxu0 %v4954
  %4987 = vmatprep.subr.mxu0 0.0
  %4988 = vmatpush1.msra.mxu0 0.0
  %4989 = vmatprep.subr.mxu0 0.0
  %4990 = vmatpush1.msra.mxu0 0.0
  %4991 = vmatprep.subr.mxu0 0.0
  %4992 = vmatpush1.msra.mxu0 0.0
  %4993 = vmatprep.subr.mxu0 0.0
  %4994 = vmatpush1.msra.mxu0 0.0
  %4995 = vmatprep.subr.mxu0 0.0
  %4996 = vmatpush1.msra.mxu0 0.0
  %4997 = vmatprep.subr.mxu0 0.0
  %4998 = vmatpush1.msra.mxu0 0.0
  %4999 = vmatprep.subr.mxu0 0.0
  %5000 = vmatpush1.msra.mxu0 0.0
  %5001 = vmatprep.subr.mxu0 0.0
  %5002 = vmatpush1.msra.mxu0 0.0
  %5003 = vmatprep.subr.mxu0 0.0
  %5004 = vmatpush1.msra.mxu0 0.0
  %5005 = vmatprep.subr.mxu0 0.0
  %5006 = vmatpush1.msra.mxu0 0.0
  %5007 = vmatprep.subr.mxu0 0.0
  %5008 = vmatpush1.msra.mxu0 0.0
  %5009 = vmatprep.subr.mxu0 0.0
  %5010 = vmatpush1.msra.mxu0 0.0
  %5011 = vmatprep.subr.mxu0 0.0
  %5012 = vmatpush1.msra.mxu0 0.0
  %5013 = vmatprep.subr.mxu0 0.0
  %5014 = vmatpush1.msra.mxu0 0.0
  %5015 = vmatprep.subr.mxu0 0.0
  %5016 = vmatpush1.msra.mxu0 0.0
  %5017 = vmatprep.subr.mxu0 0.0
  %5018 = vmatpush1.msra.mxu0 0.0
  %5019 = vmatprep.mubr.f32.mxu0 0.0
  %5020 = vmatmul.mubr.f32.gmra.mrb[0].mxu0 %v4648
  %v5021 = vpop.f32.mrb[0].mxu0
  %v5022 = vadd.f32 0.0, %v5021
  %v5023 = vpop.f32.mrb[0].mxu0
  %5024 = vmatprep.mubr.f32.mxu0 0.0
  %5025 = vmatmul.mubr.f32.gmra.mrb[0].mxu0 %v4649
  %v5026 = vpop.f32.mrb[0].mxu0
  %v5027 = vadd.f32 0.0, %v5026
  %v5028 = vpop.f32.mrb[0].mxu0
  %5029 = vdwg.mxu0
  %v5030 = vadd.f32 %v4936, %v5022
  %v5031 = vadd.f32 %v4937, %v5027
  %vm5032 = vcmask 80896
  %5033 = vst.msk [vmem:[%s7] sm:$0xff] %vm5032, %v5030
  %5034 = vst.msk [vmem:[%s7 + $0x8] sm:$0xff] %vm5032, %v5031
  // Predicated region
  $region30: #{small_forward.1} parent=0 // pred_check
    _
  $region31: #{small_forward.1} parent=0 // pred_check_branch
    %5036 = sbr.rel (0) target = $region33
  $region32: #{small_forward.1} parent=0 // pred_region
    _
  $region33: #{small_forward.1} parent=0 // pred_fallthru
    _
  // Predicated region
  $region34: #{small_forward.1} parent=0 // pred_check
    _
  $region35: #{small_forward.1} parent=0 // pred_check_branch
    %5038 = sbr.rel (0) target = $region37
  $region36: #{small_forward.1} parent=0 // pred_region
    _
  $region37: #{small_forward.1} parent=0 // pred_fallthru
    _

</llo_original>
